<compile_context>
chip_gen: v6e
topology: v6e:2x2x1
jax: 0.10.0
libtpu: 0.0.40
codegen_flags: <defaults>
</compile_context>

<pallas_src>
import functools
import math

import jax
import jax.numpy as jnp
from jax.experimental import pallas as pl
from jax.experimental.pallas import tpu as pltpu

NEG_BIG = -1e9          # additive attention mask value
MASK_BIG = 1e9          # the module literally ADDS +1e9*(1 - y_mask) to span scores
LN_EPS = 1e-12


# ----------------------------- fused kernel -----------------------------------

def decoder_fused_kernel(
        # activations / masks / targets
        y_emb_ref,      # (B, T, D)  f32
        y_mask_q_ref,   # (B, 1, T)  f32   y_mask[:, :-1] (self-attn key mask)
        x_reps_ref,     # (B, S, D)  bf16
        x_mask_ref,     # (B, 1, S)  f32
        ymt_ref,        # (B, T, 1)  f32   y_mask[:, 1:] (target mask)
        tgt_lmfx_ref,   # (B, T, 2)  int32 [lm target, fixed-span target]
        tgt_span_ref,   # (B, 4T, 1) int32 stacked [span_b, span_e, tss, tse]
        # weights (slabs)
        w_all_ref,      # (D, WT)    bf16  all D-in weight matrices, lane-concatenated
        w_ff2_ref,      # (F, D)     bf16
        vec_ref,        # (1, VT)    f32   all biases / LN params, lane-concatenated
        # outputs
        lm_out_ref,     # (B, T, V)  f32
        span_out_ref,   # (B, T, 4S) f32  [span_b | span_e | tss | tse]
        partials_ref,   # (1, 8)     f32  six CE partial sums (batch-global)
        # scratch
        stacked_scr,    # (B, 4T, D) f32  VMEM scratch for the bilinear stacking
        *, nh, woff, voff, pad_token_id):
    B, T, D = y_emb_ref.shape
    S = x_reps_ref.shape[1]
    BT = B * T
    V = woff['lm_dw'][1]
    NF = woff['w_h1'][1] - 3 * D
    scale = 1.0 / math.sqrt(D)      # single attention head

    # ---- static slices of the two parameter slabs (free layout plumbing) ----
    def wsl(name):
        s, n = woff[name]
        return w_all_ref[:, s:s + n]          # bf16 (D, n)

    def vrow(name):
        s, n = voff[name]
        return vec_ref[:, s:s + n]            # f32 (1, n)

    def ln_params(i):
        gs, _ = voff['ln_g']
        bs, _ = voff['ln_b']
        return (vec_ref[:, gs + i * D: gs + (i + 1) * D],
                vec_ref[:, bs + i * D: bs + (i + 1) * D])

    # ---- math helpers: bf16 MXU operands, f32 accumulation ----
    def _mm(x, w):
        return jnp.dot(x.astype(jnp.bfloat16), w.astype(jnp.bfloat16),
                       preferred_element_type=jnp.float32)

    def _bmm_qk(q, k):                         # (B,Q,D),(B,K,D)->(B,Q,K)
        return jnp.einsum('bqd,bkd->bqk',
                          q.astype(jnp.bfloat16), k.astype(jnp.bfloat16),
                          preferred_element_type=jnp.float32)

    def _bmm_av(a, v):                         # (B,Q,K),(B,K,D)->(B,Q,D)
        return jnp.einsum('bqk,bkd->bqd',
                          a.astype(jnp.bfloat16), v.astype(jnp.bfloat16),
                          preferred_element_type=jnp.float32)

    def _layer_norm(x, g, b):
        mu = jnp.mean(x, axis=-1, keepdims=True)
        var = jnp.mean((x - mu) ** 2, axis=-1, keepdims=True)
        return (x - mu) * jax.lax.rsqrt(var + LN_EPS) * g + b

    def _softmax(x):
        m = jnp.max(x, axis=-1, keepdims=True)
        e = jnp.exp(x - m)
        return e * pl.reciprocal(jnp.sum(e, axis=-1, keepdims=True), approx=True)

    def _lse(x):
        m = jnp.max(x, axis=-1, keepdims=True)
        return m + jnp.log(jnp.sum(jnp.exp(x - m), axis=-1, keepdims=True))

    # ---------------- synthetic single-layer BERT decoder ----------------
    # batch folded into the matmul row (sublane) dimension: (B*T, D)
    g0, b0 = ln_params(0)
    h = _layer_norm(y_emb_ref[...].reshape(BT, D), g0, b0)

    # causal self-attention (fused QKV projection, batched einsum over B)
    qkv = _mm(h, wsl('w_sqkv')) + vrow('b_sqkv')                  # (BT, 3D)
    q = qkv[:, 0:D].reshape(B, T, D)
    k = qkv[:, D:2 * D].reshape(B, T, D)
    v = qkv[:, 2 * D:3 * D].reshape(B, T, D)
    att = _bmm_qk(q, k) * scale                                   # (B, T, T)
    causal = (jax.lax.broadcasted_iota(jnp.int32, (T, T), 0)
              >= jax.lax.broadcasted_iota(jnp.int32, (T, T), 1)).astype(jnp.float32)
    att = att + (1.0 - causal[None, :, :] * y_mask_q_ref[...]) * NEG_BIG
    ctx = _bmm_av(_softmax(att), v).reshape(BT, D)
    g1, b1 = ln_params(1)
    h = _layer_norm(h + _mm(ctx, wsl('w_so')) + vrow('b_so'), g1, b1)

    # cross-attention over encoder hidden states (fused KV projection)
    x_reps = x_reps_ref[...]                                      # (B, S, D) bf16
    q = (_mm(h, wsl('w_cq')) + vrow('b_cq')).reshape(B, T, D)
    kv = (_mm(x_reps.reshape(B * S, D), wsl('w_ckv'))
          + vrow('b_ckv')).reshape(B, S, 2 * D)
    att = _bmm_qk(q, kv[:, :, 0:D]) * scale                       # (B, T, S)
    att = att + (1.0 - x_mask_ref[...]) * NEG_BIG
    ctx = _bmm_av(_softmax(att), kv[:, :, D:2 * D]).reshape(BT, D)
    g2, b2 = ln_params(2)
    h = _layer_norm(h + _mm(ctx, wsl('w_co')) + vrow('b_co'), g2, b2)

    # feed-forward
    ff = jax.nn.gelu(_mm(h, wsl('w_ff1')) + vrow('b_ff1'), approximate=True)
    ff = _mm(ff, w_ff2_ref[...]) + vrow('b_ff2')
    g3, b3 = ln_params(3)
    y_rep = _layer_norm(h + ff, g3, b3)                           # (BT, D)

    # ---------------- heads ----------------
    # fused (lm-transform | fixed_span | text_span_start | text_span_end) projection
    head1 = _mm(y_rep, wsl('w_h1')) + vrow('b_h1')                # (BT, 3D+NF)
    lm_t = head1[:, 0:D]
    fixed_scores = head1[:, D:D + NF]
    tss_out = head1[:, D + NF:2 * D + NF]
    tse_out = head1[:, 2 * D + NF:3 * D + NF]

    # BertOnlyMLMHead: dense -> gelu -> LN -> decoder
    # TODO(synk): at realistic V tile this matmul + CE over a vocab grid axis.
    t = jax.nn.gelu(lm_t, approximate=True)
    t = _layer_norm(t, vrow('lm_lng'), vrow('lm_lnb'))
    lm_scores = _mm(t, wsl('lm_dw')) + vrow('lm_db')              # (BT, V)
    lm_out_ref[...] = lm_scores.reshape(B, T, V)

    # highway chains: begin/end chains fused into ONE matmul per layer.
    # weight column order per layer: [b_gate | e_gate | b_nlin | e_nlin]
    x_be = jnp.concatenate([y_rep, y_rep], axis=0)                # (2BT, D)
    row_is_b = jax.lax.broadcasted_iota(jnp.int32, (2 * BT, 1), 0) < BT
    hw_s, _ = woff['hw']
    hb_s, _ = voff['hw_b']
    for i in range(nh):                                           # nh is small & static
        wi = w_all_ref[:, hw_s + 4 * D * i: hw_s + 4 * D * (i + 1)]   # (D, 4D)
        bi = vec_ref[:, hb_s + 4 * D * i: hb_s + 4 * D * (i + 1)]     # (1, 4D)
        proj = _mm(x_be, wi) + bi                                 # (2BT, 4D)
        gate = jax.nn.sigmoid(jnp.where(row_is_b, proj[:, 0:D], proj[:, D:2 * D]))
        nlin = jnp.tanh(jnp.where(row_is_b, proj[:, 2 * D:3 * D], proj[:, 3 * D:4 * D]))
        x_be = gate * nlin + (1.0 - gate) * x_be
    xbe = x_be.reshape(2, B, T, D)                                # [0]=begin, [1]=end

    # all four bilinear score heads with ONE batched matmul against x_reps;
    # stacking via aligned slice-stores into VMEM scratch (no sublane concat).
    stacked_scr[:, 0 * T:1 * T, :] = xbe[0]
    stacked_scr[:, 1 * T:2 * T, :] = xbe[1]
    stacked_scr[:, 2 * T:3 * T, :] = tss_out.reshape(B, T, D)
    stacked_scr[:, 3 * T:4 * T, :] = tse_out.reshape(B, T, D)
    sc = jnp.einsum('bqd,bsd->bqs',
                    stacked_scr[...].astype(jnp.bfloat16), x_reps,
                    preferred_element_type=jnp.float32)           # (B, 4T, S)

    inv_mask = (1.0 - ymt_ref[...]) * MASK_BIG                    # (B, T, 1)
    span_out_ref[...] = jnp.concatenate(
        [sc[:, 0 * T:1 * T, :] + inv_mask,
         sc[:, 1 * T:2 * T, :] + inv_mask,
         sc[:, 2 * T:3 * T, :],          # forward() adds NO mask bias to text-span scores
         sc[:, 3 * T:4 * T, :]], axis=-1)

    # ---------------- cross-entropy partial sums (batch-global) ----------------
    tgts_lf = tgt_lmfx_ref[...].reshape(BT, 2)

    def ce_sum(scores, tgt, ignore_index):
        # sum over rows of CrossEntropyLoss(reduction='none', ignore_index=...)
        classes = jax.lax.broadcasted_iota(jnp.int32, scores.shape, scores.ndim - 1)
        tgt_logit = jnp.sum(jnp.where(classes == tgt, scores, 0.0),
                            axis=-1, keepdims=True)
        valid = (tgt != ignore_index).astype(jnp.float32)
        return jnp.sum((_lse(scores) - tgt_logit) * valid)

    lm_ce = ce_sum(lm_scores, tgts_lf[:, 0:1], pad_token_id)
    fx_ce = ce_sum(fixed_scores, tgts_lf[:, 1:2], -1)

    # the 4 span CEs share one lse / target-logit pass over the stacked (B,4T,S)
    # scores; the row-uniform +1e9 mask bias cancels in (lse - tgt_logit), so
    # using the raw sc is mathematically identical (and better conditioned).
    tgt_span = tgt_span_ref[...]                                  # (B, 4T, 1)
    classes_s = jax.lax.broadcasted_iota(jnp.int32, (B, 4 * T, S), 2)
    tgt_logit = jnp.sum(jnp.where(classes_s == tgt_span, sc, 0.0),
                        axis=-1, keepdims=True)
    valid = (tgt_span != -1).astype(jnp.float32)
    ce_tok = (_lse(sc) - tgt_logit) * valid                       # (B, 4T, 1)
    sb_ce = jnp.sum(ce_tok[:, 0 * T:1 * T])
    se_ce = jnp.sum(ce_tok[:, 1 * T:2 * T])
    ts_ce = jnp.sum(ce_tok[:, 2 * T:3 * T])
    te_ce = jnp.sum(ce_tok[:, 3 * T:4 * T])

    partials_ref[...] = jnp.concatenate(
        [jnp.full((1, 1), lm_ce, jnp.float32),
         jnp.full((1, 1), sb_ce, jnp.float32),
         jnp.full((1, 1), se_ce, jnp.float32),
         jnp.full((1, 1), ts_ce, jnp.float32),
         jnp.full((1, 1), te_ce, jnp.float32),
         jnp.full((1, 1), fx_ce, jnp.float32),
         jnp.zeros((1, 2), jnp.float32)], axis=1)


# ----------------------------- parameter init ---------------------------------

def init_params(key, *, D, F, V, NF, NH, max_pos):
    def xavier(k, shape, gain=1.0):
        fan_in, fan_out = shape[-2], shape[-1]
        a = gain * math.sqrt(6.0 / (fan_in + fan_out))
        return jax.random.uniform(k, shape, jnp.float32, -a, a)

    keys = iter(jax.random.split(key, 32))
    p = {}
    p['word_emb'] = 0.02 * jax.random.normal(next(keys), (V, D), jnp.float32)
    p['pos_emb'] = 0.02 * jax.random.normal(next(keys), (max_pos, D), jnp.float32)
    p['type_emb'] = 0.02 * jax.random.normal(next(keys), (2, D), jnp.float32)
    p['w_self'] = xavier(next(keys), (4, D, D)); p['b_self'] = jnp.zeros((4, D), jnp.float32)
    p['w_cross'] = xavier(next(keys), (4, D, D)); p['b_cross'] = jnp.zeros((4, D), jnp.float32)
    p['w_ff1'] = xavier(next(keys), (D, F)); p['b_ff1'] = jnp.zeros((1, F), jnp.float32)
    p['w_ff2'] = xavier(next(keys), (F, D)); p['b_ff2'] = jnp.zeros((1, D), jnp.float32)
    p['ln_g'] = jnp.ones((4, D), jnp.float32); p['ln_b'] = jnp.zeros((4, D), jnp.float32)
    # lm head
    p['lm_tw'] = xavier(next(keys), (D, D)); p['lm_tb'] = jnp.zeros((1, D), jnp.float32)
    p['lm_lng'] = jnp.ones((1, D), jnp.float32); p['lm_lnb'] = jnp.zeros((1, D), jnp.float32)
    p['lm_dw'] = xavier(next(keys), (D, V)); p['lm_db'] = jnp.zeros((1, V), jnp.float32)
    # fixed span head
    p['fx_w'] = xavier(next(keys), (D, NF)); p['fx_b'] = jnp.zeros((1, NF), jnp.float32)
    # highway layers (xavier weights, nlin bias 0, gate bias -1 per module init)
    p['hwb_gw'] = xavier(next(keys), (NH, D, D)); p['hwb_gb'] = jnp.full((NH, D), -1.0, jnp.float32)
    p['hwb_nw'] = xavier(next(keys), (NH, D, D)); p['hwb_nb'] = jnp.zeros((NH, D), jnp.float32)
    p['hwe_gw'] = xavier(next(keys), (NH, D, D)); p['hwe_gb'] = jnp.full((NH, D), -1.0, jnp.float32)
    p['hwe_nw'] = xavier(next(keys), (NH, D, D)); p['hwe_nb'] = jnp.zeros((NH, D), jnp.float32)
    # text span heads
    p['tss_w'] = xavier(next(keys), (D, D)); p['tss_b'] = jnp.zeros((1, D), jnp.float32)
    p['tse_w'] = xavier(next(keys), (D, D)); p['tse_b'] = jnp.zeros((1, D), jnp.float32)
    return p


# ----------------------------- forward wrapper --------------------------------

def decoder_with_loss_forward(y, y_mask, x_reps, x_mask, p,
                              *, span_loss_lb, pad_token_id):
    B, Tf, _ = y.shape
    T = Tf - 1
    S, D = x_reps.shape[1], x_reps.shape[2]
    NH = p['hwb_gw'].shape[0]
    V = p['lm_dw'].shape[1]

    # ---- glue: embedding lookup (gather) + position/type embeddings ----
    # TODO(synk): at realistic sizes move this gather in-kernel via scalar-prefetched ids.
    y_ids = y[:, :-1, 0]
    y_emb = (jnp.take(p['word_emb'], y_ids, axis=0)
             + p['pos_emb'][None, :T, :]
             + p['type_emb'][0][None, None, :]).astype(jnp.float32)
    y_mask_q = y_mask[:, :-1].astype(jnp.float32).reshape(B, 1, T)
    ymt = y_mask[:, 1:].astype(jnp.float32)
    ymt_col = ymt.reshape(B, T, 1)
    x_mask_r = x_mask.astype(jnp.float32).reshape(B, 1, S)
    x_reps_bf = x_reps.astype(jnp.bfloat16)
    tgt_lmfx = jnp.stack([y[:, 1:, 0], y[:, 1:, 5]], axis=-1).astype(jnp.int32)   # (B, T, 2)
    tgt_span = jnp.concatenate(
        [y[:, 1:, 1], y[:, 1:, 2], y[:, 1:, 3], y[:, 1:, 4]],
        axis=1).astype(jnp.int32)[..., None]                                      # (B, 4T, 1)

    # ---- pack every (D, .) weight into ONE bf16 slab, every bias/LN into ONE f32 slab ----
    hw_w_layers, hw_b_layers = [], []
    for i in range(NH):
        hw_w_layers.append(jnp.concatenate(
            [p['hwb_gw'][i], p['hwe_gw'][i], p['hwb_nw'][i], p['hwe_nw'][i]], axis=1))
        hw_b_layers.append(jnp.concatenate(
            [p['hwb_gb'][i], p['hwe_gb'][i], p['hwb_nb'][i], p['hwe_nb'][i]]))
    hw_w = jnp.concatenate(hw_w_layers, axis=1)                  # (D, NH*4D)
    hw_b = jnp.concatenate(hw_b_layers)                          # (NH*4D,)

    w_pieces = [
        ('w_sqkv', jnp.concatenate([p['w_self'][0], p['w_self'][1], p['w_self'][2]], axis=1)),
        ('w_so', p['w_self'][3]),
        ('w_cq', p['w_cross'][0]),
        ('w_ckv', jnp.concatenate([p['w_cross'][1], p['w_cross'][2]], axis=1)),
        ('w_co', p['w_cross'][3]),
        ('w_ff1', p['w_ff1']),
        ('w_h1', jnp.concatenate([p['lm_tw'], p['fx_w'], p['tss_w'], p['tse_w']], axis=1)),
        ('lm_dw', p['lm_dw']),
        ('hw', hw_w),
    ]
    woff, off = {}, 0
    for name, arr in w_pieces:
        woff[name] = (off, arr.shape[1]); off += arr.shape[1]
    w_all = jnp.concatenate([a for _, a in w_pieces], axis=1).astype(jnp.bfloat16)
    w_ff2_bf = p['w_ff2'].astype(jnp.bfloat16)

    v_pieces = [
        ('b_sqkv', jnp.concatenate([p['b_self'][0], p['b_self'][1], p['b_self'][2]])),
        ('b_so', p['b_self'][3]),
        ('b_cq', p['b_cross'][0]),
        ('b_ckv', jnp.concatenate([p['b_cross'][1], p['b_cross'][2]])),
        ('b_co', p['b_cross'][3]),
        ('b_ff1', p['b_ff1'].reshape(-1)),
        ('b_ff2', p['b_ff2'].reshape(-1)),
        ('b_h1', jnp.concatenate([p['lm_tb'][0], p['fx_b'][0], p['tss_b'][0], p['tse_b'][0]])),
        ('lm_db', p['lm_db'].reshape(-1)),
        ('hw_b', hw_b),
        ('ln_g', p['ln_g'].reshape(-1)),
        ('ln_b', p['ln_b'].reshape(-1)),
        ('lm_lng', p['lm_lng'].reshape(-1)),
        ('lm_lnb', p['lm_lnb'].reshape(-1)),
    ]
    voff, off = {}, 0
    for name, arr in v_pieces:
        voff[name] = (off, arr.shape[0]); off += arr.shape[0]
    vec_all = jnp.concatenate([a for _, a in v_pieces]).reshape(1, -1).astype(jnp.float32)

    inputs = [y_emb, y_mask_q, x_reps_bf, x_mask_r, ymt_col, tgt_lmfx, tgt_span,
              w_all, w_ff2_bf, vec_all]

    out_shape = (jax.ShapeDtypeStruct((B, T, V), jnp.float32),
                 jax.ShapeDtypeStruct((B, T, 4 * S), jnp.float32),
                 jax.ShapeDtypeStruct((1, 8), jnp.float32))

    kernel = functools.partial(decoder_fused_kernel, nh=NH, woff=woff, voff=voff,
                               pad_token_id=pad_token_id)

    # Single invocation (no grid): at these sizes grid steps are pure overhead.
    # Default VMEM limits are ample for the toy shapes; at realistic shapes add
    # a vocab-tile grid axis and per-generation vmem_limit_bytes.
    lm_scores, span_packed, partials = pl.pallas_call(
        kernel,
        out_shape=out_shape,
        scratch_shapes=[pltpu.VMEM((B, 4 * T, D), jnp.float32)],
    )(*inputs)

    # split the packed span-score slab
    span_b = span_packed[:, :, 0 * S:1 * S]
    span_e = span_packed[:, :, 1 * S:2 * S]
    tss = span_packed[:, :, 2 * S:3 * S]
    tse = span_packed[:, :, 3 * S:4 * S]

    # ---- final scalar reductions (match the module's normalizations exactly) ----
    sums = partials.reshape(8)
    # numerator ignores pad targets (CE ignore_index), denominator is the mask sum,
    # exactly as in the PyTorch forward().
    lm_loss = sums[0] / jnp.sum(ymt)
    sp_cnt = jnp.sum((y[:, :, 1] >= 0).astype(jnp.float32))
    span_loss = (sums[1] + sums[2]) / sp_cnt
    tot_loss = (1.0 - span_loss_lb) * lm_loss + span_loss_lb * span_loss
    tss_cnt = jnp.sum((y[:, :, 3] >= 0).astype(jnp.float32))
    tse_cnt = jnp.sum((y[:, :, 4] >= 0).astype(jnp.float32))
    # reproduce the module's double normalization of the text-span loss exactly
    text_span_loss = (sums[3] / tss_cnt + sums[4] / tse_cnt) / tss_cnt
    fx_cnt = jnp.sum((y[:, :, 5] >= 0).astype(jnp.float32))
    fixed_span_loss = sums[5] / fx_cnt

    return {
        'lm_scores': lm_scores,
        'span_b_scores': span_b,
        'span_e_scores': span_e,
        'loss': tot_loss,
        'text_span_start_scores': tss,
        'text_span_end_scores': tse,
        'text_span_loss': text_span_loss,
        'fixed_span_loss': fixed_span_loss,
    }


# ----------------------------- main -------------------------------------------

if __name__ == "__main__":
    B, Tf, S, D = 2, 9, 16, 32          # batch, target seq (incl. shift), src seq, hidden
    V, NF, NH, F = 64, 16, 2, 64        # vocab, fixed-span vocab, num_highway, ffn dim
    PAD_ID = 0
    LAMBDA_SPAN = 0.5

    key = jax.random.PRNGKey(0)
    ks = jax.random.split(key, 8)

    y_tok = jax.random.randint(ks[0], (B, Tf, 1), 1, V)
    span_cols = jax.random.randint(ks[1], (B, Tf, 4), -1, S)
    fixed_col = jax.random.randint(ks[2], (B, Tf, 1), -1, NF)
    y = jnp.concatenate([y_tok, span_cols, fixed_col], axis=-1).astype(jnp.int32)
    # guarantee at least one valid target per supervised column (non-zero denominators)
    y = (y.at[0, 1, 1].set(3).at[0, 1, 2].set(5)
          .at[0, 2, 3].set(1).at[0, 2, 4].set(4).at[0, 3, 5].set(2))
    y = y.at[1, Tf - 1, 0].set(PAD_ID)   # exercise the lm pad ignore_index

    y_mask = jnp.ones((B, Tf), dtype=jnp.float32).at[1, Tf - 2:].set(0.0)
    x_reps = jax.random.normal(ks[3], (B, S, D), dtype=jnp.float32)
    x_mask = jnp.ones((B, S), dtype=jnp.float32).at[1, S - 4:].set(0.0)

    params = init_params(ks[4], D=D, F=F, V=V, NF=NF, NH=NH, max_pos=Tf)

    fwd = jax.jit(functools.partial(decoder_with_loss_forward,
                                    span_loss_lb=LAMBDA_SPAN,
                                    pad_token_id=PAD_ID))
    out = jax.block_until_ready(fwd(y, y_mask, x_reps, x_mask, params))
    print("KERNEL_OK")
</pallas_src>

<mosaic_0001>
module attributes {stable_mosaic.version = 11 : i64} {
  func.func @decoder_fused_kernel(%arg0: memref<2x8x32xf32, #tpu.memory_space<vmem>>, %arg1: memref<2x1x8xf32, #tpu.memory_space<vmem>>, %arg2: memref<2x16x32xbf16, #tpu.memory_space<vmem>>, %arg3: memref<2x1x16xf32, #tpu.memory_space<vmem>>, %arg4: memref<2x8x1xf32, #tpu.memory_space<vmem>>, %arg5: memref<2x8x2xi32, #tpu.memory_space<vmem>>, %arg6: memref<2x32x1xi32, #tpu.memory_space<vmem>>, %arg7: memref<32x752xbf16, #tpu.memory_space<vmem>>, %arg8: memref<64x32xbf16, #tpu.memory_space<vmem>>, %arg9: memref<1x1104xf32, #tpu.memory_space<vmem>>, %arg10: memref<2x8x64xf32, #tpu.memory_space<vmem>>, %arg11: memref<2x8x64xf32, #tpu.memory_space<vmem>>, %arg12: memref<1x8xf32, #tpu.memory_space<vmem>>, %arg13: memref<2x32x32xf32, #tpu.memory_space<vmem>>) attributes {dimension_semantics = [], scalar_prefetch = 0 : i64, scratch_operands = 1 : i64, tpu.core_type = #tpu.core_type<tc>} {
    %c0 = arith.constant 0 : index
    %c784 = arith.constant 784 : index
    %0 = vector.load %arg9[%c0, %c784] : memref<1x1104xf32, #tpu.memory_space<vmem>>, vector<1x32xf32>
    %c0_0 = arith.constant 0 : index
    %c912 = arith.constant 912 : index
    %1 = vector.load %arg9[%c0_0, %c912] : memref<1x1104xf32, #tpu.memory_space<vmem>>, vector<1x32xf32>
    %c0_1 = arith.constant 0 : index
    %c0_2 = arith.constant 0 : index
    %c0_3 = arith.constant 0 : index
    %2 = vector.load %arg0[%c0_1, %c0_2, %c0_3] : memref<2x8x32xf32, #tpu.memory_space<vmem>>, vector<2x8x32xf32>
    %3 = vector.shape_cast %2 : vector<2x8x32xf32> to vector<16x32xf32>
    %cst = arith.constant dense<0.000000e+00> : vector<16xf32>
    %4 = vector.multi_reduction <add>, %3, %cst [1] : vector<16x32xf32> to vector<16xf32>
    %5 = vector.shape_cast %4 : vector<16xf32> to vector<16x1xf32>
    %cst_4 = arith.constant 3.200000e+01 : f32
    %6 = vector.broadcast %cst_4 : f32 to vector<16x1xf32>
    %7 = arith.divf %5, %6 : vector<16x1xf32>
    %8 = vector.broadcast %7 : vector<16x1xf32> to vector<16x32xf32>
    %9 = arith.subf %3, %8 : vector<16x32xf32>
    %10 = arith.mulf %9, %9 : vector<16x32xf32>
    %cst_5 = arith.constant dense<0.000000e+00> : vector<16xf32>
    %11 = vector.multi_reduction <add>, %10, %cst_5 [1] : vector<16x32xf32> to vector<16xf32>
    %12 = vector.shape_cast %11 : vector<16xf32> to vector<16x1xf32>
    %cst_6 = arith.constant 3.200000e+01 : f32
    %13 = vector.broadcast %cst_6 : f32 to vector<16x1xf32>
    %14 = arith.divf %12, %13 : vector<16x1xf32>
    %15 = vector.broadcast %7 : vector<16x1xf32> to vector<16x32xf32>
    %16 = arith.subf %3, %15 : vector<16x32xf32>
    %cst_7 = arith.constant 9.99999996E-13 : f32
    %17 = vector.broadcast %cst_7 : f32 to vector<16x1xf32>
    %18 = arith.addf %14, %17 : vector<16x1xf32>
    %19 = math.rsqrt %18 : vector<16x1xf32>
    %20 = vector.broadcast %19 : vector<16x1xf32> to vector<16x32xf32>
    %21 = arith.mulf %16, %20 : vector<16x32xf32>
    %22 = vector.broadcast %0 : vector<1x32xf32> to vector<16x32xf32>
    %23 = arith.mulf %21, %22 : vector<16x32xf32>
    %24 = vector.broadcast %1 : vector<1x32xf32> to vector<16x32xf32>
    %25 = arith.addf %23, %24 : vector<16x32xf32>
    %c0_8 = arith.constant 0 : index
    %c0_9 = arith.constant 0 : index
    %26 = vector.load %arg7[%c0_8, %c0_9] : memref<32x752xbf16, #tpu.memory_space<vmem>>, vector<32x96xbf16>
    %27 = arith.truncf %25 : vector<16x32xf32> to vector<16x32xbf16>
    %cst_10 = arith.constant dense<0.000000e+00> : vector<16x96xf32>
    %28 = tpu.matmul %27, %26, %cst_10 {dimension_numbers = #tpu.dot_dimension_numbers<[1], [0], [0], [1], [0, 0, 1, 1], [], []>} : vector<16x32xbf16>, vector<32x96xbf16>, vector<16x96xf32> -> vector<16x96xf32>
    %c0_11 = arith.constant 0 : index
    %c0_12 = arith.constant 0 : index
    %29 = vector.load %arg9[%c0_11, %c0_12] : memref<1x1104xf32, #tpu.memory_space<vmem>>, vector<1x96xf32>
    %30 = vector.broadcast %29 : vector<1x96xf32> to vector<16x96xf32>
    %31 = arith.addf %28, %30 : vector<16x96xf32>
    %32 = vector.extract_strided_slice %31 {offsets = [0, 0], sizes = [16, 32], strides = [1, 1]} : vector<16x96xf32> to vector<16x32xf32>
    %33 = vector.shape_cast %32 : vector<16x32xf32> to vector<2x8x32xf32>
    %34 = vector.extract_strided_slice %31 {offsets = [0, 32], sizes = [16, 32], strides = [1, 1]} : vector<16x96xf32> to vector<16x32xf32>
    %35 = vector.shape_cast %34 : vector<16x32xf32> to vector<2x8x32xf32>
    %36 = vector.extract_strided_slice %31 {offsets = [0, 64], sizes = [16, 32], strides = [1, 1]} : vector<16x96xf32> to vector<16x32xf32>
    %37 = vector.shape_cast %36 : vector<16x32xf32> to vector<2x8x32xf32>
    %38 = arith.truncf %33 : vector<2x8x32xf32> to vector<2x8x32xbf16>
    %39 = arith.truncf %35 : vector<2x8x32xf32> to vector<2x8x32xbf16>
    "tpu.trace_start"() <{level = 10 : i32, message = "bqd,bkd->bqk"}> : () -> ()
    %cst_13 = arith.constant dense<0.000000e+00> : vector<2x8x8xf32>
    %40 = tpu.matmul %38, %39, %cst_13 {dimension_numbers = #tpu.dot_dimension_numbers<[2], [2], [1], [1], [0, 0, 0, 1, 1, 1], [0], [0]>} : vector<2x8x32xbf16>, vector<2x8x32xbf16>, vector<2x8x8xf32> -> vector<2x8x8xf32>
    "tpu.trace_stop"() : () -> ()
    %cst_14 = arith.constant 0.176776692 : f32
    %41 = vector.broadcast %cst_14 : f32 to vector<2x8x8xf32>
    %42 = arith.mulf %40, %41 : vector<2x8x8xf32>
    %43 = tpu.iota {dimensions = array<i32: 0>} : vector<8x8xi32>
    %44 = tpu.iota {dimensions = array<i32: 1>} : vector<8x8xi32>
    %45 = arith.cmpi sge, %43, %44 : vector<8x8xi32>
    %46 = arith.extui %45 : vector<8x8xi1> to vector<8x8xi32>
    %47 = arith.sitofp %46 : vector<8x8xi32> to vector<8x8xf32>
    %48 = vector.shape_cast %47 : vector<8x8xf32> to vector<1x8x8xf32>
    %c0_15 = arith.constant 0 : index
    %c0_16 = arith.constant 0 : index
    %c0_17 = arith.constant 0 : index
    %49 = vector.load %arg1[%c0_15, %c0_16, %c0_17] : memref<2x1x8xf32, #tpu.memory_space<vmem>>, vector<2x1x8xf32>
    %50 = vector.broadcast %48 : vector<1x8x8xf32> to vector<2x8x8xf32>
    %51 = vector.broadcast %49 : vector<2x1x8xf32> to vector<2x8x8xf32>
    %52 = arith.mulf %50, %51 : vector<2x8x8xf32>
    %cst_18 = arith.constant 1.000000e+00 : f32
    %53 = vector.broadcast %cst_18 : f32 to vector<2x8x8xf32>
    %54 = arith.subf %53, %52 : vector<2x8x8xf32>
    %cst_19 = arith.constant -1.000000e+09 : f32
    %55 = vector.broadcast %cst_19 : f32 to vector<2x8x8xf32>
    %56 = arith.mulf %54, %55 : vector<2x8x8xf32>
    %57 = arith.addf %42, %56 : vector<2x8x8xf32>
    %cst_20 = arith.constant dense<0xFF800000> : vector<2x8xf32>
    %58 = vector.multi_reduction <maximumf>, %57, %cst_20 [2] : vector<2x8x8xf32> to vector<2x8xf32>
    %59 = vector.shape_cast %58 : vector<2x8xf32> to vector<2x8x1xf32>
    %60 = vector.broadcast %59 : vector<2x8x1xf32> to vector<2x8x8xf32>
    %61 = arith.subf %57, %60 : vector<2x8x8xf32>
    %62 = math.exp %61 : vector<2x8x8xf32>
    %cst_21 = arith.constant dense<0.000000e+00> : vector<2x8xf32>
    %63 = vector.multi_reduction <add>, %62, %cst_21 [2] : vector<2x8x8xf32> to vector<2x8xf32>
    %64 = vector.shape_cast %63 : vector<2x8xf32> to vector<2x8x1xf32>
    %65 = tpu.reciprocal %64 {approx = true} : vector<2x8x1xf32> -> vector<2x8x1xf32>
    %66 = vector.broadcast %65 : vector<2x8x1xf32> to vector<2x8x8xf32>
    %67 = arith.mulf %62, %66 : vector<2x8x8xf32>
    %68 = arith.truncf %67 : vector<2x8x8xf32> to vector<2x8x8xbf16>
    %69 = arith.truncf %37 : vector<2x8x32xf32> to vector<2x8x32xbf16>
    "tpu.trace_start"() <{level = 10 : i32, message = "bqk,bkd->bqd"}> : () -> ()
    %cst_22 = arith.constant dense<0.000000e+00> : vector<2x8x32xf32>
    %70 = tpu.matmul %68, %69, %cst_22 {dimension_numbers = #tpu.dot_dimension_numbers<[2], [1], [1], [2], [0, 0, 0, 1, 1, 2], [0], [0]>} : vector<2x8x8xbf16>, vector<2x8x32xbf16>, vector<2x8x32xf32> -> vector<2x8x32xf32>
    "tpu.trace_stop"() : () -> ()
    %71 = vector.shape_cast %70 : vector<2x8x32xf32> to vector<16x32xf32>
    %c0_23 = arith.constant 0 : index
    %c816 = arith.constant 816 : index
    %72 = vector.load %arg9[%c0_23, %c816] : memref<1x1104xf32, #tpu.memory_space<vmem>>, vector<1x32xf32>
    %c0_24 = arith.constant 0 : index
    %c944 = arith.constant 944 : index
    %73 = vector.load %arg9[%c0_24, %c944] : memref<1x1104xf32, #tpu.memory_space<vmem>>, vector<1x32xf32>
    %c0_25 = arith.constant 0 : index
    %c96 = arith.constant 96 : index
    %74 = vector.load %arg7[%c0_25, %c96] : memref<32x752xbf16, #tpu.memory_space<vmem>>, vector<32x32xbf16>
    %75 = arith.truncf %71 : vector<16x32xf32> to vector<16x32xbf16>
    %cst_26 = arith.constant dense<0.000000e+00> : vector<16x32xf32>
    %76 = tpu.matmul %75, %74, %cst_26 {dimension_numbers = #tpu.dot_dimension_numbers<[1], [0], [0], [1], [0, 0, 1, 1], [], []>} : vector<16x32xbf16>, vector<32x32xbf16>, vector<16x32xf32> -> vector<16x32xf32>
    %77 = arith.addf %25, %76 : vector<16x32xf32>
    %c0_27 = arith.constant 0 : index
    %c96_28 = arith.constant 96 : index
    %78 = vector.load %arg9[%c0_27, %c96_28] : memref<1x1104xf32, #tpu.memory_space<vmem>>, vector<1x32xf32>
    %79 = vector.broadcast %78 : vector<1x32xf32> to vector<16x32xf32>
    %80 = arith.addf %77, %79 : vector<16x32xf32>
    %cst_29 = arith.constant dense<0.000000e+00> : vector<16xf32>
    %81 = vector.multi_reduction <add>, %80, %cst_29 [1] : vector<16x32xf32> to vector<16xf32>
    %82 = vector.shape_cast %81 : vector<16xf32> to vector<16x1xf32>
    %cst_30 = arith.constant 3.200000e+01 : f32
    %83 = vector.broadcast %cst_30 : f32 to vector<16x1xf32>
    %84 = arith.divf %82, %83 : vector<16x1xf32>
    %85 = vector.broadcast %84 : vector<16x1xf32> to vector<16x32xf32>
    %86 = arith.subf %80, %85 : vector<16x32xf32>
    %87 = arith.mulf %86, %86 : vector<16x32xf32>
    %cst_31 = arith.constant dense<0.000000e+00> : vector<16xf32>
    %88 = vector.multi_reduction <add>, %87, %cst_31 [1] : vector<16x32xf32> to vector<16xf32>
    %89 = vector.shape_cast %88 : vector<16xf32> to vector<16x1xf32>
    %cst_32 = arith.constant 3.200000e+01 : f32
    %90 = vector.broadcast %cst_32 : f32 to vector<16x1xf32>
    %91 = arith.divf %89, %90 : vector<16x1xf32>
    %92 = vector.broadcast %84 : vector<16x1xf32> to vector<16x32xf32>
    %93 = arith.subf %80, %92 : vector<16x32xf32>
    %cst_33 = arith.constant 9.99999996E-13 : f32
    %94 = vector.broadcast %cst_33 : f32 to vector<16x1xf32>
    %95 = arith.addf %91, %94 : vector<16x1xf32>
    %96 = math.rsqrt %95 : vector<16x1xf32>
    %97 = vector.broadcast %96 : vector<16x1xf32> to vector<16x32xf32>
    %98 = arith.mulf %93, %97 : vector<16x32xf32>
    %99 = vector.broadcast %72 : vector<1x32xf32> to vector<16x32xf32>
    %100 = arith.mulf %98, %99 : vector<16x32xf32>
    %101 = vector.broadcast %73 : vector<1x32xf32> to vector<16x32xf32>
    %102 = arith.addf %100, %101 : vector<16x32xf32>
    %c0_34 = arith.constant 0 : index
    %c0_35 = arith.constant 0 : index
    %c0_36 = arith.constant 0 : index
    %103 = vector.load %arg2[%c0_34, %c0_35, %c0_36] : memref<2x16x32xbf16, #tpu.memory_space<vmem>>, vector<2x16x32xbf16>
    %c0_37 = arith.constant 0 : index
    %c128 = arith.constant 128 : index
    %104 = vector.load %arg7[%c0_37, %c128] : memref<32x752xbf16, #tpu.memory_space<vmem>>, vector<32x32xbf16>
    %105 = arith.truncf %102 : vector<16x32xf32> to vector<16x32xbf16>
    %cst_38 = arith.constant dense<0.000000e+00> : vector<16x32xf32>
    %106 = tpu.matmul %105, %104, %cst_38 {dimension_numbers = #tpu.dot_dimension_numbers<[1], [0], [0], [1], [0, 0, 1, 1], [], []>} : vector<16x32xbf16>, vector<32x32xbf16>, vector<16x32xf32> -> vector<16x32xf32>
    %c0_39 = arith.constant 0 : index
    %c128_40 = arith.constant 128 : index
    %107 = vector.load %arg9[%c0_39, %c128_40] : memref<1x1104xf32, #tpu.memory_space<vmem>>, vector<1x32xf32>
    %108 = vector.broadcast %107 : vector<1x32xf32> to vector<16x32xf32>
    %109 = arith.addf %106, %108 : vector<16x32xf32>
    %110 = vector.shape_cast %109 : vector<16x32xf32> to vector<2x8x32xf32>
    %111 = vector.shape_cast %103 : vector<2x16x32xbf16> to vector<32x32xbf16>
    %c0_41 = arith.constant 0 : index
    %c160 = arith.constant 160 : index
    %112 = vector.load %arg7[%c0_41, %c160] : memref<32x752xbf16, #tpu.memory_space<vmem>>, vector<32x64xbf16>
    %cst_42 = arith.constant dense<0.000000e+00> : vector<32x64xf32>
    %113 = tpu.matmul %111, %112, %cst_42 {dimension_numbers = #tpu.dot_dimension_numbers<[1], [0], [0], [1], [0, 0, 1, 1], [], []>} : vector<32x32xbf16>, vector<32x64xbf16>, vector<32x64xf32> -> vector<32x64xf32>
    %c0_43 = arith.constant 0 : index
    %c160_44 = arith.constant 160 : index
    %114 = vector.load %arg9[%c0_43, %c160_44] : memref<1x1104xf32, #tpu.memory_space<vmem>>, vector<1x64xf32>
    %115 = vector.broadcast %114 : vector<1x64xf32> to vector<32x64xf32>
    %116 = arith.addf %113, %115 : vector<32x64xf32>
    %117 = vector.shape_cast %116 : vector<32x64xf32> to vector<2x16x64xf32>
    %118 = vector.extract_strided_slice %117 {offsets = [0, 0, 0], sizes = [2, 16, 32], strides = [1, 1, 1]} : vector<2x16x64xf32> to vector<2x16x32xf32>
    %119 = arith.truncf %110 : vector<2x8x32xf32> to vector<2x8x32xbf16>
    %120 = arith.truncf %118 : vector<2x16x32xf32> to vector<2x16x32xbf16>
    "tpu.trace_start"() <{level = 10 : i32, message = "bqd,bkd->bqk"}> : () -> ()
    %cst_45 = arith.constant dense<0.000000e+00> : vector<2x8x16xf32>
    %121 = tpu.matmul %119, %120, %cst_45 {dimension_numbers = #tpu.dot_dimension_numbers<[2], [2], [1], [1], [0, 0, 0, 1, 1, 1], [0], [0]>} : vector<2x8x32xbf16>, vector<2x16x32xbf16>, vector<2x8x16xf32> -> vector<2x8x16xf32>
    "tpu.trace_stop"() : () -> ()
    %cst_46 = arith.constant 0.176776692 : f32
    %122 = vector.broadcast %cst_46 : f32 to vector<2x8x16xf32>
    %123 = arith.mulf %121, %122 : vector<2x8x16xf32>
    %c0_47 = arith.constant 0 : index
    %c0_48 = arith.constant 0 : index
    %c0_49 = arith.constant 0 : index
    %124 = vector.load %arg3[%c0_47, %c0_48, %c0_49] : memref<2x1x16xf32, #tpu.memory_space<vmem>>, vector<2x1x16xf32>
    %cst_50 = arith.constant 1.000000e+00 : f32
    %125 = vector.broadcast %cst_50 : f32 to vector<2x1x16xf32>
    %126 = arith.subf %125, %124 : vector<2x1x16xf32>
    %cst_51 = arith.constant -1.000000e+09 : f32
    %127 = vector.broadcast %cst_51 : f32 to vector<2x1x16xf32>
    %128 = arith.mulf %126, %127 : vector<2x1x16xf32>
    %129 = vector.broadcast %128 : vector<2x1x16xf32> to vector<2x8x16xf32>
    %130 = arith.addf %123, %129 : vector<2x8x16xf32>
    %cst_52 = arith.constant dense<0xFF800000> : vector<2x8xf32>
    %131 = vector.multi_reduction <maximumf>, %130, %cst_52 [2] : vector<2x8x16xf32> to vector<2x8xf32>
    %132 = vector.shape_cast %131 : vector<2x8xf32> to vector<2x8x1xf32>
    %133 = vector.broadcast %132 : vector<2x8x1xf32> to vector<2x8x16xf32>
    %134 = arith.subf %130, %133 : vector<2x8x16xf32>
    %135 = math.exp %134 : vector<2x8x16xf32>
    %cst_53 = arith.constant dense<0.000000e+00> : vector<2x8xf32>
    %136 = vector.multi_reduction <add>, %135, %cst_53 [2] : vector<2x8x16xf32> to vector<2x8xf32>
    %137 = vector.shape_cast %136 : vector<2x8xf32> to vector<2x8x1xf32>
    %138 = tpu.reciprocal %137 {approx = true} : vector<2x8x1xf32> -> vector<2x8x1xf32>
    %139 = vector.broadcast %138 : vector<2x8x1xf32> to vector<2x8x16xf32>
    %140 = arith.mulf %135, %139 : vector<2x8x16xf32>
    %141 = vector.extract_strided_slice %117 {offsets = [0, 0, 32], sizes = [2, 16, 32], strides = [1, 1, 1]} : vector<2x16x64xf32> to vector<2x16x32xf32>
    %142 = arith.truncf %140 : vector<2x8x16xf32> to vector<2x8x16xbf16>
    %143 = arith.truncf %141 : vector<2x16x32xf32> to vector<2x16x32xbf16>
    "tpu.trace_start"() <{level = 10 : i32, message = "bqk,bkd->bqd"}> : () -> ()
    %cst_54 = arith.constant dense<0.000000e+00> : vector<2x8x32xf32>
    %144 = tpu.matmul %142, %143, %cst_54 {dimension_numbers = #tpu.dot_dimension_numbers<[2], [1], [1], [2], [0, 0, 0, 1, 1, 2], [0], [0]>} : vector<2x8x16xbf16>, vector<2x16x32xbf16>, vector<2x8x32xf32> -> vector<2x8x32xf32>
    "tpu.trace_stop"() : () -> ()
    %145 = vector.shape_cast %144 : vector<2x8x32xf32> to vector<16x32xf32>
    %c0_55 = arith.constant 0 : index
    %c848 = arith.constant 848 : index
    %146 = vector.load %arg9[%c0_55, %c848] : memref<1x1104xf32, #tpu.memory_space<vmem>>, vector<1x32xf32>
    %c0_56 = arith.constant 0 : index
    %c976 = arith.constant 976 : index
    %147 = vector.load %arg9[%c0_56, %c976] : memref<1x1104xf32, #tpu.memory_space<vmem>>, vector<1x32xf32>
    %c0_57 = arith.constant 0 : index
    %c224 = arith.constant 224 : index
    %148 = vector.load %arg7[%c0_57, %c224] : memref<32x752xbf16, #tpu.memory_space<vmem>>, vector<32x32xbf16>
    %149 = arith.truncf %145 : vector<16x32xf32> to vector<16x32xbf16>
    %cst_58 = arith.constant dense<0.000000e+00> : vector<16x32xf32>
    %150 = tpu.matmul %149, %148, %cst_58 {dimension_numbers = #tpu.dot_dimension_numbers<[1], [0], [0], [1], [0, 0, 1, 1], [], []>} : vector<16x32xbf16>, vector<32x32xbf16>, vector<16x32xf32> -> vector<16x32xf32>
    %151 = arith.addf %102, %150 : vector<16x32xf32>
    %c0_59 = arith.constant 0 : index
    %c224_60 = arith.constant 224 : index
    %152 = vector.load %arg9[%c0_59, %c224_60] : memref<1x1104xf32, #tpu.memory_space<vmem>>, vector<1x32xf32>
    %153 = vector.broadcast %152 : vector<1x32xf32> to vector<16x32xf32>
    %154 = arith.addf %151, %153 : vector<16x32xf32>
    %cst_61 = arith.constant dense<0.000000e+00> : vector<16xf32>
    %155 = vector.multi_reduction <add>, %154, %cst_61 [1] : vector<16x32xf32> to vector<16xf32>
    %156 = vector.shape_cast %155 : vector<16xf32> to vector<16x1xf32>
    %cst_62 = arith.constant 3.200000e+01 : f32
    %157 = vector.broadcast %cst_62 : f32 to vector<16x1xf32>
    %158 = arith.divf %156, %157 : vector<16x1xf32>
    %159 = vector.broadcast %158 : vector<16x1xf32> to vector<16x32xf32>
    %160 = arith.subf %154, %159 : vector<16x32xf32>
    %161 = arith.mulf %160, %160 : vector<16x32xf32>
    %cst_63 = arith.constant dense<0.000000e+00> : vector<16xf32>
    %162 = vector.multi_reduction <add>, %161, %cst_63 [1] : vector<16x32xf32> to vector<16xf32>
    %163 = vector.shape_cast %162 : vector<16xf32> to vector<16x1xf32>
    %cst_64 = arith.constant 3.200000e+01 : f32
    %164 = vector.broadcast %cst_64 : f32 to vector<16x1xf32>
    %165 = arith.divf %163, %164 : vector<16x1xf32>
    %166 = vector.broadcast %158 : vector<16x1xf32> to vector<16x32xf32>
    %167 = arith.subf %154, %166 : vector<16x32xf32>
    %cst_65 = arith.constant 9.99999996E-13 : f32
    %168 = vector.broadcast %cst_65 : f32 to vector<16x1xf32>
    %169 = arith.addf %165, %168 : vector<16x1xf32>
    %170 = math.rsqrt %169 : vector<16x1xf32>
    %171 = vector.broadcast %170 : vector<16x1xf32> to vector<16x32xf32>
    %172 = arith.mulf %167, %171 : vector<16x32xf32>
    %173 = vector.broadcast %146 : vector<1x32xf32> to vector<16x32xf32>
    %174 = arith.mulf %172, %173 : vector<16x32xf32>
    %175 = vector.broadcast %147 : vector<1x32xf32> to vector<16x32xf32>
    %176 = arith.addf %174, %175 : vector<16x32xf32>
    %c0_66 = arith.constant 0 : index
    %c256 = arith.constant 256 : index
    %177 = vector.load %arg7[%c0_66, %c256] : memref<32x752xbf16, #tpu.memory_space<vmem>>, vector<32x64xbf16>
    %178 = arith.truncf %176 : vector<16x32xf32> to vector<16x32xbf16>
    %cst_67 = arith.constant dense<0.000000e+00> : vector<16x64xf32>
    %179 = tpu.matmul %178, %177, %cst_67 {dimension_numbers = #tpu.dot_dimension_numbers<[1], [0], [0], [1], [0, 0, 1, 1], [], []>} : vector<16x32xbf16>, vector<32x64xbf16>, vector<16x64xf32> -> vector<16x64xf32>
    %c0_68 = arith.constant 0 : index
    %c256_69 = arith.constant 256 : index
    %180 = vector.load %arg9[%c0_68, %c256_69] : memref<1x1104xf32, #tpu.memory_space<vmem>>, vector<1x64xf32>
    %181 = vector.broadcast %180 : vector<1x64xf32> to vector<16x64xf32>
    %182 = arith.addf %179, %181 : vector<16x64xf32>
    %183 = arith.mulf %182, %182 : vector<16x64xf32>
    %184 = arith.mulf %182, %183 : vector<16x64xf32>
    %cst_70 = arith.constant 4.471500e-02 : f32
    %185 = vector.broadcast %cst_70 : f32 to vector<16x64xf32>
    %186 = arith.mulf %185, %184 : vector<16x64xf32>
    %187 = arith.addf %182, %186 : vector<16x64xf32>
    %cst_71 = arith.constant 0.797884583 : f32
    %188 = vector.broadcast %cst_71 : f32 to vector<16x64xf32>
    %189 = arith.mulf %188, %187 : vector<16x64xf32>
    %190 = math.tanh %189 : vector<16x64xf32>
    %cst_72 = arith.constant 1.000000e+00 : f32
    %191 = vector.broadcast %cst_72 : f32 to vector<16x64xf32>
    %192 = arith.addf %191, %190 : vector<16x64xf32>
    %cst_73 = arith.constant 5.000000e-01 : f32
    %193 = vector.broadcast %cst_73 : f32 to vector<16x64xf32>
    %194 = arith.mulf %193, %192 : vector<16x64xf32>
    %195 = arith.mulf %182, %194 : vector<16x64xf32>
    %c0_74 = arith.constant 0 : index
    %c0_75 = arith.constant 0 : index
    %196 = vector.load %arg8[%c0_74, %c0_75] : memref<64x32xbf16, #tpu.memory_space<vmem>>, vector<64x32xbf16>
    %197 = arith.truncf %195 : vector<16x64xf32> to vector<16x64xbf16>
    %cst_76 = arith.constant dense<0.000000e+00> : vector<16x32xf32>
    %198 = tpu.matmul %197, %196, %cst_76 {dimension_numbers = #tpu.dot_dimension_numbers<[1], [0], [0], [1], [0, 0, 1, 1], [], []>} : vector<16x64xbf16>, vector<64x32xbf16>, vector<16x32xf32> -> vector<16x32xf32>
    %c0_77 = arith.constant 0 : index
    %c320 = arith.constant 320 : index
    %199 = vector.load %arg9[%c0_77, %c320] : memref<1x1104xf32, #tpu.memory_space<vmem>>, vector<1x32xf32>
    %200 = vector.broadcast %199 : vector<1x32xf32> to vector<16x32xf32>
    %201 = arith.addf %198, %200 : vector<16x32xf32>
    %c0_78 = arith.constant 0 : index
    %c880 = arith.constant 880 : index
    %202 = vector.load %arg9[%c0_78, %c880] : memref<1x1104xf32, #tpu.memory_space<vmem>>, vector<1x32xf32>
    %c0_79 = arith.constant 0 : index
    %c1008 = arith.constant 1008 : index
    %203 = vector.load %arg9[%c0_79, %c1008] : memref<1x1104xf32, #tpu.memory_space<vmem>>, vector<1x32xf32>
    %204 = arith.addf %176, %201 : vector<16x32xf32>
    %cst_80 = arith.constant dense<0.000000e+00> : vector<16xf32>
    %205 = vector.multi_reduction <add>, %204, %cst_80 [1] : vector<16x32xf32> to vector<16xf32>
    %206 = vector.shape_cast %205 : vector<16xf32> to vector<16x1xf32>
    %cst_81 = arith.constant 3.200000e+01 : f32
    %207 = vector.broadcast %cst_81 : f32 to vector<16x1xf32>
    %208 = arith.divf %206, %207 : vector<16x1xf32>
    %209 = vector.broadcast %208 : vector<16x1xf32> to vector<16x32xf32>
    %210 = arith.subf %204, %209 : vector<16x32xf32>
    %211 = arith.mulf %210, %210 : vector<16x32xf32>
    %cst_82 = arith.constant dense<0.000000e+00> : vector<16xf32>
    %212 = vector.multi_reduction <add>, %211, %cst_82 [1] : vector<16x32xf32> to vector<16xf32>
    %213 = vector.shape_cast %212 : vector<16xf32> to vector<16x1xf32>
    %cst_83 = arith.constant 3.200000e+01 : f32
    %214 = vector.broadcast %cst_83 : f32 to vector<16x1xf32>
    %215 = arith.divf %213, %214 : vector<16x1xf32>
    %216 = vector.broadcast %208 : vector<16x1xf32> to vector<16x32xf32>
    %217 = arith.subf %204, %216 : vector<16x32xf32>
    %cst_84 = arith.constant 9.99999996E-13 : f32
    %218 = vector.broadcast %cst_84 : f32 to vector<16x1xf32>
    %219 = arith.addf %215, %218 : vector<16x1xf32>
    %220 = math.rsqrt %219 : vector<16x1xf32>
    %221 = vector.broadcast %220 : vector<16x1xf32> to vector<16x32xf32>
    %222 = arith.mulf %217, %221 : vector<16x32xf32>
    %223 = vector.broadcast %202 : vector<1x32xf32> to vector<16x32xf32>
    %224 = arith.mulf %222, %223 : vector<16x32xf32>
    %225 = vector.broadcast %203 : vector<1x32xf32> to vector<16x32xf32>
    %226 = arith.addf %224, %225 : vector<16x32xf32>
    %c0_85 = arith.constant 0 : index
    %c320_86 = arith.constant 320 : index
    %227 = vector.load %arg7[%c0_85, %c320_86] : memref<32x752xbf16, #tpu.memory_space<vmem>>, vector<32x112xbf16>
    %228 = arith.truncf %226 : vector<16x32xf32> to vector<16x32xbf16>
    %cst_87 = arith.constant dense<0.000000e+00> : vector<16x112xf32>
    %229 = tpu.matmul %228, %227, %cst_87 {dimension_numbers = #tpu.dot_dimension_numbers<[1], [0], [0], [1], [0, 0, 1, 1], [], []>} : vector<16x32xbf16>, vector<32x112xbf16>, vector<16x112xf32> -> vector<16x112xf32>
    %c0_88 = arith.constant 0 : index
    %c352 = arith.constant 352 : index
    %230 = vector.load %arg9[%c0_88, %c352] : memref<1x1104xf32, #tpu.memory_space<vmem>>, vector<1x112xf32>
    %231 = vector.broadcast %230 : vector<1x112xf32> to vector<16x112xf32>
    %232 = arith.addf %229, %231 : vector<16x112xf32>
    %233 = vector.extract_strided_slice %232 {offsets = [0, 0], sizes = [16, 32], strides = [1, 1]} : vector<16x112xf32> to vector<16x32xf32>
    %234 = vector.extract_strided_slice %232 {offsets = [0, 32], sizes = [16, 16], strides = [1, 1]} : vector<16x112xf32> to vector<16x16xf32>
    %235 = vector.extract_strided_slice %232 {offsets = [0, 48], sizes = [16, 32], strides = [1, 1]} : vector<16x112xf32> to vector<16x32xf32>
    %236 = vector.extract_strided_slice %232 {offsets = [0, 80], sizes = [16, 32], strides = [1, 1]} : vector<16x112xf32> to vector<16x32xf32>
    %237 = arith.mulf %233, %233 : vector<16x32xf32>
    %238 = arith.mulf %233, %237 : vector<16x32xf32>
    %cst_89 = arith.constant 4.471500e-02 : f32
    %239 = vector.broadcast %cst_89 : f32 to vector<16x32xf32>
    %240 = arith.mulf %239, %238 : vector<16x32xf32>
    %241 = arith.addf %233, %240 : vector<16x32xf32>
    %cst_90 = arith.constant 0.797884583 : f32
    %242 = vector.broadcast %cst_90 : f32 to vector<16x32xf32>
    %243 = arith.mulf %242, %241 : vector<16x32xf32>
    %244 = math.tanh %243 : vector<16x32xf32>
    %cst_91 = arith.constant 1.000000e+00 : f32
    %245 = vector.broadcast %cst_91 : f32 to vector<16x32xf32>
    %246 = arith.addf %245, %244 : vector<16x32xf32>
    %cst_92 = arith.constant 5.000000e-01 : f32
    %247 = vector.broadcast %cst_92 : f32 to vector<16x32xf32>
    %248 = arith.mulf %247, %246 : vector<16x32xf32>
    %249 = arith.mulf %233, %248 : vector<16x32xf32>
    %c0_93 = arith.constant 0 : index
    %c1040 = arith.constant 1040 : index
    %250 = vector.load %arg9[%c0_93, %c1040] : memref<1x1104xf32, #tpu.memory_space<vmem>>, vector<1x32xf32>
    %c0_94 = arith.constant 0 : index
    %c1072 = arith.constant 1072 : index
    %251 = vector.load %arg9[%c0_94, %c1072] : memref<1x1104xf32, #tpu.memory_space<vmem>>, vector<1x32xf32>
    %cst_95 = arith.constant dense<0.000000e+00> : vector<16xf32>
    %252 = vector.multi_reduction <add>, %249, %cst_95 [1] : vector<16x32xf32> to vector<16xf32>
    %253 = vector.shape_cast %252 : vector<16xf32> to vector<16x1xf32>
    %cst_96 = arith.constant 3.200000e+01 : f32
    %254 = vector.broadcast %cst_96 : f32 to vector<16x1xf32>
    %255 = arith.divf %253, %254 : vector<16x1xf32>
    %256 = vector.broadcast %255 : vector<16x1xf32> to vector<16x32xf32>
    %257 = arith.subf %249, %256 : vector<16x32xf32>
    %258 = arith.mulf %257, %257 : vector<16x32xf32>
    %cst_97 = arith.constant dense<0.000000e+00> : vector<16xf32>
    %259 = vector.multi_reduction <add>, %258, %cst_97 [1] : vector<16x32xf32> to vector<16xf32>
    %260 = vector.shape_cast %259 : vector<16xf32> to vector<16x1xf32>
    %cst_98 = arith.constant 3.200000e+01 : f32
    %261 = vector.broadcast %cst_98 : f32 to vector<16x1xf32>
    %262 = arith.divf %260, %261 : vector<16x1xf32>
    %263 = vector.broadcast %255 : vector<16x1xf32> to vector<16x32xf32>
    %264 = arith.subf %249, %263 : vector<16x32xf32>
    %cst_99 = arith.constant 9.99999996E-13 : f32
    %265 = vector.broadcast %cst_99 : f32 to vector<16x1xf32>
    %266 = arith.addf %262, %265 : vector<16x1xf32>
    %267 = math.rsqrt %266 : vector<16x1xf32>
    %268 = vector.broadcast %267 : vector<16x1xf32> to vector<16x32xf32>
    %269 = arith.mulf %264, %268 : vector<16x32xf32>
    %270 = vector.broadcast %250 : vector<1x32xf32> to vector<16x32xf32>
    %271 = arith.mulf %269, %270 : vector<16x32xf32>
    %272 = vector.broadcast %251 : vector<1x32xf32> to vector<16x32xf32>
    %273 = arith.addf %271, %272 : vector<16x32xf32>
    %c0_100 = arith.constant 0 : index
    %c432 = arith.constant 432 : index
    %274 = vector.load %arg7[%c0_100, %c432] : memref<32x752xbf16, #tpu.memory_space<vmem>>, vector<32x64xbf16>
    %275 = arith.truncf %273 : vector<16x32xf32> to vector<16x32xbf16>
    %cst_101 = arith.constant dense<0.000000e+00> : vector<16x64xf32>
    %276 = tpu.matmul %275, %274, %cst_101 {dimension_numbers = #tpu.dot_dimension_numbers<[1], [0], [0], [1], [0, 0, 1, 1], [], []>} : vector<16x32xbf16>, vector<32x64xbf16>, vector<16x64xf32> -> vector<16x64xf32>
    %c0_102 = arith.constant 0 : index
    %c464 = arith.constant 464 : index
    %277 = vector.load %arg9[%c0_102, %c464] : memref<1x1104xf32, #tpu.memory_space<vmem>>, vector<1x64xf32>
    %278 = vector.broadcast %277 : vector<1x64xf32> to vector<16x64xf32>
    %279 = arith.addf %276, %278 : vector<16x64xf32>
    %280 = vector.shape_cast %279 : vector<16x64xf32> to vector<2x8x64xf32>
    %c0_103 = arith.constant 0 : index
    %c0_104 = arith.constant 0 : index
    %c0_105 = arith.constant 0 : index
    %281 = vector.load %arg10[%c0_103, %c0_104, %c0_105] : memref<2x8x64xf32, #tpu.memory_space<vmem>>, vector<2x8x64xf32>
    tpu.vector_store %arg10[%c0_103, %c0_104, %c0_105], %280 {strides = array<i32>} : memref<2x8x64xf32, #tpu.memory_space<vmem>>, vector<2x8x64xf32>,
    %282 = tpu.concatenate %226, %226 in 0 : vector<16x32xf32>, vector<16x32xf32> -> vector<32x32xf32>
    %283 = tpu.iota {dimensions = array<i32: 0>} : vector<32x1xi32>
    %c16_i32 = arith.constant 16 : i32
    %284 = vector.broadcast %c16_i32 : i32 to vector<32x1xi32>
    %285 = arith.cmpi slt, %283, %284 : vector<32x1xi32>
    %c0_106 = arith.constant 0 : index
    %c496 = arith.constant 496 : index
    %286 = vector.load %arg7[%c0_106, %c496] : memref<32x752xbf16, #tpu.memory_space<vmem>>, vector<32x128xbf16>
    %c0_107 = arith.constant 0 : index
    %c528 = arith.constant 528 : index
    %287 = vector.load %arg9[%c0_107, %c528] : memref<1x1104xf32, #tpu.memory_space<vmem>>, vector<1x128xf32>
    %288 = arith.truncf %282 : vector<32x32xf32> to vector<32x32xbf16>
    %cst_108 = arith.constant dense<0.000000e+00> : vector<32x128xf32>
    %289 = tpu.matmul %288, %286, %cst_108 {dimension_numbers = #tpu.dot_dimension_numbers<[1], [0], [0], [1], [0, 0, 1, 1], [], []>} : vector<32x32xbf16>, vector<32x128xbf16>, vector<32x128xf32> -> vector<32x128xf32>
    %290 = vector.broadcast %287 : vector<1x128xf32> to vector<32x128xf32>
    %291 = arith.addf %289, %290 : vector<32x128xf32>
    %292 = vector.extract_strided_slice %291 {offsets = [0, 0], sizes = [32, 32], strides = [1, 1]} : vector<32x128xf32> to vector<32x32xf32>
    %293 = vector.extract_strided_slice %291 {offsets = [0, 32], sizes = [32, 32], strides = [1, 1]} : vector<32x128xf32> to vector<32x32xf32>
    %294 = vector.shape_cast %285 : vector<32x1xi1> to vector<32x1xi1>
    %295 = vector.broadcast %294 : vector<32x1xi1> to vector<32x32xi1>
    %296 = arith.select %295, %292, %293 : vector<32x32xi1>, vector<32x32xf32>
    %297 = arith.negf %296 : vector<32x32xf32>
    %298 = math.exp %297 : vector<32x32xf32>
    %cst_109 = arith.constant 1.000000e+00 : f32
    %299 = vector.broadcast %cst_109 : f32 to vector<32x32xf32>
    %300 = arith.addf %299, %298 : vector<32x32xf32>
    %301 = arith.divf %299, %300 : vector<32x32xf32>
    %302 = vector.extract_strided_slice %291 {offsets = [0, 64], sizes = [32, 32], strides = [1, 1]} : vector<32x128xf32> to vector<32x32xf32>
    %303 = vector.extract_strided_slice %291 {offsets = [0, 96], sizes = [32, 32], strides = [1, 1]} : vector<32x128xf32> to vector<32x32xf32>
    %304 = vector.shape_cast %285 : vector<32x1xi1> to vector<32x1xi1>
    %305 = vector.broadcast %304 : vector<32x1xi1> to vector<32x32xi1>
    %306 = arith.select %305, %302, %303 : vector<32x32xi1>, vector<32x32xf32>
    %307 = math.tanh %306 : vector<32x32xf32>
    %308 = arith.mulf %301, %307 : vector<32x32xf32>
    %cst_110 = arith.constant 1.000000e+00 : f32
    %309 = vector.broadcast %cst_110 : f32 to vector<32x32xf32>
    %310 = arith.subf %309, %301 : vector<32x32xf32>
    %311 = arith.mulf %310, %282 : vector<32x32xf32>
    %312 = arith.addf %308, %311 : vector<32x32xf32>
    %c0_111 = arith.constant 0 : index
    %c624 = arith.constant 624 : index
    %313 = vector.load %arg7[%c0_111, %c624] : memref<32x752xbf16, #tpu.memory_space<vmem>>, vector<32x128xbf16>
    %c0_112 = arith.constant 0 : index
    %c656 = arith.constant 656 : index
    %314 = vector.load %arg9[%c0_112, %c656] : memref<1x1104xf32, #tpu.memory_space<vmem>>, vector<1x128xf32>
    %315 = arith.truncf %312 : vector<32x32xf32> to vector<32x32xbf16>
    %cst_113 = arith.constant dense<0.000000e+00> : vector<32x128xf32>
    %316 = tpu.matmul %315, %313, %cst_113 {dimension_numbers = #tpu.dot_dimension_numbers<[1], [0], [0], [1], [0, 0, 1, 1], [], []>} : vector<32x32xbf16>, vector<32x128xbf16>, vector<32x128xf32> -> vector<32x128xf32>
    %317 = vector.broadcast %314 : vector<1x128xf32> to vector<32x128xf32>
    %318 = arith.addf %316, %317 : vector<32x128xf32>
    %319 = vector.extract_strided_slice %318 {offsets = [0, 0], sizes = [32, 32], strides = [1, 1]} : vector<32x128xf32> to vector<32x32xf32>
    %320 = vector.extract_strided_slice %318 {offsets = [0, 32], sizes = [32, 32], strides = [1, 1]} : vector<32x128xf32> to vector<32x32xf32>
    %321 = vector.shape_cast %285 : vector<32x1xi1> to vector<32x1xi1>
    %322 = vector.broadcast %321 : vector<32x1xi1> to vector<32x32xi1>
    %323 = arith.select %322, %319, %320 : vector<32x32xi1>, vector<32x32xf32>
    %324 = arith.negf %323 : vector<32x32xf32>
    %325 = math.exp %324 : vector<32x32xf32>
    %cst_114 = arith.constant 1.000000e+00 : f32
    %326 = vector.broadcast %cst_114 : f32 to vector<32x32xf32>
    %327 = arith.addf %326, %325 : vector<32x32xf32>
    %328 = arith.divf %326, %327 : vector<32x32xf32>
    %329 = vector.extract_strided_slice %318 {offsets = [0, 64], sizes = [32, 32], strides = [1, 1]} : vector<32x128xf32> to vector<32x32xf32>
    %330 = vector.extract_strided_slice %318 {offsets = [0, 96], sizes = [32, 32], strides = [1, 1]} : vector<32x128xf32> to vector<32x32xf32>
    %331 = vector.shape_cast %285 : vector<32x1xi1> to vector<32x1xi1>
    %332 = vector.broadcast %331 : vector<32x1xi1> to vector<32x32xi1>
    %333 = arith.select %332, %329, %330 : vector<32x32xi1>, vector<32x32xf32>
    %334 = math.tanh %333 : vector<32x32xf32>
    %335 = arith.mulf %328, %334 : vector<32x32xf32>
    %cst_115 = arith.constant 1.000000e+00 : f32
    %336 = vector.broadcast %cst_115 : f32 to vector<32x32xf32>
    %337 = arith.subf %336, %328 : vector<32x32xf32>
    %338 = arith.mulf %337, %312 : vector<32x32xf32>
    %339 = arith.addf %335, %338 : vector<32x32xf32>
    %340 = vector.shape_cast %339 : vector<32x32xf32> to vector<2x2x8x32xf32>
    %341 = vector.extract_strided_slice %340 {offsets = [0, 0, 0, 0], sizes = [1, 2, 8, 32], strides = [1, 1, 1, 1]} : vector<2x2x8x32xf32> to vector<1x2x8x32xf32>
    %342 = vector.shape_cast %341 : vector<1x2x8x32xf32> to vector<2x8x32xf32>
    %c0_116 = arith.constant 0 : index
    %c0_117 = arith.constant 0 : index
    %c0_118 = arith.constant 0 : index
    %343 = vector.load %arg13[%c0_116, %c0_117, %c0_118] : memref<2x32x32xf32, #tpu.memory_space<vmem>>, vector<2x8x32xf32>
    tpu.vector_store %arg13[%c0_116, %c0_117, %c0_118], %342 {strides = array<i32>} : memref<2x32x32xf32, #tpu.memory_space<vmem>>, vector<2x8x32xf32>,
    %344 = vector.extract_strided_slice %340 {offsets = [1, 0, 0, 0], sizes = [1, 2, 8, 32], strides = [1, 1, 1, 1]} : vector<2x2x8x32xf32> to vector<1x2x8x32xf32>
    %345 = vector.shape_cast %344 : vector<1x2x8x32xf32> to vector<2x8x32xf32>
    %c0_119 = arith.constant 0 : index
    %c8 = arith.constant 8 : index
    %c0_120 = arith.constant 0 : index
    %346 = vector.load %arg13[%c0_119, %c8, %c0_120] : memref<2x32x32xf32, #tpu.memory_space<vmem>>, vector<2x8x32xf32>
    tpu.vector_store %arg13[%c0_119, %c8, %c0_120], %345 {strides = array<i32>} : memref<2x32x32xf32, #tpu.memory_space<vmem>>, vector<2x8x32xf32>,
    %347 = vector.shape_cast %235 : vector<16x32xf32> to vector<2x8x32xf32>
    %c0_121 = arith.constant 0 : index
    %c16 = arith.constant 16 : index
    %c0_122 = arith.constant 0 : index
    %348 = vector.load %arg13[%c0_121, %c16, %c0_122] : memref<2x32x32xf32, #tpu.memory_space<vmem>>, vector<2x8x32xf32>
    tpu.vector_store %arg13[%c0_121, %c16, %c0_122], %347 {strides = array<i32>} : memref<2x32x32xf32, #tpu.memory_space<vmem>>, vector<2x8x32xf32>,
    %349 = vector.shape_cast %236 : vector<16x32xf32> to vector<2x8x32xf32>
    %c0_123 = arith.constant 0 : index
    %c24 = arith.constant 24 : index
    %c0_124 = arith.constant 0 : index
    %350 = vector.load %arg13[%c0_123, %c24, %c0_124] : memref<2x32x32xf32, #tpu.memory_space<vmem>>, vector<2x8x32xf32>
    tpu.vector_store %arg13[%c0_123, %c24, %c0_124], %349 {strides = array<i32>} : memref<2x32x32xf32, #tpu.memory_space<vmem>>, vector<2x8x32xf32>,
    %c0_125 = arith.constant 0 : index
    %c0_126 = arith.constant 0 : index
    %c0_127 = arith.constant 0 : index
    %351 = vector.load %arg13[%c0_125, %c0_126, %c0_127] : memref<2x32x32xf32, #tpu.memory_space<vmem>>, vector<2x32x32xf32>
    %352 = arith.truncf %351 : vector<2x32x32xf32> to vector<2x32x32xbf16>
    "tpu.trace_start"() <{level = 10 : i32, message = "bqd,bsd->bqs"}> : () -> ()
    %cst_128 = arith.constant dense<0.000000e+00> : vector<2x32x16xf32>
    %353 = tpu.matmul %352, %103, %cst_128 {dimension_numbers = #tpu.dot_dimension_numbers<[2], [2], [1], [1], [0, 0, 0, 1, 1, 1], [0], [0]>} : vector<2x32x32xbf16>, vector<2x16x32xbf16>, vector<2x32x16xf32> -> vector<2x32x16xf32>
    "tpu.trace_stop"() : () -> ()
    %c0_129 = arith.constant 0 : index
    %c0_130 = arith.constant 0 : index
    %c0_131 = arith.constant 0 : index
    %354 = vector.load %arg4[%c0_129, %c0_130, %c0_131] : memref<2x8x1xf32, #tpu.memory_space<vmem>>, vector<2x8x1xf32>
    %cst_132 = arith.constant 1.000000e+00 : f32
    %355 = vector.broadcast %cst_132 : f32 to vector<2x8x1xf32>
    %356 = arith.subf %355, %354 : vector<2x8x1xf32>
    %cst_133 = arith.constant 1.000000e+09 : f32
    %357 = vector.broadcast %cst_133 : f32 to vector<2x8x1xf32>
    %358 = arith.mulf %356, %357 : vector<2x8x1xf32>
    %359 = vector.extract_strided_slice %353 {offsets = [0, 0, 0], sizes = [2, 8, 16], strides = [1, 1, 1]} : vector<2x32x16xf32> to vector<2x8x16xf32>
    %360 = vector.broadcast %358 : vector<2x8x1xf32> to vector<2x8x16xf32>
    %361 = arith.addf %359, %360 : vector<2x8x16xf32>
    %362 = vector.extract_strided_slice %353 {offsets = [0, 8, 0], sizes = [2, 8, 16], strides = [1, 1, 1]} : vector<2x32x16xf32> to vector<2x8x16xf32>
    %363 = vector.broadcast %358 : vector<2x8x1xf32> to vector<2x8x16xf32>
    %364 = arith.addf %362, %363 : vector<2x8x16xf32>
    %365 = vector.extract_strided_slice %353 {offsets = [0, 16, 0], sizes = [2, 8, 16], strides = [1, 1, 1]} : vector<2x32x16xf32> to vector<2x8x16xf32>
    %366 = vector.extract_strided_slice %353 {offsets = [0, 24, 0], sizes = [2, 8, 16], strides = [1, 1, 1]} : vector<2x32x16xf32> to vector<2x8x16xf32>
    %367 = tpu.concatenate %361, %364, %365, %366 in 2 : vector<2x8x16xf32>, vector<2x8x16xf32>, vector<2x8x16xf32>, vector<2x8x16xf32> -> vector<2x8x64xf32>
    %c0_134 = arith.constant 0 : index
    %c0_135 = arith.constant 0 : index
    %c0_136 = arith.constant 0 : index
    %368 = vector.load %arg11[%c0_134, %c0_135, %c0_136] : memref<2x8x64xf32, #tpu.memory_space<vmem>>, vector<2x8x64xf32>
    tpu.vector_store %arg11[%c0_134, %c0_135, %c0_136], %367 {strides = array<i32>} : memref<2x8x64xf32, #tpu.memory_space<vmem>>, vector<2x8x64xf32>,
    %c0_137 = arith.constant 0 : index
    %c0_138 = arith.constant 0 : index
    %c0_139 = arith.constant 0 : index
    %369 = vector.load %arg5[%c0_137, %c0_138, %c0_139] : memref<2x8x2xi32, #tpu.memory_space<vmem>>, vector<2x8x2xi32>
    %370 = vector.shape_cast %369 : vector<2x8x2xi32> to vector<16x2xi32>
    %371 = vector.extract_strided_slice %370 {offsets = [0, 0], sizes = [16, 1], strides = [1, 1]} : vector<16x2xi32> to vector<16x1xi32>
    %372 = tpu.iota {dimensions = array<i32: 1>} : vector<16x64xi32>
    %373 = vector.broadcast %371 : vector<16x1xi32> to vector<16x64xi32>
    %374 = arith.cmpi eq, %372, %373 : vector<16x64xi32>
    %cst_140 = arith.constant 0.000000e+00 : f32
    %375 = vector.broadcast %cst_140 : f32 to vector<16x64xf32>
    %376 = arith.select %374, %279, %375 : vector<16x64xi1>, vector<16x64xf32>
    %cst_141 = arith.constant dense<0.000000e+00> : vector<16xf32>
    %377 = vector.multi_reduction <add>, %376, %cst_141 [1] : vector<16x64xf32> to vector<16xf32>
    %378 = vector.shape_cast %377 : vector<16xf32> to vector<16x1xf32>
    %c0_i32 = arith.constant 0 : i32
    %379 = vector.broadcast %c0_i32 : i32 to vector<16x1xi32>
    %380 = arith.cmpi ne, %371, %379 : vector<16x1xi32>
    %381 = arith.extui %380 : vector<16x1xi1> to vector<16x1xi32>
    %382 = arith.sitofp %381 : vector<16x1xi32> to vector<16x1xf32>
    %cst_142 = arith.constant dense<0xFF800000> : vector<16xf32>
    %383 = vector.multi_reduction <maximumf>, %279, %cst_142 [1] : vector<16x64xf32> to vector<16xf32>
    %384 = vector.shape_cast %383 : vector<16xf32> to vector<16x1xf32>
    %385 = vector.broadcast %384 : vector<16x1xf32> to vector<16x64xf32>
    %386 = arith.subf %279, %385 : vector<16x64xf32>
    %387 = math.exp %386 : vector<16x64xf32>
    %cst_143 = arith.constant dense<0.000000e+00> : vector<16xf32>
    %388 = vector.multi_reduction <add>, %387, %cst_143 [1] : vector<16x64xf32> to vector<16xf32>
    %389 = vector.shape_cast %388 : vector<16xf32> to vector<16x1xf32>
    %390 = math.log %389 : vector<16x1xf32>
    %391 = arith.addf %384, %390 : vector<16x1xf32>
    %392 = arith.subf %391, %378 : vector<16x1xf32>
    %393 = arith.mulf %392, %382 : vector<16x1xf32>
    %394 = vector.shape_cast %393 : vector<16x1xf32> to vector<1x16x1xf32>
    %cst_144 = arith.constant dense<0.000000e+00> : vector<1xf32>
    %395 = vector.multi_reduction <add>, %394, %cst_144 [1, 2] : vector<1x16x1xf32> to vector<1xf32>
    %396 = vector.shape_cast %395 : vector<1xf32> to vector<1x1x1xf32>
    %397 = vector.extract %396[0, 0, 0] : f32 from vector<1x1x1xf32>
    %398 = vector.extract_strided_slice %370 {offsets = [0, 1], sizes = [16, 1], strides = [1, 1]} : vector<16x2xi32> to vector<16x1xi32>
    %399 = tpu.iota {dimensions = array<i32: 1>} : vector<16x16xi32>
    %400 = vector.broadcast %398 : vector<16x1xi32> to vector<16x16xi32>
    %401 = arith.cmpi eq, %399, %400 : vector<16x16xi32>
    %cst_145 = arith.constant 0.000000e+00 : f32
    %402 = vector.broadcast %cst_145 : f32 to vector<16x16xf32>
    %403 = arith.select %401, %234, %402 : vector<16x16xi1>, vector<16x16xf32>
    %cst_146 = arith.constant dense<0.000000e+00> : vector<16xf32>
    %404 = vector.multi_reduction <add>, %403, %cst_146 [1] : vector<16x16xf32> to vector<16xf32>
    %405 = vector.shape_cast %404 : vector<16xf32> to vector<16x1xf32>
    %c-1_i32 = arith.constant -1 : i32
    %406 = vector.broadcast %c-1_i32 : i32 to vector<16x1xi32>
    %407 = arith.cmpi ne, %398, %406 : vector<16x1xi32>
    %408 = arith.extui %407 : vector<16x1xi1> to vector<16x1xi32>
    %409 = arith.sitofp %408 : vector<16x1xi32> to vector<16x1xf32>
    %cst_147 = arith.constant dense<0xFF800000> : vector<16xf32>
    %410 = vector.multi_reduction <maximumf>, %234, %cst_147 [1] : vector<16x16xf32> to vector<16xf32>
    %411 = vector.shape_cast %410 : vector<16xf32> to vector<16x1xf32>
    %412 = vector.broadcast %411 : vector<16x1xf32> to vector<16x16xf32>
    %413 = arith.subf %234, %412 : vector<16x16xf32>
    %414 = math.exp %413 : vector<16x16xf32>
    %cst_148 = arith.constant dense<0.000000e+00> : vector<16xf32>
    %415 = vector.multi_reduction <add>, %414, %cst_148 [1] : vector<16x16xf32> to vector<16xf32>
    %416 = vector.shape_cast %415 : vector<16xf32> to vector<16x1xf32>
    %417 = math.log %416 : vector<16x1xf32>
    %418 = arith.addf %411, %417 : vector<16x1xf32>
    %419 = arith.subf %418, %405 : vector<16x1xf32>
    %420 = arith.mulf %419, %409 : vector<16x1xf32>
    %421 = vector.shape_cast %420 : vector<16x1xf32> to vector<1x16x1xf32>
    %cst_149 = arith.constant dense<0.000000e+00> : vector<1xf32>
    %422 = vector.multi_reduction <add>, %421, %cst_149 [1, 2] : vector<1x16x1xf32> to vector<1xf32>
    %423 = vector.shape_cast %422 : vector<1xf32> to vector<1x1x1xf32>
    %424 = vector.extract %423[0, 0, 0] : f32 from vector<1x1x1xf32>
    %c0_150 = arith.constant 0 : index
    %c0_151 = arith.constant 0 : index
    %c0_152 = arith.constant 0 : index
    %425 = vector.load %arg6[%c0_150, %c0_151, %c0_152] : memref<2x32x1xi32, #tpu.memory_space<vmem>>, vector<2x32x1xi32>
    %426 = tpu.iota {dimensions = array<i32: 2>} : vector<2x32x16xi32>
    %427 = vector.broadcast %425 : vector<2x32x1xi32> to vector<2x32x16xi32>
    %428 = arith.cmpi eq, %426, %427 : vector<2x32x16xi32>
    %cst_153 = arith.constant 0.000000e+00 : f32
    %429 = vector.broadcast %cst_153 : f32 to vector<2x32x16xf32>
    %430 = arith.select %428, %353, %429 : vector<2x32x16xi1>, vector<2x32x16xf32>
    %cst_154 = arith.constant dense<0.000000e+00> : vector<2x32xf32>
    %431 = vector.multi_reduction <add>, %430, %cst_154 [2] : vector<2x32x16xf32> to vector<2x32xf32>
    %432 = vector.shape_cast %431 : vector<2x32xf32> to vector<2x32x1xf32>
    %c-1_i32_155 = arith.constant -1 : i32
    %433 = vector.broadcast %c-1_i32_155 : i32 to vector<2x32x1xi32>
    %434 = arith.cmpi ne, %425, %433 : vector<2x32x1xi32>
    %435 = arith.extui %434 : vector<2x32x1xi1> to vector<2x32x1xi32>
    %436 = arith.sitofp %435 : vector<2x32x1xi32> to vector<2x32x1xf32>
    %cst_156 = arith.constant dense<0xFF800000> : vector<2x32xf32>
    %437 = vector.multi_reduction <maximumf>, %353, %cst_156 [2] : vector<2x32x16xf32> to vector<2x32xf32>
    %438 = vector.shape_cast %437 : vector<2x32xf32> to vector<2x32x1xf32>
    %439 = vector.broadcast %438 : vector<2x32x1xf32> to vector<2x32x16xf32>
    %440 = arith.subf %353, %439 : vector<2x32x16xf32>
    %441 = math.exp %440 : vector<2x32x16xf32>
    %cst_157 = arith.constant dense<0.000000e+00> : vector<2x32xf32>
    %442 = vector.multi_reduction <add>, %441, %cst_157 [2] : vector<2x32x16xf32> to vector<2x32xf32>
    %443 = vector.shape_cast %442 : vector<2x32xf32> to vector<2x32x1xf32>
    %444 = math.log %443 : vector<2x32x1xf32>
    %445 = arith.addf %438, %444 : vector<2x32x1xf32>
    %446 = arith.subf %445, %432 : vector<2x32x1xf32>
    %447 = arith.mulf %446, %436 : vector<2x32x1xf32>
    %448 = vector.extract_strided_slice %447 {offsets = [0, 0, 0], sizes = [2, 8, 1], strides = [1, 1, 1]} : vector<2x32x1xf32> to vector<2x8x1xf32>
    %449 = vector.shape_cast %448 : vector<2x8x1xf32> to vector<1x2x8x1xf32>
    %cst_158 = arith.constant dense<0.000000e+00> : vector<1xf32>
    %450 = vector.multi_reduction <add>, %449, %cst_158 [1, 2, 3] : vector<1x2x8x1xf32> to vector<1xf32>
    %451 = vector.shape_cast %450 : vector<1xf32> to vector<1x1x1x1xf32>
    %452 = vector.extract %451[0, 0, 0, 0] : f32 from vector<1x1x1x1xf32>
    %453 = vector.extract_strided_slice %447 {offsets = [0, 8, 0], sizes = [2, 8, 1], strides = [1, 1, 1]} : vector<2x32x1xf32> to vector<2x8x1xf32>
    %454 = vector.shape_cast %453 : vector<2x8x1xf32> to vector<1x2x8x1xf32>
    %cst_159 = arith.constant dense<0.000000e+00> : vector<1xf32>
    %455 = vector.multi_reduction <add>, %454, %cst_159 [1, 2, 3] : vector<1x2x8x1xf32> to vector<1xf32>
    %456 = vector.shape_cast %455 : vector<1xf32> to vector<1x1x1x1xf32>
    %457 = vector.extract %456[0, 0, 0, 0] : f32 from vector<1x1x1x1xf32>
    %458 = vector.extract_strided_slice %447 {offsets = [0, 16, 0], sizes = [2, 8, 1], strides = [1, 1, 1]} : vector<2x32x1xf32> to vector<2x8x1xf32>
    %459 = vector.shape_cast %458 : vector<2x8x1xf32> to vector<1x2x8x1xf32>
    %cst_160 = arith.constant dense<0.000000e+00> : vector<1xf32>
    %460 = vector.multi_reduction <add>, %459, %cst_160 [1, 2, 3] : vector<1x2x8x1xf32> to vector<1xf32>
    %461 = vector.shape_cast %460 : vector<1xf32> to vector<1x1x1x1xf32>
    %462 = vector.extract %461[0, 0, 0, 0] : f32 from vector<1x1x1x1xf32>
    %463 = vector.extract_strided_slice %447 {offsets = [0, 24, 0], sizes = [2, 8, 1], strides = [1, 1, 1]} : vector<2x32x1xf32> to vector<2x8x1xf32>
    %464 = vector.shape_cast %463 : vector<2x8x1xf32> to vector<1x2x8x1xf32>
    %cst_161 = arith.constant dense<0.000000e+00> : vector<1xf32>
    %465 = vector.multi_reduction <add>, %464, %cst_161 [1, 2, 3] : vector<1x2x8x1xf32> to vector<1xf32>
    %466 = vector.shape_cast %465 : vector<1xf32> to vector<1x1x1x1xf32>
    %467 = vector.extract %466[0, 0, 0, 0] : f32 from vector<1x1x1x1xf32>
    %468 = vector.broadcast %397 : f32 to vector<1x1xf32>
    %469 = vector.broadcast %452 : f32 to vector<1x1xf32>
    %470 = vector.broadcast %457 : f32 to vector<1x1xf32>
    %471 = vector.broadcast %462 : f32 to vector<1x1xf32>
    %472 = vector.broadcast %467 : f32 to vector<1x1xf32>
    %473 = vector.broadcast %424 : f32 to vector<1x1xf32>
    %cst_162 = arith.constant 0.000000e+00 : f32
    %474 = vector.broadcast %cst_162 : f32 to vector<1x2xf32>
    %475 = tpu.concatenate %468, %469, %470, %471, %472, %473, %474 in 1 : vector<1x1xf32>, vector<1x1xf32>, vector<1x1xf32>, vector<1x1xf32>, vector<1x1xf32>, vector<1x1xf32>, vector<1x2xf32> -> vector<1x8xf32>
    %c0_163 = arith.constant 0 : index
    %c0_164 = arith.constant 0 : index
    %476 = vector.load %arg12[%c0_163, %c0_164] : memref<1x8xf32, #tpu.memory_space<vmem>>, vector<1x8xf32>
    tpu.vector_store %arg12[%c0_163, %c0_164], %475 {strides = array<i32>} : memref<1x8xf32, #tpu.memory_space<vmem>>, vector<1x8xf32>,
    return
  }
}

</mosaic_0001>

<llo_original>
// kernel: decoder_with_loss_forward.1
$region0: #{decoder_with_loss_forward.1}
  #allocation0 [shape = 'u32[]', space=smem, size = 0x4, offset = 0x4, fixed_abs, tag = 'smem constant byte address 0x4 - core index']
  #allocation1 [shape = 'u32[144,128]{1,0:T(1,128)}', space=vmem, size = 0x12000, scoped, tag = 'internal scratch']
  #allocation2 [shape = 'f32[2,32,32]{2,1,0:T(8,128)}', space=vmem, size = 0x8000, scoped, tag = 'scratch operand']
  %s0 = inlined_call_operand.vmem [shape: f32[2,8,32], index: 0, kind: input, shape index: {}]
  %s1 = inlined_call_operand.vmem [shape: f32[2,1,8], index: 1, kind: input, shape index: {}]
  %s2 = inlined_call_operand.vmem [shape: bf16[2,16,32], index: 2, kind: input, shape index: {}]
  %s3 = inlined_call_operand.vmem [shape: f32[2,1,16], index: 3, kind: input, shape index: {}]
  %s4 = inlined_call_operand.vmem [shape: f32[2,8,1], index: 4, kind: input, shape index: {}]
  %s5 = inlined_call_operand.vmem [shape: s32[2,8,2], index: 5, kind: input, shape index: {}]
  %s6 = inlined_call_operand.vmem [shape: s32[2,32,1], index: 6, kind: input, shape index: {}]
  %s7 = inlined_call_operand.vmem [shape: bf16[32,752], index: 7, kind: input, shape index: {}]
  %s8 = inlined_call_operand.vmem [shape: bf16[64,32], index: 8, kind: input, shape index: {}]
  %s9 = inlined_call_operand.vmem [shape: f32[1,1104], index: 9, kind: input, shape index: {}]
  %s10 = inlined_call_operand.hbm [shape: f32[2,8,64], index: 10, kind: output, shape index: {0}]
  %s11 = inlined_call_operand.vmem [shape: f32[2,8,64], index: 11, kind: output, shape index: {1}]
  %s12 = inlined_call_operand.vmem [shape: f32[1,8], index: 12, kind: output, shape index: {2}]
  %13 = xla_tuple %s10, %s11, %s12
  %s14 = sld [smem:[#allocation0]]
  $region66: #{decoder_with_loss_forward.1} parent=0
    _
  %s16 = ssub.s32 1, %s14
  %s17 = scalar_select 0, %s16, %s14
  $region1: #{decoder_with_loss_forward.1} parent=0
    #allocation3 [shape = 'u8[8192]{0}', space=vmem, size = 0x2000, scoped, tag = 'output window, operand 0, single buffered']
    #allocation4 [shape = 's32[1]{0}', space=sflag, size = 0x4, scoped, tag = 'scoped memory for decoder_with_loss_forward.1']
    %18 = vsyncpa [#allocation4], 0
    // Predicated region
    $region2: #{decoder_with_loss_forward.1} parent=1 // pred_check
      _
    $region3: #{decoder_with_loss_forward.1} parent=1 // pred_check_branch
      %20 = sbr.rel (0) target = $region5
    $region4: #{decoder_with_loss_forward.1} parent=1 // pred_region
      _
    $region5: #{decoder_with_loss_forward.1} parent=1 // pred_fallthru
      _
    // Predicated region
    $region6: #{decoder_with_loss_forward.1} parent=1 // pred_check
      _
    $region7: #{decoder_with_loss_forward.1} parent=1 // pred_check_branch
      %22 = sbr.rel (0) target = $region9
    $region8: #{decoder_with_loss_forward.1} parent=1 // pred_region
      _
    $region9: #{decoder_with_loss_forward.1} parent=1 // pred_fallthru
      _
    // Predicated region
    $region10: #{decoder_with_loss_forward.1} parent=1 // pred_check
      _
    $region11: #{decoder_with_loss_forward.1} parent=1 // pred_check_branch
      %24 = sbr.rel (0) target = $region13
    $region12: #{decoder_with_loss_forward.1} parent=1 // pred_region
      _
    $region13: #{decoder_with_loss_forward.1} parent=1 // pred_fallthru
      _
    // Predicated region
    $region14: #{decoder_with_loss_forward.1} parent=1 // pred_check
      _
    $region15: #{decoder_with_loss_forward.1} parent=1 // pred_check_branch
      %26 = sbr.rel (0) target = $region17
    $region16: #{decoder_with_loss_forward.1} parent=1 // pred_region
      _
    $region17: #{decoder_with_loss_forward.1} parent=1 // pred_fallthru
      _
    // Predicated region
    $region18: #{decoder_with_loss_forward.1} parent=1 // pred_check
      _
    $region19: #{decoder_with_loss_forward.1} parent=1 // pred_check_branch
      %28 = sbr.rel (0) target = $region21
    $region20: #{decoder_with_loss_forward.1} parent=1 // pred_region
      _
    $region21: #{decoder_with_loss_forward.1} parent=1 // pred_fallthru
      _
    // Predicated region
    $region22: #{decoder_with_loss_forward.1} parent=1 // pred_check
      _
    $region23: #{decoder_with_loss_forward.1} parent=1 // pred_check_branch
      %30 = sbr.rel (0) target = $region25
    $region24: #{decoder_with_loss_forward.1} parent=1 // pred_region
      _
    $region25: #{decoder_with_loss_forward.1} parent=1 // pred_fallthru
      _
    // Predicated region
    $region26: #{decoder_with_loss_forward.1} parent=1 // pred_check
      _
    $region27: #{decoder_with_loss_forward.1} parent=1 // pred_check_branch
      %32 = sbr.rel (0) target = $region29
    $region28: #{decoder_with_loss_forward.1} parent=1 // pred_region
      _
    $region29: #{decoder_with_loss_forward.1} parent=1 // pred_fallthru
      _
    // Predicated region
    $region30: #{decoder_with_loss_forward.1} parent=1 // pred_check
      _
    $region31: #{decoder_with_loss_forward.1} parent=1 // pred_check_branch
      %34 = sbr.rel (0) target = $region33
    $region32: #{decoder_with_loss_forward.1} parent=1 // pred_region
      _
    $region33: #{decoder_with_loss_forward.1} parent=1 // pred_fallthru
      _
    // Predicated region
    $region34: #{decoder_with_loss_forward.1} parent=1 // pred_check
      _
    $region35: #{decoder_with_loss_forward.1} parent=1 // pred_check_branch
      %36 = sbr.rel (0) target = $region37
    $region36: #{decoder_with_loss_forward.1} parent=1 // pred_region
      _
    $region37: #{decoder_with_loss_forward.1} parent=1 // pred_fallthru
      _
    // Predicated region
    $region38: #{decoder_with_loss_forward.1} parent=1 // pred_check
      _
    $region39: #{decoder_with_loss_forward.1} parent=1 // pred_check_branch
      %38 = sbr.rel (0) target = $region41
    $region40: #{decoder_with_loss_forward.1} parent=1 // pred_region
      _
    $region41: #{decoder_with_loss_forward.1} parent=1 // pred_fallthru
      _
    %v40 = vld [vmem:[%s9 + $0x6] sm:$0x1]
    %v41 = vld [vmem:[%s9 + $0x7] sm:$0x1]
    %v42 = vld [vmem:[%s0] sm:$0xff]
    %v43 = vld [vmem:[%s0 + $0x8] sm:$0xff]
    %vm44 = vcmask 261120
    %v45 = vsel %vm44, %v42, 0.0
    %46 = vadd.xlane.f32.xlu0 %v45
    %v47 = vpop.xlane.xlu0 %46
    %v48 = vsel %vm44, %v43, 0.0
    %49 = vadd.xlane.f32.xlu0 %v48
    %v50 = vpop.xlane.xlu0 %49
    %v51 = vrcp.pop 32.0
    %v52 = vmul.f32 %v47, %v51
    %v53 = vmul.f32 %v50, %v51
    %v54 = vsub.f32 %v42, %v52
    %v55 = vsub.f32 %v43, %v53
    %v56 = vmul.f32 %v54, %v54
    %v57 = vmul.f32 %v55, %v55
    %v58 = vsel %vm44, %v56, 0.0
    %59 = vadd.xlane.f32.xlu0 %v58
    %v60 = vpop.xlane.xlu0 %59
    %v61 = vsel %vm44, %v57, 0.0
    %62 = vadd.xlane.f32.xlu0 %v61
    %v63 = vpop.xlane.xlu0 %62
    %v64 = vmul.f32 %v60, %v51
    %v65 = vmul.f32 %v63, %v51
    %v66 = vadd.f32 %v64, 1e-12
    %v67 = vadd.f32 %v65, 1e-12
    %v68 = vrsqrt.pop %v66
    %v69 = vrsqrt.pop %v67
    %v70 = vmul.f32 %v54, %v68
    %v71 = vmul.f32 %v55, %v69
    %v73 = vlaneseq
    %v74 = vshrl.u32 %v73, 7
    %v75 = vsub.s32 0, %v74
    %v76 = vrot.slane %v40, %v75
    %77 = vrot.lane.b32.xlu0 %v76, 112
    %v78 = vpop.permute.xlu0 %77
    %v80 = vmul.f32 %v70, %v78
    %v81 = vmul.f32 %v71, %v78
    %v83 = vlaneseq
    %v84 = vshrl.u32 %v83, 7
    %v85 = vsub.s32 0, %v84
    %v86 = vrot.slane %v41, %v85
    %87 = vrot.lane.b32.xlu0 %v86, 112
    %v88 = vpop.permute.xlu0 %87
    %v90 = vadd.f32 %v80, %v88
    %v91 = vadd.f32 %v81, %v88
    %v92 = vld [vmem:[%s7] sm:$0xf]
    %v93 = vld [vmem:[%s7 + $0x18] sm:$0xf]
    %v94 = vld [vmem:[%s7 + $0x30] sm:$0xf]
    %v95 = vld [vmem:[%s7 + $0x48] sm:$0xf]
    %v96 = vpack.c.bf16 %v91, %v90
    %v97 = vld [vmem:[%s9] sm:$0x1]
    %v99 = vlaneseq
    %v100 = vshrl.u32 %v99, 7
    %v101 = vsub.s32 0, %v100
    %v102 = vrot.slane %v97, %v101
    %v108 = vunpack.c.l.b16 %v92
    %v109 = vunpack.c.l.b16 %v93
    %v110 = vunpack.c.l.b16 %v94
    %v111 = vunpack.c.l.b16 %v95
    %v112 = vpack.c.b16 %v109, %v108
    %v113 = vpack.c.b16 %v111, %v110
    %v117 = vsel %vm44, %v96, 0
    %119 = vmatprep.subr.bf16.mxu0 0
    %120 = vmatpush1.bf16.msra.mxu0 0
    %121 = vmatprep.subr.bf16.mxu0 0
    %122 = vmatpush1.bf16.msra.mxu0 0
    %123 = vmatprep.subr.bf16.mxu0 0
    %124 = vmatpush1.bf16.msra.mxu0 0
    %125 = vmatprep.subr.bf16.mxu0 0
    %126 = vmatpush1.bf16.msra.mxu0 0
    %127 = vmatprep.subr.bf16.mxu0 0
    %128 = vmatpush1.bf16.msra.mxu0 0
    %129 = vmatprep.subr.bf16.mxu0 0
    %130 = vmatpush1.bf16.msra.mxu0 0
    %131 = vmatprep.subr.bf16.mxu0 0
    %132 = vmatpush1.bf16.msra.mxu0 %v113
    %133 = vmatprep.subr.bf16.mxu0 0
    %134 = vmatpush1.bf16.msra.mxu0 %v112
    %135 = vmatprep.subr.bf16.mxu0 0
    %136 = vmatpush2.bf16.msra.mxu0 0
    %137 = vmatprep.subr.bf16.mxu0 0
    %138 = vmatpush2.bf16.msra.mxu0 0
    %139 = vmatprep.subr.bf16.mxu0 0
    %140 = vmatpush2.bf16.msra.mxu0 0
    %141 = vmatprep.subr.bf16.mxu0 0
    %142 = vmatpush2.bf16.msra.mxu0 0
    %143 = vmatprep.subr.bf16.mxu0 0
    %144 = vmatpush2.bf16.msra.mxu0 0
    %145 = vmatprep.subr.bf16.mxu0 0
    %146 = vmatpush2.bf16.msra.mxu0 0
    %147 = vmatprep.subr.bf16.mxu0 0
    %148 = vmatpush2.bf16.msra.mxu0 0
    %149 = vmatprep.subr.bf16.mxu0 0
    %150 = vmatpush2.bf16.msra.mxu0 0
    %151 = vmatprep.mubr.bf16.mxu0 0
    %152 = vmatmul.mubr.bf16.gmra.mxu0 %v117
    %v153 = vpop.f32.mrf.mxu0
    %v154 = vadd.f32 %v102, %v153
    %v155 = vpop.f32.mrf.mxu0
    %v156 = vpop.f32.mrf.mxu0
    %v157 = vadd.f32 %v102, %v156
    %v158 = vpop.f32.mrf.mxu0
    %159 = vdwg.mxu0
    %v160 = vpack.c.bf16 %v154, %v154
    %v161 = vpack.c.bf16 %v157, %v157
    %163 = vrot.lane.b32.xlu0 %v160, 96
    %v164 = vpop.permute.xlu0 %163
    %v166 = vsel %vm44, %v160, 0
    %v169 = vsel %vm44, %v164, 0
    %171 = vmatprep.subr.bf16.mxu0 0
    %172 = vmatpush1.bf16.xpose.msra.mxu0 0
    %173 = vmatprep.subr.bf16.mxu0 0
    %174 = vmatpush1.bf16.xpose.msra.mxu0 0
    %175 = vmatprep.subr.bf16.mxu0 0
    %176 = vmatpush1.bf16.xpose.msra.mxu0 0
    %177 = vmatprep.subr.bf16.mxu0 0
    %178 = vmatpush1.bf16.xpose.msra.mxu0 0
    %179 = vmatprep.subr.bf16.mxu0 0
    %180 = vmatpush1.bf16.xpose.msra.mxu0 0
    %181 = vmatprep.subr.bf16.mxu0 0
    %182 = vmatpush1.bf16.xpose.msra.mxu0 0
    %183 = vmatprep.subr.bf16.mxu0 0
    %184 = vmatpush1.bf16.xpose.msra.mxu0 0
    %185 = vmatprep.subr.bf16.mxu0 0
    %186 = vmatpush1.bf16.xpose.msra.mxu0 %v169
    %187 = vmatprep.subr.bf16.mxu0 0
    %188 = vmatpush2.bf16.xpose.msra.mxu0 0
    %189 = vmatprep.subr.bf16.mxu0 0
    %190 = vmatpush2.bf16.xpose.msra.mxu0 0
    %191 = vmatprep.subr.bf16.mxu0 0
    %192 = vmatpush2.bf16.xpose.msra.mxu0 0
    %193 = vmatprep.subr.bf16.mxu0 0
    %194 = vmatpush2.bf16.xpose.msra.mxu0 0
    %195 = vmatprep.subr.bf16.mxu0 0
    %196 = vmatpush2.bf16.xpose.msra.mxu0 0
    %197 = vmatprep.subr.bf16.mxu0 0
    %198 = vmatpush2.bf16.xpose.msra.mxu0 0
    %199 = vmatprep.subr.bf16.mxu0 0
    %200 = vmatpush2.bf16.xpose.msra.mxu0 0
    %201 = vmatprep.subr.bf16.mxu0 0
    %202 = vmatpush2.bf16.xpose.msra.mxu0 0
    %203 = vmatprep.mubr.bf16.mxu0 0
    %204 = vmatmul.mubr.bf16.gmra.mxu0 %v166
    %v205 = vpop.f32.mrf.mxu0
    %v206 = vadd.f32 0.0, %v205
    %v207 = vpop.f32.mrf.mxu0
    %v208 = vpop.f32.mrf.mxu0
    %v209 = vpop.f32.mrf.mxu0
    %210 = vdwg.mxu0
    %212 = vrot.lane.b32.xlu0 %v161, 96
    %v213 = vpop.permute.xlu0 %212
    %v215 = vsel %vm44, %v161, 0
    %v218 = vsel %vm44, %v213, 0
    %220 = vmatprep.subr.bf16.mxu0 0
    %221 = vmatpush1.bf16.xpose.msra.mxu0 0
    %222 = vmatprep.subr.bf16.mxu0 0
    %223 = vmatpush1.bf16.xpose.msra.mxu0 0
    %224 = vmatprep.subr.bf16.mxu0 0
    %225 = vmatpush1.bf16.xpose.msra.mxu0 0
    %226 = vmatprep.subr.bf16.mxu0 0
    %227 = vmatpush1.bf16.xpose.msra.mxu0 0
    %228 = vmatprep.subr.bf16.mxu0 0
    %229 = vmatpush1.bf16.xpose.msra.mxu0 0
    %230 = vmatprep.subr.bf16.mxu0 0
    %231 = vmatpush1.bf16.xpose.msra.mxu0 0
    %232 = vmatprep.subr.bf16.mxu0 0
    %233 = vmatpush1.bf16.xpose.msra.mxu0 0
    %234 = vmatprep.subr.bf16.mxu0 0
    %235 = vmatpush1.bf16.xpose.msra.mxu0 %v218
    %236 = vmatprep.subr.bf16.mxu0 0
    %237 = vmatpush2.bf16.xpose.msra.mxu0 0
    %238 = vmatprep.subr.bf16.mxu0 0
    %239 = vmatpush2.bf16.xpose.msra.mxu0 0
    %240 = vmatprep.subr.bf16.mxu0 0
    %241 = vmatpush2.bf16.xpose.msra.mxu0 0
    %242 = vmatprep.subr.bf16.mxu0 0
    %243 = vmatpush2.bf16.xpose.msra.mxu0 0
    %244 = vmatprep.subr.bf16.mxu0 0
    %245 = vmatpush2.bf16.xpose.msra.mxu0 0
    %246 = vmatprep.subr.bf16.mxu0 0
    %247 = vmatpush2.bf16.xpose.msra.mxu0 0
    %248 = vmatprep.subr.bf16.mxu0 0
    %249 = vmatpush2.bf16.xpose.msra.mxu0 0
    %250 = vmatprep.subr.bf16.mxu0 0
    %251 = vmatpush2.bf16.xpose.msra.mxu0 0
    %252 = vmatprep.mubr.bf16.mxu0 0
    %253 = vmatmul.mubr.bf16.gmra.mxu0 %v215
    %v254 = vpop.f32.mrf.mxu0
    %v255 = vadd.f32 0.0, %v254
    %v256 = vpop.f32.mrf.mxu0
    %v257 = vpop.f32.mrf.mxu0
    %v258 = vpop.f32.mrf.mxu0
    %259 = vdwg.mxu0
    %v260 = vmul.f32 %v206, 0.17677669
    %v261 = vmul.f32 %v255, 0.17677669
    %v262 = vlaneseq
    %v263 = vshrl.u32 %v262, 7
    %v264 = vlaneseq
    %v265 = vand.u32 %v264, 127
    %vm266 = vcmp.ge.s32.totalorder %v263, %v265
    %v267 = vsel %vm266, 1, 0
    %v268 = vcvt.s32.f32 %v267
    %v269 = vld [vmem:[%s1] sm:$0x1]
    %v270 = vld [vmem:[%s1 + $0x1] sm:$0x1]
    %v273 = vlaneseq
    %v274 = vshrl.u32 %v273, 7
    %v275 = vsub.s32 0, %v274
    %v276 = vrot.slane %v269, %v275
    %v277 = vlaneseq
    %v278 = vshrl.u32 %v277, 7
    %v279 = vsub.s32 0, %v278
    %v280 = vrot.slane %v270, %v279
    %v283 = vmul.f32 %v268, %v276
    %v284 = vmul.f32 %v268, %v280
    %v285 = vsub.f32 1.0, %v283
    %v286 = vsub.f32 1.0, %v284
    %v287 = vmul.f32 %v285, -1e+09
    %v288 = vmul.f32 %v286, -1e+09
    %v289 = vadd.f32 %v260, %v287
    %v290 = vadd.f32 %v261, %v288
    %vm291 = vcmask 64512
    %v292 = vsel %vm291, %v289, -inf
    %293 = vmax.xlane.f32.xlu0 %v292
    %v294 = vpop.xlane.xlu0 %293
    %v295 = vsel %vm291, %v290, -inf
    %296 = vmax.xlane.f32.xlu0 %v295
    %v297 = vpop.xlane.xlu0 %296
    %v298 = vsub.f32 %v289, %v294
    %v299 = vsub.f32 %v290, %v297
    %v300 = vmul.f32 %v298, 1.442695
    %v301 = vpow.pop %v300
    %v302 = vmul.f32 %v299, 1.442695
    %v303 = vpow.pop %v302
    %v304 = vsel %vm291, %v301, 0.0
    %305 = vadd.xlane.f32.xlu0 %v304
    %v306 = vpop.xlane.xlu0 %305
    %v307 = vsel %vm291, %v303, 0.0
    %308 = vadd.xlane.f32.xlu0 %v307
    %v309 = vpop.xlane.xlu0 %308
    %v310 = vrcp.pop %v306
    %v311 = vrcp.pop %v309
    %v312 = vmul.f32 %v301, %v310
    %v313 = vmul.f32 %v303, %v311
    %v314 = vpack.c.bf16 %v312, %v312
    %v315 = vpack.c.bf16 %v313, %v313
    %316 = vrot.lane.b32.xlu0 %v160, 64
    %v317 = vpop.permute.xlu0 %316
    %v319 = vsel %vm291, %v314, 0
    %vm321 = vcmask 1043456
    %v323 = vsel %vm321, %v317, 0
    %325 = vmatprep.subr.bf16.mxu0 0
    %326 = vmatpush1.bf16.msra.mxu0 0
    %327 = vmatprep.subr.bf16.mxu0 0
    %328 = vmatpush1.bf16.msra.mxu0 0
    %329 = vmatprep.subr.bf16.mxu0 0
    %330 = vmatpush1.bf16.msra.mxu0 0
    %331 = vmatprep.subr.bf16.mxu0 0
    %332 = vmatpush1.bf16.msra.mxu0 0
    %333 = vmatprep.subr.bf16.mxu0 0
    %334 = vmatpush1.bf16.msra.mxu0 0
    %335 = vmatprep.subr.bf16.mxu0 0
    %336 = vmatpush1.bf16.msra.mxu0 0
    %337 = vmatprep.subr.bf16.mxu0 0
    %338 = vmatpush1.bf16.msra.mxu0 0
    %339 = vmatprep.subr.bf16.mxu0 0
    %340 = vmatpush1.bf16.msra.mxu0 %v323
    %341 = vmatprep.subr.bf16.mxu0 0
    %342 = vmatpush2.bf16.msra.mxu0 0
    %343 = vmatprep.subr.bf16.mxu0 0
    %344 = vmatpush2.bf16.msra.mxu0 0
    %345 = vmatprep.subr.bf16.mxu0 0
    %346 = vmatpush2.bf16.msra.mxu0 0
    %347 = vmatprep.subr.bf16.mxu0 0
    %348 = vmatpush2.bf16.msra.mxu0 0
    %349 = vmatprep.subr.bf16.mxu0 0
    %350 = vmatpush2.bf16.msra.mxu0 0
    %351 = vmatprep.subr.bf16.mxu0 0
    %352 = vmatpush2.bf16.msra.mxu0 0
    %353 = vmatprep.subr.bf16.mxu0 0
    %354 = vmatpush2.bf16.msra.mxu0 0
    %355 = vmatprep.subr.bf16.mxu0 0
    %356 = vmatpush2.bf16.msra.mxu0 0
    %357 = vmatprep.mubr.bf16.mxu0 0
    %358 = vmatmul.mubr.bf16.gmra.mxu0 %v319
    %v359 = vpop.f32.mrf.mxu0
    %v360 = vadd.f32 0.0, %v359
    %v361 = vpop.f32.mrf.mxu0
    %v362 = vpop.f32.mrf.mxu0
    %v363 = vpop.f32.mrf.mxu0
    %364 = vdwg.mxu0
    %365 = vrot.lane.b32.xlu0 %v161, 64
    %v366 = vpop.permute.xlu0 %365
    %v368 = vsel %vm291, %v315, 0
    %v371 = vsel %vm321, %v366, 0
    %373 = vmatprep.subr.bf16.mxu0 0
    %374 = vmatpush1.bf16.msra.mxu0 0
    %375 = vmatprep.subr.bf16.mxu0 0
    %376 = vmatpush1.bf16.msra.mxu0 0
    %377 = vmatprep.subr.bf16.mxu0 0
    %378 = vmatpush1.bf16.msra.mxu0 0
    %379 = vmatprep.subr.bf16.mxu0 0
    %380 = vmatpush1.bf16.msra.mxu0 0
    %381 = vmatprep.subr.bf16.mxu0 0
    %382 = vmatpush1.bf16.msra.mxu0 0
    %383 = vmatprep.subr.bf16.mxu0 0
    %384 = vmatpush1.bf16.msra.mxu0 0
    %385 = vmatprep.subr.bf16.mxu0 0
    %386 = vmatpush1.bf16.msra.mxu0 0
    %387 = vmatprep.subr.bf16.mxu0 0
    %388 = vmatpush1.bf16.msra.mxu0 %v371
    %389 = vmatprep.subr.bf16.mxu0 0
    %390 = vmatpush2.bf16.msra.mxu0 0
    %391 = vmatprep.subr.bf16.mxu0 0
    %392 = vmatpush2.bf16.msra.mxu0 0
    %393 = vmatprep.subr.bf16.mxu0 0
    %394 = vmatpush2.bf16.msra.mxu0 0
    %395 = vmatprep.subr.bf16.mxu0 0
    %396 = vmatpush2.bf16.msra.mxu0 0
    %397 = vmatprep.subr.bf16.mxu0 0
    %398 = vmatpush2.bf16.msra.mxu0 0
    %399 = vmatprep.subr.bf16.mxu0 0
    %400 = vmatpush2.bf16.msra.mxu0 0
    %401 = vmatprep.subr.bf16.mxu0 0
    %402 = vmatpush2.bf16.msra.mxu0 0
    %403 = vmatprep.subr.bf16.mxu0 0
    %404 = vmatpush2.bf16.msra.mxu0 0
    %405 = vmatprep.mubr.bf16.mxu0 0
    %406 = vmatmul.mubr.bf16.gmra.mxu0 %v368
    %v407 = vpop.f32.mrf.mxu0
    %v408 = vadd.f32 0.0, %v407
    %v409 = vpop.f32.mrf.mxu0
    %v410 = vpop.f32.mrf.mxu0
    %v411 = vpop.f32.mrf.mxu0
    %412 = vdwg.mxu0
    %v413 = vld [vmem:[%s9 + $0x6] sm:$0x1]
    %v414 = vld [vmem:[%s9 + $0x7] sm:$0x1]
    %v415 = vld [vmem:[%s7] sm:$0xf]
    %v416 = vld [vmem:[%s7 + $0x18] sm:$0xf]
    %v417 = vld [vmem:[%s7 + $0x30] sm:$0xf]
    %v418 = vld [vmem:[%s7 + $0x48] sm:$0xf]
    %v419 = vpack.c.bf16 %v408, %v360
    %v424 = vunpack.c.l.b16 %v415
    %v425 = vunpack.c.l.b16 %v416
    %v426 = vunpack.c.l.b16 %v417
    %v427 = vunpack.c.l.b16 %v418
    %v428 = vpack.c.b16 %v425, %v424
    %v429 = vpack.c.b16 %v427, %v426
    %430 = vrot.lane.b32.xlu0 %v428, 32
    %v431 = vpop.permute.xlu0 %430
    %432 = vrot.lane.b32.xlu0 %v429, 32
    %v433 = vpop.permute.xlu0 %432
    %v437 = vsel %vm44, %v419, 0
    %439 = vmatprep.subr.bf16.mxu0 0
    %440 = vmatpush1.bf16.msra.mxu0 0
    %441 = vmatprep.subr.bf16.mxu0 0
    %442 = vmatpush1.bf16.msra.mxu0 0
    %443 = vmatprep.subr.bf16.mxu0 0
    %444 = vmatpush1.bf16.msra.mxu0 0
    %445 = vmatprep.subr.bf16.mxu0 0
    %446 = vmatpush1.bf16.msra.mxu0 0
    %447 = vmatprep.subr.bf16.mxu0 0
    %448 = vmatpush1.bf16.msra.mxu0 0
    %449 = vmatprep.subr.bf16.mxu0 0
    %450 = vmatpush1.bf16.msra.mxu0 0
    %451 = vmatprep.subr.bf16.mxu0 0
    %452 = vmatpush1.bf16.msra.mxu0 %v433
    %453 = vmatprep.subr.bf16.mxu0 0
    %454 = vmatpush1.bf16.msra.mxu0 %v431
    %455 = vmatprep.subr.bf16.mxu0 0
    %456 = vmatpush2.bf16.msra.mxu0 0
    %457 = vmatprep.subr.bf16.mxu0 0
    %458 = vmatpush2.bf16.msra.mxu0 0
    %459 = vmatprep.subr.bf16.mxu0 0
    %460 = vmatpush2.bf16.msra.mxu0 0
    %461 = vmatprep.subr.bf16.mxu0 0
    %462 = vmatpush2.bf16.msra.mxu0 0
    %463 = vmatprep.subr.bf16.mxu0 0
    %464 = vmatpush2.bf16.msra.mxu0 0
    %465 = vmatprep.subr.bf16.mxu0 0
    %466 = vmatpush2.bf16.msra.mxu0 0
    %467 = vmatprep.subr.bf16.mxu0 0
    %468 = vmatpush2.bf16.msra.mxu0 0
    %469 = vmatprep.subr.bf16.mxu0 0
    %470 = vmatpush2.bf16.msra.mxu0 0
    %471 = vmatprep.mubr.bf16.mxu0 0
    %472 = vmatmul.mubr.bf16.gmra.mxu0 %v437
    %v473 = vpop.f32.mrf.mxu0
    %v474 = vadd.f32 0.0, %v473
    %v475 = vpop.f32.mrf.mxu0
    %v476 = vpop.f32.mrf.mxu0
    %v477 = vadd.f32 0.0, %v476
    %v478 = vpop.f32.mrf.mxu0
    %479 = vdwg.mxu0
    %v480 = vadd.f32 %v90, %v474
    %v481 = vadd.f32 %v91, %v477
    %v482 = vld [vmem:[%s9] sm:$0x1]
    %v484 = vlaneseq
    %v485 = vshrl.u32 %v484, 7
    %v486 = vsub.s32 0, %v485
    %v487 = vrot.slane %v482, %v486
    %488 = vrot.lane.b32.xlu0 %v487, 32
    %v489 = vpop.permute.xlu0 %488
    %v491 = vadd.f32 %v480, %v489
    %v492 = vadd.f32 %v481, %v489
    %v493 = vsel %vm44, %v491, 0.0
    %494 = vadd.xlane.f32.xlu0 %v493
    %v495 = vpop.xlane.xlu0 %494
    %v496 = vsel %vm44, %v492, 0.0
    %497 = vadd.xlane.f32.xlu0 %v496
    %v498 = vpop.xlane.xlu0 %497
    %v499 = vmul.f32 %v495, %v51
    %v500 = vmul.f32 %v498, %v51
    %v501 = vsub.f32 %v491, %v499
    %v502 = vsub.f32 %v492, %v500
    %v503 = vmul.f32 %v501, %v501
    %v504 = vmul.f32 %v502, %v502
    %v505 = vsel %vm44, %v503, 0.0
    %506 = vadd.xlane.f32.xlu0 %v505
    %v507 = vpop.xlane.xlu0 %506
    %v508 = vsel %vm44, %v504, 0.0
    %509 = vadd.xlane.f32.xlu0 %v508
    %v510 = vpop.xlane.xlu0 %509
    %v511 = vmul.f32 %v507, %v51
    %v512 = vmul.f32 %v510, %v51
    %v513 = vadd.f32 %v511, 1e-12
    %v514 = vadd.f32 %v512, 1e-12
    %v515 = vrsqrt.pop %v513
    %v516 = vrsqrt.pop %v514
    %v517 = vmul.f32 %v501, %v515
    %v518 = vmul.f32 %v502, %v516
    %v520 = vlaneseq
    %v521 = vshrl.u32 %v520, 7
    %v522 = vsub.s32 0, %v521
    %v523 = vrot.slane %v413, %v522
    %524 = vrot.lane.b32.xlu0 %v523, 80
    %v525 = vpop.permute.xlu0 %524
    %v527 = vmul.f32 %v517, %v525
    %v528 = vmul.f32 %v518, %v525
    %v530 = vlaneseq
    %v531 = vshrl.u32 %v530, 7
    %v532 = vsub.s32 0, %v531
    %v533 = vrot.slane %v414, %v532
    %534 = vrot.lane.b32.xlu0 %v533, 80
    %v535 = vpop.permute.xlu0 %534
    %v537 = vadd.f32 %v527, %v535
    %v538 = vadd.f32 %v528, %v535
    %v539 = vld [vmem:[%s2] sm:$0xf]
    %v540 = vld [vmem:[%s2 + $0x4] sm:$0xf]
    %v541 = vld [vmem:[%s2 + $0x8] sm:$0xf]
    %v542 = vld [vmem:[%s2 + $0xc] sm:$0xf]
    %v543 = vld [vmem:[%s7 + $0x4] sm:$0xf]
    %v544 = vld [vmem:[%s7 + $0x1c] sm:$0xf]
    %v545 = vld [vmem:[%s7 + $0x34] sm:$0xf]
    %v546 = vld [vmem:[%s7 + $0x4c] sm:$0xf]
    %v547 = vpack.c.bf16 %v538, %v537
    %v548 = vld [vmem:[%s9 + $0x1] sm:$0x1]
    %v550 = vlaneseq
    %v551 = vshrl.u32 %v550, 7
    %v552 = vsub.s32 0, %v551
    %v553 = vrot.slane %v548, %v552
    %v559 = vunpack.c.l.b16 %v543
    %v560 = vunpack.c.l.b16 %v544
    %v561 = vunpack.c.l.b16 %v545
    %v562 = vunpack.c.l.b16 %v546
    %v563 = vpack.c.b16 %v560, %v559
    %v564 = vpack.c.b16 %v562, %v561
    %v568 = vsel %vm44, %v547, 0
    %570 = vmatprep.subr.bf16.mxu0 0
    %571 = vmatpush1.bf16.msra.mxu0 0
    %572 = vmatprep.subr.bf16.mxu0 0
    %573 = vmatpush1.bf16.msra.mxu0 0
    %574 = vmatprep.subr.bf16.mxu0 0
    %575 = vmatpush1.bf16.msra.mxu0 0
    %576 = vmatprep.subr.bf16.mxu0 0
    %577 = vmatpush1.bf16.msra.mxu0 0
    %578 = vmatprep.subr.bf16.mxu0 0
    %579 = vmatpush1.bf16.msra.mxu0 0
    %580 = vmatprep.subr.bf16.mxu0 0
    %581 = vmatpush1.bf16.msra.mxu0 0
    %582 = vmatprep.subr.bf16.mxu0 0
    %583 = vmatpush1.bf16.msra.mxu0 %v564
    %584 = vmatprep.subr.bf16.mxu0 0
    %585 = vmatpush1.bf16.msra.mxu0 %v563
    %586 = vmatprep.subr.bf16.mxu0 0
    %587 = vmatpush2.bf16.msra.mxu0 0
    %588 = vmatprep.subr.bf16.mxu0 0
    %589 = vmatpush2.bf16.msra.mxu0 0
    %590 = vmatprep.subr.bf16.mxu0 0
    %591 = vmatpush2.bf16.msra.mxu0 0
    %592 = vmatprep.subr.bf16.mxu0 0
    %593 = vmatpush2.bf16.msra.mxu0 0
    %594 = vmatprep.subr.bf16.mxu0 0
    %595 = vmatpush2.bf16.msra.mxu0 0
    %596 = vmatprep.subr.bf16.mxu0 0
    %597 = vmatpush2.bf16.msra.mxu0 0
    %598 = vmatprep.subr.bf16.mxu0 0
    %599 = vmatpush2.bf16.msra.mxu0 0
    %600 = vmatprep.subr.bf16.mxu0 0
    %601 = vmatpush2.bf16.msra.mxu0 0
    %602 = vmatprep.mubr.bf16.mxu0 0
    %603 = vmatmul.mubr.bf16.gmra.mxu0 %v568
    %v604 = vpop.f32.mrf.mxu0
    %v605 = vadd.f32 %v553, %v604
    %v606 = vpop.f32.mrf.mxu0
    %v607 = vpop.f32.mrf.mxu0
    %v608 = vadd.f32 %v553, %v607
    %v609 = vpop.f32.mrf.mxu0
    %610 = vdwg.mxu0
    %v615 = vunpack.c.l.b16 %v539
    %v616 = vunpack.c.l.b16 %v540
    %v617 = vunpack.c.l.b16 %v541
    %v618 = vunpack.c.l.b16 %v542
    %v619 = vpack.c.b16 %v616, %v615
    %v620 = vpack.c.b16 %v618, %v617
    %621 = vrot.lane.b32.xlu0 %v563, 96
    %v622 = vpop.permute.xlu0 %621
    %623 = vrot.lane.b32.xlu0 %v564, 96
    %v624 = vpop.permute.xlu0 %623
    %627 = vrot.lane.b32.xlu0 %v553, 96
    %v628 = vpop.permute.xlu0 %627
    %v631 = vsel %vm44, %v619, 0
    %v634 = vsel %vm44, %v620, 0
    %636 = vmatprep.subr.bf16.mxu0 0
    %637 = vmatpush1.bf16.msra.mxu0 0
    %638 = vmatprep.subr.bf16.mxu0 0
    %639 = vmatpush1.bf16.msra.mxu0 0
    %640 = vmatprep.subr.bf16.mxu0 0
    %641 = vmatpush1.bf16.msra.mxu0 0
    %642 = vmatprep.subr.bf16.mxu0 0
    %643 = vmatpush1.bf16.msra.mxu0 0
    %644 = vmatprep.subr.bf16.mxu0 0
    %645 = vmatpush1.bf16.msra.mxu0 0
    %646 = vmatprep.subr.bf16.mxu0 0
    %647 = vmatpush1.bf16.msra.mxu0 0
    %648 = vmatprep.subr.bf16.mxu0 0
    %649 = vmatpush1.bf16.msra.mxu0 %v624
    %650 = vmatprep.subr.bf16.mxu0 0
    %651 = vmatpush1.bf16.msra.mxu0 %v622
    %652 = vmatprep.subr.bf16.mxu0 0
    %653 = vmatpush2.bf16.msra.mxu0 0
    %654 = vmatprep.subr.bf16.mxu0 0
    %655 = vmatpush2.bf16.msra.mxu0 0
    %656 = vmatprep.subr.bf16.mxu0 0
    %657 = vmatpush2.bf16.msra.mxu0 0
    %658 = vmatprep.subr.bf16.mxu0 0
    %659 = vmatpush2.bf16.msra.mxu0 0
    %660 = vmatprep.subr.bf16.mxu0 0
    %661 = vmatpush2.bf16.msra.mxu0 0
    %662 = vmatprep.subr.bf16.mxu0 0
    %663 = vmatpush2.bf16.msra.mxu0 0
    %664 = vmatprep.subr.bf16.mxu0 0
    %665 = vmatpush2.bf16.msra.mxu0 0
    %666 = vmatprep.subr.bf16.mxu0 0
    %667 = vmatpush2.bf16.msra.mxu0 0
    %668 = vmatprep.mubr.bf16.mxu0 0
    %669 = vmatmul.mubr.bf16.gmra.mxu0 %v631
    %v670 = vpop.f32.mrf.mxu0
    %v671 = vadd.f32 %v628, %v670
    %v672 = vpop.f32.mrf.mxu0
    %v673 = vpop.f32.mrf.mxu0
    %v674 = vadd.f32 %v628, %v673
    %v675 = vpop.f32.mrf.mxu0
    %676 = vmatprep.mubr.bf16.mxu0 0
    %677 = vmatmul.mubr.bf16.gmra.mxu0 %v634
    %v678 = vpop.f32.mrf.mxu0
    %v679 = vadd.f32 %v628, %v678
    %v680 = vpop.f32.mrf.mxu0
    %v681 = vpop.f32.mrf.mxu0
    %v682 = vadd.f32 %v628, %v681
    %v683 = vpop.f32.mrf.mxu0
    %684 = vdwg.mxu0
    %v685 = vpack.c.bf16 %v605, %v605
    %v686 = vpack.c.bf16 %v608, %v608
    %v687 = vpack.c.bf16 %v674, %v671
    %v688 = vpack.c.bf16 %v682, %v679
    %v690 = vsel %vm44, %v685, 0
    %v693 = vsel %vm44, %v687, 0
    %695 = vmatprep.subr.bf16.mxu0 0
    %696 = vmatpush1.bf16.xpose.msra.mxu0 0
    %697 = vmatprep.subr.bf16.mxu0 0
    %698 = vmatpush1.bf16.xpose.msra.mxu0 0
    %699 = vmatprep.subr.bf16.mxu0 0
    %700 = vmatpush1.bf16.xpose.msra.mxu0 0
    %701 = vmatprep.subr.bf16.mxu0 0
    %702 = vmatpush1.bf16.xpose.msra.mxu0 0
    %703 = vmatprep.subr.bf16.mxu0 0
    %704 = vmatpush1.bf16.xpose.msra.mxu0 0
    %705 = vmatprep.subr.bf16.mxu0 0
    %706 = vmatpush1.bf16.xpose.msra.mxu0 0
    %707 = vmatprep.subr.bf16.mxu0 0
    %708 = vmatpush1.bf16.xpose.msra.mxu0 0
    %709 = vmatprep.subr.bf16.mxu0 0
    %710 = vmatpush1.bf16.xpose.msra.mxu0 %v693
    %711 = vmatprep.subr.bf16.mxu0 0
    %712 = vmatpush2.bf16.xpose.msra.mxu0 0
    %713 = vmatprep.subr.bf16.mxu0 0
    %714 = vmatpush2.bf16.xpose.msra.mxu0 0
    %715 = vmatprep.subr.bf16.mxu0 0
    %716 = vmatpush2.bf16.xpose.msra.mxu0 0
    %717 = vmatprep.subr.bf16.mxu0 0
    %718 = vmatpush2.bf16.xpose.msra.mxu0 0
    %719 = vmatprep.subr.bf16.mxu0 0
    %720 = vmatpush2.bf16.xpose.msra.mxu0 0
    %721 = vmatprep.subr.bf16.mxu0 0
    %722 = vmatpush2.bf16.xpose.msra.mxu0 0
    %723 = vmatprep.subr.bf16.mxu0 0
    %724 = vmatpush2.bf16.xpose.msra.mxu0 0
    %725 = vmatprep.subr.bf16.mxu0 0
    %726 = vmatpush2.bf16.xpose.msra.mxu0 0
    %727 = vmatprep.mubr.bf16.mxu0 0
    %728 = vmatmul.mubr.bf16.gmra.mxu0 %v690
    %v729 = vpop.f32.mrf.mxu0
    %v730 = vadd.f32 0.0, %v729
    %v731 = vpop.f32.mrf.mxu0
    %v732 = vpop.f32.mrf.mxu0
    %v733 = vpop.f32.mrf.mxu0
    %734 = vdwg.mxu0
    %v736 = vsel %vm44, %v686, 0
    %v739 = vsel %vm44, %v688, 0
    %741 = vmatprep.subr.bf16.mxu0 0
    %742 = vmatpush1.bf16.xpose.msra.mxu0 0
    %743 = vmatprep.subr.bf16.mxu0 0
    %744 = vmatpush1.bf16.xpose.msra.mxu0 0
    %745 = vmatprep.subr.bf16.mxu0 0
    %746 = vmatpush1.bf16.xpose.msra.mxu0 0
    %747 = vmatprep.subr.bf16.mxu0 0
    %748 = vmatpush1.bf16.xpose.msra.mxu0 0
    %749 = vmatprep.subr.bf16.mxu0 0
    %750 = vmatpush1.bf16.xpose.msra.mxu0 0
    %751 = vmatprep.subr.bf16.mxu0 0
    %752 = vmatpush1.bf16.xpose.msra.mxu0 0
    %753 = vmatprep.subr.bf16.mxu0 0
    %754 = vmatpush1.bf16.xpose.msra.mxu0 0
    %755 = vmatprep.subr.bf16.mxu0 0
    %756 = vmatpush1.bf16.xpose.msra.mxu0 %v739
    %757 = vmatprep.subr.bf16.mxu0 0
    %758 = vmatpush2.bf16.xpose.msra.mxu0 0
    %759 = vmatprep.subr.bf16.mxu0 0
    %760 = vmatpush2.bf16.xpose.msra.mxu0 0
    %761 = vmatprep.subr.bf16.mxu0 0
    %762 = vmatpush2.bf16.xpose.msra.mxu0 0
    %763 = vmatprep.subr.bf16.mxu0 0
    %764 = vmatpush2.bf16.xpose.msra.mxu0 0
    %765 = vmatprep.subr.bf16.mxu0 0
    %766 = vmatpush2.bf16.xpose.msra.mxu0 0
    %767 = vmatprep.subr.bf16.mxu0 0
    %768 = vmatpush2.bf16.xpose.msra.mxu0 0
    %769 = vmatprep.subr.bf16.mxu0 0
    %770 = vmatpush2.bf16.xpose.msra.mxu0 0
    %771 = vmatprep.subr.bf16.mxu0 0
    %772 = vmatpush2.bf16.xpose.msra.mxu0 0
    %773 = vmatprep.mubr.bf16.mxu0 0
    %774 = vmatmul.mubr.bf16.gmra.mxu0 %v736
    %v775 = vpop.f32.mrf.mxu0
    %v776 = vadd.f32 0.0, %v775
    %v777 = vpop.f32.mrf.mxu0
    %v778 = vpop.f32.mrf.mxu0
    %v779 = vpop.f32.mrf.mxu0
    %780 = vdwg.mxu0
    %v781 = vmul.f32 %v730, 0.17677669
    %v782 = vmul.f32 %v776, 0.17677669
    %v783 = vld [vmem:[%s3] sm:$0x1]
    %v784 = vld [vmem:[%s3 + $0x1] sm:$0x1]
    %v785 = vsub.f32 1.0, %v783
    %v786 = vsub.f32 1.0, %v784
    %v787 = vmul.f32 %v785, -1e+09
    %v788 = vmul.f32 %v786, -1e+09
    %v791 = vlaneseq
    %v792 = vshrl.u32 %v791, 7
    %v793 = vsub.s32 0, %v792
    %v794 = vrot.slane %v787, %v793
    %v795 = vlaneseq
    %v796 = vshrl.u32 %v795, 7
    %v797 = vsub.s32 0, %v796
    %v798 = vrot.slane %v788, %v797
    %v801 = vadd.f32 %v781, %v794
    %v802 = vadd.f32 %v782, %v798
    %vm803 = vcmask 130048
    %v804 = vsel %vm803, %v801, -inf
    %805 = vmax.xlane.f32.xlu0 %v804
    %v806 = vpop.xlane.xlu0 %805
    %v807 = vsel %vm803, %v802, -inf
    %808 = vmax.xlane.f32.xlu0 %v807
    %v809 = vpop.xlane.xlu0 %808
    %v810 = vsub.f32 %v801, %v806
    %v811 = vsub.f32 %v802, %v809
    %v812 = vmul.f32 %v810, 1.442695
    %v813 = vpow.pop %v812
    %v814 = vmul.f32 %v811, 1.442695
    %v815 = vpow.pop %v814
    %v816 = vsel %vm803, %v813, 0.0
    %817 = vadd.xlane.f32.xlu0 %v816
    %v818 = vpop.xlane.xlu0 %817
    %v819 = vsel %vm803, %v815, 0.0
    %820 = vadd.xlane.f32.xlu0 %v819
    %v821 = vpop.xlane.xlu0 %820
    %v822 = vrcp.pop %v818
    %v823 = vrcp.pop %v821
    %v824 = vmul.f32 %v813, %v822
    %v825 = vmul.f32 %v815, %v823
    %v826 = vpack.c.bf16 %v824, %v824
    %v827 = vpack.c.bf16 %v825, %v825
    %829 = vrot.lane.b32.xlu0 %v687, 96
    %v830 = vpop.permute.xlu0 %829
    %v833 = vsel %vm803, %v826, 0
    %835 = vmatprep.subr.bf16.mxu0 0
    %836 = vmatpush1.bf16.msra.mxu0 0
    %837 = vmatprep.subr.bf16.mxu0 0
    %838 = vmatpush1.bf16.msra.mxu0 0
    %839 = vmatprep.subr.bf16.mxu0 0
    %840 = vmatpush1.bf16.msra.mxu0 0
    %841 = vmatprep.subr.bf16.mxu0 0
    %842 = vmatpush1.bf16.msra.mxu0 0
    %843 = vmatprep.subr.bf16.mxu0 0
    %844 = vmatpush1.bf16.msra.mxu0 0
    %845 = vmatprep.subr.bf16.mxu0 0
    %846 = vmatpush1.bf16.msra.mxu0 0
    %847 = vmatprep.subr.bf16.mxu0 0
    %848 = vmatpush1.bf16.msra.mxu0 0
    %849 = vmatprep.subr.bf16.mxu0 0
    %850 = vmatpush1.bf16.msra.mxu0 %v830
    %851 = vmatprep.subr.bf16.mxu0 0
    %852 = vmatpush2.bf16.msra.mxu0 0
    %853 = vmatprep.subr.bf16.mxu0 0
    %854 = vmatpush2.bf16.msra.mxu0 0
    %855 = vmatprep.subr.bf16.mxu0 0
    %856 = vmatpush2.bf16.msra.mxu0 0
    %857 = vmatprep.subr.bf16.mxu0 0
    %858 = vmatpush2.bf16.msra.mxu0 0
    %859 = vmatprep.subr.bf16.mxu0 0
    %860 = vmatpush2.bf16.msra.mxu0 0
    %861 = vmatprep.subr.bf16.mxu0 0
    %862 = vmatpush2.bf16.msra.mxu0 0
    %863 = vmatprep.subr.bf16.mxu0 0
    %864 = vmatpush2.bf16.msra.mxu0 0
    %865 = vmatprep.subr.bf16.mxu0 0
    %866 = vmatpush2.bf16.msra.mxu0 0
    %867 = vmatprep.mubr.bf16.mxu0 0
    %868 = vmatmul.mubr.bf16.gmra.mxu0 %v833
    %v869 = vpop.f32.mrf.mxu0
    %v870 = vadd.f32 0.0, %v869
    %v871 = vpop.f32.mrf.mxu0
    %v872 = vpop.f32.mrf.mxu0
    %v873 = vpop.f32.mrf.mxu0
    %874 = vdwg.mxu0
    %876 = vrot.lane.b32.xlu0 %v688, 96
    %v877 = vpop.permute.xlu0 %876
    %v880 = vsel %vm803, %v827, 0
    %882 = vmatprep.subr.bf16.mxu0 0
    %883 = vmatpush1.bf16.msra.mxu0 0
    %884 = vmatprep.subr.bf16.mxu0 0
    %885 = vmatpush1.bf16.msra.mxu0 0
    %886 = vmatprep.subr.bf16.mxu0 0
    %887 = vmatpush1.bf16.msra.mxu0 0
    %888 = vmatprep.subr.bf16.mxu0 0
    %889 = vmatpush1.bf16.msra.mxu0 0
    %890 = vmatprep.subr.bf16.mxu0 0
    %891 = vmatpush1.bf16.msra.mxu0 0
    %892 = vmatprep.subr.bf16.mxu0 0
    %893 = vmatpush1.bf16.msra.mxu0 0
    %894 = vmatprep.subr.bf16.mxu0 0
    %895 = vmatpush1.bf16.msra.mxu0 0
    %896 = vmatprep.subr.bf16.mxu0 0
    %897 = vmatpush1.bf16.msra.mxu0 %v877
    %898 = vmatprep.subr.bf16.mxu0 0
    %899 = vmatpush2.bf16.msra.mxu0 0
    %900 = vmatprep.subr.bf16.mxu0 0
    %901 = vmatpush2.bf16.msra.mxu0 0
    %902 = vmatprep.subr.bf16.mxu0 0
    %903 = vmatpush2.bf16.msra.mxu0 0
    %904 = vmatprep.subr.bf16.mxu0 0
    %905 = vmatpush2.bf16.msra.mxu0 0
    %906 = vmatprep.subr.bf16.mxu0 0
    %907 = vmatpush2.bf16.msra.mxu0 0
    %908 = vmatprep.subr.bf16.mxu0 0
    %909 = vmatpush2.bf16.msra.mxu0 0
    %910 = vmatprep.subr.bf16.mxu0 0
    %911 = vmatpush2.bf16.msra.mxu0 0
    %912 = vmatprep.subr.bf16.mxu0 0
    %913 = vmatpush2.bf16.msra.mxu0 0
    %914 = vmatprep.mubr.bf16.mxu0 0
    %915 = vmatmul.mubr.bf16.gmra.mxu0 %v880
    %v916 = vpop.f32.mrf.mxu0
    %v917 = vadd.f32 0.0, %v916
    %v918 = vpop.f32.mrf.mxu0
    %v919 = vpop.f32.mrf.mxu0
    %v920 = vpop.f32.mrf.mxu0
    %921 = vdwg.mxu0
    %v922 = vld [vmem:[%s9 + $0x6] sm:$0x1]
    %v923 = vld [vmem:[%s9 + $0x7] sm:$0x1]
    %v924 = vld [vmem:[%s7 + $0x4] sm:$0xf]
    %v925 = vld [vmem:[%s7 + $0x1c] sm:$0xf]
    %v926 = vld [vmem:[%s7 + $0x34] sm:$0xf]
    %v927 = vld [vmem:[%s7 + $0x4c] sm:$0xf]
    %v928 = vpack.c.bf16 %v917, %v870
    %v933 = vunpack.c.l.b16 %v924
    %v934 = vunpack.c.l.b16 %v925
    %v935 = vunpack.c.l.b16 %v926
    %v936 = vunpack.c.l.b16 %v927
    %v937 = vpack.c.b16 %v934, %v933
    %v938 = vpack.c.b16 %v936, %v935
    %939 = vrot.lane.b32.xlu0 %v937, 32
    %v940 = vpop.permute.xlu0 %939
    %941 = vrot.lane.b32.xlu0 %v938, 32
    %v942 = vpop.permute.xlu0 %941
    %v946 = vsel %vm44, %v928, 0
    %948 = vmatprep.subr.bf16.mxu0 0
    %949 = vmatpush1.bf16.msra.mxu0 0
    %950 = vmatprep.subr.bf16.mxu0 0
    %951 = vmatpush1.bf16.msra.mxu0 0
    %952 = vmatprep.subr.bf16.mxu0 0
    %953 = vmatpush1.bf16.msra.mxu0 0
    %954 = vmatprep.subr.bf16.mxu0 0
    %955 = vmatpush1.bf16.msra.mxu0 0
    %956 = vmatprep.subr.bf16.mxu0 0
    %957 = vmatpush1.bf16.msra.mxu0 0
    %958 = vmatprep.subr.bf16.mxu0 0
    %959 = vmatpush1.bf16.msra.mxu0 0
    %960 = vmatprep.subr.bf16.mxu0 0
    %961 = vmatpush1.bf16.msra.mxu0 %v942
    %962 = vmatprep.subr.bf16.mxu0 0
    %963 = vmatpush1.bf16.msra.mxu0 %v940
    %964 = vmatprep.subr.bf16.mxu0 0
    %965 = vmatpush2.bf16.msra.mxu0 0
    %966 = vmatprep.subr.bf16.mxu0 0
    %967 = vmatpush2.bf16.msra.mxu0 0
    %968 = vmatprep.subr.bf16.mxu0 0
    %969 = vmatpush2.bf16.msra.mxu0 0
    %970 = vmatprep.subr.bf16.mxu0 0
    %971 = vmatpush2.bf16.msra.mxu0 0
    %972 = vmatprep.subr.bf16.mxu0 0
    %973 = vmatpush2.bf16.msra.mxu0 0
    %974 = vmatprep.subr.bf16.mxu0 0
    %975 = vmatpush2.bf16.msra.mxu0 0
    %976 = vmatprep.subr.bf16.mxu0 0
    %977 = vmatpush2.bf16.msra.mxu0 0
    %978 = vmatprep.subr.bf16.mxu0 0
    %979 = vmatpush2.bf16.msra.mxu0 0
    %980 = vmatprep.mubr.bf16.mxu0 0
    %981 = vmatmul.mubr.bf16.gmra.mxu0 %v946
    %v982 = vpop.f32.mrf.mxu0
    %v983 = vadd.f32 0.0, %v982
    %v984 = vpop.f32.mrf.mxu0
    %v985 = vpop.f32.mrf.mxu0
    %v986 = vadd.f32 0.0, %v985
    %v987 = vpop.f32.mrf.mxu0
    %988 = vdwg.mxu0
    %v989 = vadd.f32 %v537, %v983
    %v990 = vadd.f32 %v538, %v986
    %v991 = vld [vmem:[%s9 + $0x1] sm:$0x1]
    %v993 = vlaneseq
    %v994 = vshrl.u32 %v993, 7
    %v995 = vsub.s32 0, %v994
    %v996 = vrot.slane %v991, %v995
    %997 = vrot.lane.b32.xlu0 %v996, 32
    %v998 = vpop.permute.xlu0 %997
    %v1000 = vadd.f32 %v989, %v998
    %v1001 = vadd.f32 %v990, %v998
    %v1002 = vsel %vm44, %v1000, 0.0
    %1003 = vadd.xlane.f32.xlu0 %v1002
    %v1004 = vpop.xlane.xlu0 %1003
    %v1005 = vsel %vm44, %v1001, 0.0
    %1006 = vadd.xlane.f32.xlu0 %v1005
    %v1007 = vpop.xlane.xlu0 %1006
    %v1008 = vmul.f32 %v1004, %v51
    %v1009 = vmul.f32 %v1007, %v51
    %v1010 = vsub.f32 %v1000, %v1008
    %v1011 = vsub.f32 %v1001, %v1009
    %v1012 = vmul.f32 %v1010, %v1010
    %v1013 = vmul.f32 %v1011, %v1011
    %v1014 = vsel %vm44, %v1012, 0.0
    %1015 = vadd.xlane.f32.xlu0 %v1014
    %v1016 = vpop.xlane.xlu0 %1015
    %v1017 = vsel %vm44, %v1013, 0.0
    %1018 = vadd.xlane.f32.xlu0 %v1017
    %v1019 = vpop.xlane.xlu0 %1018
    %v1020 = vmul.f32 %v1016, %v51
    %v1021 = vmul.f32 %v1019, %v51
    %v1022 = vadd.f32 %v1020, 1e-12
    %v1023 = vadd.f32 %v1021, 1e-12
    %v1024 = vrsqrt.pop %v1022
    %v1025 = vrsqrt.pop %v1023
    %v1026 = vmul.f32 %v1010, %v1024
    %v1027 = vmul.f32 %v1011, %v1025
    %v1029 = vlaneseq
    %v1030 = vshrl.u32 %v1029, 7
    %v1031 = vsub.s32 0, %v1030
    %v1032 = vrot.slane %v922, %v1031
    %1033 = vrot.lane.b32.xlu0 %v1032, 48
    %v1034 = vpop.permute.xlu0 %1033
    %v1036 = vmul.f32 %v1026, %v1034
    %v1037 = vmul.f32 %v1027, %v1034
    %v1039 = vlaneseq
    %v1040 = vshrl.u32 %v1039, 7
    %v1041 = vsub.s32 0, %v1040
    %v1042 = vrot.slane %v923, %v1041
    %1043 = vrot.lane.b32.xlu0 %v1042, 48
    %v1044 = vpop.permute.xlu0 %1043
    %v1046 = vadd.f32 %v1036, %v1044
    %v1047 = vadd.f32 %v1037, %v1044
    %v1048 = vld [vmem:[%s7 + $0x8] sm:$0xf]
    %v1049 = vld [vmem:[%s7 + $0x20] sm:$0xf]
    %v1050 = vld [vmem:[%s7 + $0x38] sm:$0xf]
    %v1051 = vld [vmem:[%s7 + $0x50] sm:$0xf]
    %v1052 = vpack.c.bf16 %v1047, %v1046
    %v1053 = vld [vmem:[%s9 + $0x2] sm:$0x1]
    %v1055 = vlaneseq
    %v1056 = vshrl.u32 %v1055, 7
    %v1057 = vsub.s32 0, %v1056
    %v1058 = vrot.slane %v1053, %v1057
    %v1064 = vunpack.c.l.b16 %v1048
    %v1065 = vunpack.c.l.b16 %v1049
    %v1066 = vunpack.c.l.b16 %v1050
    %v1067 = vunpack.c.l.b16 %v1051
    %v1068 = vpack.c.b16 %v1065, %v1064
    %v1069 = vpack.c.b16 %v1067, %v1066
    %v1073 = vsel %vm44, %v1052, 0
    %1075 = vmatprep.subr.bf16.mxu0 0
    %1076 = vmatpush1.bf16.msra.mxu0 0
    %1077 = vmatprep.subr.bf16.mxu0 0
    %1078 = vmatpush1.bf16.msra.mxu0 0
    %1079 = vmatprep.subr.bf16.mxu0 0
    %1080 = vmatpush1.bf16.msra.mxu0 0
    %1081 = vmatprep.subr.bf16.mxu0 0
    %1082 = vmatpush1.bf16.msra.mxu0 0
    %1083 = vmatprep.subr.bf16.mxu0 0
    %1084 = vmatpush1.bf16.msra.mxu0 0
    %1085 = vmatprep.subr.bf16.mxu0 0
    %1086 = vmatpush1.bf16.msra.mxu0 0
    %1087 = vmatprep.subr.bf16.mxu0 0
    %1088 = vmatpush1.bf16.msra.mxu0 %v1069
    %1089 = vmatprep.subr.bf16.mxu0 0
    %1090 = vmatpush1.bf16.msra.mxu0 %v1068
    %1091 = vmatprep.subr.bf16.mxu0 0
    %1092 = vmatpush2.bf16.msra.mxu0 0
    %1093 = vmatprep.subr.bf16.mxu0 0
    %1094 = vmatpush2.bf16.msra.mxu0 0
    %1095 = vmatprep.subr.bf16.mxu0 0
    %1096 = vmatpush2.bf16.msra.mxu0 0
    %1097 = vmatprep.subr.bf16.mxu0 0
    %1098 = vmatpush2.bf16.msra.mxu0 0
    %1099 = vmatprep.subr.bf16.mxu0 0
    %1100 = vmatpush2.bf16.msra.mxu0 0
    %1101 = vmatprep.subr.bf16.mxu0 0
    %1102 = vmatpush2.bf16.msra.mxu0 0
    %1103 = vmatprep.subr.bf16.mxu0 0
    %1104 = vmatpush2.bf16.msra.mxu0 0
    %1105 = vmatprep.subr.bf16.mxu0 0
    %1106 = vmatpush2.bf16.msra.mxu0 0
    %1107 = vmatprep.mubr.bf16.mxu0 0
    %1108 = vmatmul.mubr.bf16.gmra.mxu0 %v1073
    %v1109 = vpop.f32.mrf.mxu0
    %v1110 = vadd.f32 %v1058, %v1109
    %v1111 = vpop.f32.mrf.mxu0
    %v1112 = vpop.f32.mrf.mxu0
    %v1113 = vadd.f32 %v1058, %v1112
    %v1114 = vpop.f32.mrf.mxu0
    %1115 = vdwg.mxu0
    %v1116 = vmul.f32 %v1110, %v1110
    %v1117 = vmul.f32 %v1113, %v1113
    %v1118 = vmul.f32 %v1110, %v1116
    %v1119 = vmul.f32 %v1113, %v1117
    %v1120 = vmul.f32 %v1118, 0.044715
    %v1121 = vmul.f32 %v1119, 0.044715
    %v1122 = vadd.f32 %v1110, %v1120
    %v1123 = vadd.f32 %v1113, %v1121
    %v1124 = vmul.f32 %v1122, 0.7978846
    %v1125 = vmul.f32 %v1123, 0.7978846
    %v1126 = vtanh.pop %v1124
    %v1127 = vtanh.pop %v1125
    %v1128 = vadd.f32 %v1126, 1.0
    %v1129 = vadd.f32 %v1127, 1.0
    %v1130 = vmul.f32 %v1128, 0.5
    %v1131 = vmul.f32 %v1129, 0.5
    %v1132 = vmul.f32 %v1110, %v1130
    %v1133 = vmul.f32 %v1113, %v1131
    %v1134 = vld [vmem:[%s8] sm:$0xf]
    %v1135 = vld [vmem:[%s8 + $0x4] sm:$0xf]
    %v1136 = vld [vmem:[%s8 + $0x8] sm:$0xf]
    %v1137 = vld [vmem:[%s8 + $0xc] sm:$0xf]
    %v1138 = vld [vmem:[%s8 + $0x10] sm:$0xf]
    %v1139 = vld [vmem:[%s8 + $0x14] sm:$0xf]
    %v1140 = vld [vmem:[%s8 + $0x18] sm:$0xf]
    %v1141 = vld [vmem:[%s8 + $0x1c] sm:$0xf]
    %v1142 = vpack.c.bf16 %v1133, %v1132
    %v1151 = vunpack.c.l.b16 %v1134
    %v1152 = vunpack.c.l.b16 %v1135
    %v1153 = vunpack.c.l.b16 %v1136
    %v1154 = vunpack.c.l.b16 %v1137
    %v1155 = vunpack.c.l.b16 %v1138
    %v1156 = vunpack.c.l.b16 %v1139
    %v1157 = vunpack.c.l.b16 %v1140
    %v1158 = vunpack.c.l.b16 %v1141
    %v1159 = vpack.c.b16 %v1152, %v1151
    %v1160 = vpack.c.b16 %v1154, %v1153
    %v1161 = vpack.c.b16 %v1156, %v1155
    %v1162 = vpack.c.b16 %v1158, %v1157
    %1167 = vrot.lane.b32.xlu0 %v1058, 64
    %v1168 = vpop.permute.xlu0 %1167
    %vm1170 = vcmask 523264
    %v1172 = vsel %vm1170, %v1142, 0
    %1174 = vmatprep.subr.bf16.mxu0 0
    %1175 = vmatpush1.bf16.msra.mxu0 0
    %1176 = vmatprep.subr.bf16.mxu0 0
    %1177 = vmatpush1.bf16.msra.mxu0 0
    %1178 = vmatprep.subr.bf16.mxu0 0
    %1179 = vmatpush1.bf16.msra.mxu0 0
    %1180 = vmatprep.subr.bf16.mxu0 0
    %1181 = vmatpush1.bf16.msra.mxu0 0
    %1182 = vmatprep.subr.bf16.mxu0 0
    %1183 = vmatpush1.bf16.msra.mxu0 %v1162
    %1184 = vmatprep.subr.bf16.mxu0 0
    %1185 = vmatpush1.bf16.msra.mxu0 %v1161
    %1186 = vmatprep.subr.bf16.mxu0 0
    %1187 = vmatpush1.bf16.msra.mxu0 %v1160
    %1188 = vmatprep.subr.bf16.mxu0 0
    %1189 = vmatpush1.bf16.msra.mxu0 %v1159
    %1190 = vmatprep.subr.bf16.mxu0 0
    %1191 = vmatpush2.bf16.msra.mxu0 0
    %1192 = vmatprep.subr.bf16.mxu0 0
    %1193 = vmatpush2.bf16.msra.mxu0 0
    %1194 = vmatprep.subr.bf16.mxu0 0
    %1195 = vmatpush2.bf16.msra.mxu0 0
    %1196 = vmatprep.subr.bf16.mxu0 0
    %1197 = vmatpush2.bf16.msra.mxu0 0
    %1198 = vmatprep.subr.bf16.mxu0 0
    %1199 = vmatpush2.bf16.msra.mxu0 0
    %1200 = vmatprep.subr.bf16.mxu0 0
    %1201 = vmatpush2.bf16.msra.mxu0 0
    %1202 = vmatprep.subr.bf16.mxu0 0
    %1203 = vmatpush2.bf16.msra.mxu0 0
    %1204 = vmatprep.subr.bf16.mxu0 0
    %1205 = vmatpush2.bf16.msra.mxu0 0
    %1206 = vmatprep.mubr.bf16.mxu0 0
    %1207 = vmatmul.mubr.bf16.gmra.mxu0 %v1172
    %v1208 = vpop.f32.mrf.mxu0
    %v1209 = vadd.f32 %v1168, %v1208
    %v1210 = vpop.f32.mrf.mxu0
    %v1211 = vpop.f32.mrf.mxu0
    %v1212 = vadd.f32 %v1168, %v1211
    %v1213 = vpop.f32.mrf.mxu0
    %1214 = vdwg.mxu0
    %v1215 = vld [vmem:[%s9 + $0x6] sm:$0x3]
    %v1216 = vld [vmem:[%s9 + $0x7] sm:$0x3]
    %v1217 = vadd.f32 %v1046, %v1209
    %v1218 = vadd.f32 %v1047, %v1212
    %v1219 = vsel %vm44, %v1217, 0.0
    %1220 = vadd.xlane.f32.xlu0 %v1219
    %v1221 = vpop.xlane.xlu0 %1220
    %v1222 = vsel %vm44, %v1218, 0.0
    %1223 = vadd.xlane.f32.xlu0 %v1222
    %v1224 = vpop.xlane.xlu0 %1223
    %v1225 = vmul.f32 %v1221, %v51
    %v1226 = vmul.f32 %v1224, %v51
    %v1227 = vsub.f32 %v1217, %v1225
    %v1228 = vsub.f32 %v1218, %v1226
    %v1229 = vmul.f32 %v1227, %v1227
    %v1230 = vmul.f32 %v1228, %v1228
    %v1231 = vsel %vm44, %v1229, 0.0
    %1232 = vadd.xlane.f32.xlu0 %v1231
    %v1233 = vpop.xlane.xlu0 %1232
    %v1234 = vsel %vm44, %v1230, 0.0
    %1235 = vadd.xlane.f32.xlu0 %v1234
    %v1236 = vpop.xlane.xlu0 %1235
    %v1237 = vmul.f32 %v1233, %v51
    %v1238 = vmul.f32 %v1236, %v51
    %v1239 = vadd.f32 %v1237, 1e-12
    %v1240 = vadd.f32 %v1238, 1e-12
    %v1241 = vrsqrt.pop %v1239
    %v1242 = vrsqrt.pop %v1240
    %v1243 = vmul.f32 %v1227, %v1241
    %v1244 = vmul.f32 %v1228, %v1242
    %v1246 = vlaneseq
    %v1247 = vshrl.u32 %v1246, 7
    %v1248 = vsub.s32 0, %v1247
    %v1249 = vrot.slane %v1215, %v1248
    %v1250 = vlaneseq
    %v1251 = vshrl.u32 %v1250, 7
    %v1252 = vsub.s32 1, %v1251
    %v1253 = vrot.slane %v1215, %v1252
    %1254 = vrot.lane.b32.xlu0 %v1249, 16
    %v1255 = vpop.permute.xlu0 %1254
    %1256 = vrot.lane.b32.xlu0 %v1253, 16
    %v1257 = vpop.permute.xlu0 %1256
    %v1258 = vsel %vm803, %v1255, %v1257
    %v1260 = vmul.f32 %v1243, %v1258
    %v1261 = vmul.f32 %v1244, %v1258
    %v1263 = vlaneseq
    %v1264 = vshrl.u32 %v1263, 7
    %v1265 = vsub.s32 0, %v1264
    %v1266 = vrot.slane %v1216, %v1265
    %v1267 = vlaneseq
    %v1268 = vshrl.u32 %v1267, 7
    %v1269 = vsub.s32 1, %v1268
    %v1270 = vrot.slane %v1216, %v1269
    %1271 = vrot.lane.b32.xlu0 %v1266, 16
    %v1272 = vpop.permute.xlu0 %1271
    %1273 = vrot.lane.b32.xlu0 %v1270, 16
    %v1274 = vpop.permute.xlu0 %1273
    %v1275 = vsel %vm803, %v1272, %v1274
    %v1277 = vadd.f32 %v1260, %v1275
    %v1278 = vadd.f32 %v1261, %v1275
    %v1279 = vld [vmem:[%s7 + $0x8] sm:$0xff]
    %v1280 = vld [vmem:[%s7 + $0x20] sm:$0xff]
    %v1281 = vld [vmem:[%s7 + $0x38] sm:$0xff]
    %v1282 = vld [vmem:[%s7 + $0x50] sm:$0xff]
    %v1283 = vpack.c.bf16 %v1278, %v1277
    %v1284 = vld [vmem:[%s9 + $0x2] sm:$0x3]
    %v1286 = vlaneseq
    %v1287 = vshrl.u32 %v1286, 7
    %v1288 = vsub.s32 0, %v1287
    %v1289 = vrot.slane %v1284, %v1288
    %v1290 = vlaneseq
    %v1291 = vshrl.u32 %v1290, 7
    %v1292 = vsub.s32 1, %v1291
    %v1293 = vrot.slane %v1284, %v1292
    %v1298 = vunpack.c.l.b16 %v1279
    %v1299 = vunpack.c.h.b16 %v1279
    %v1300 = vunpack.c.l.b16 %v1280
    %v1301 = vunpack.c.h.b16 %v1280
    %v1302 = vunpack.c.l.b16 %v1281
    %v1303 = vunpack.c.h.b16 %v1281
    %v1304 = vunpack.c.l.b16 %v1282
    %v1305 = vunpack.c.h.b16 %v1282
    %v1306 = vpack.c.b16 %v1300, %v1298
    %v1307 = vpack.c.b16 %v1301, %v1299
    %v1308 = vpack.c.b16 %v1304, %v1302
    %v1309 = vpack.c.b16 %v1305, %v1303
    %1310 = vrot.lane.b32.xlu0 %v1306, 64
    %v1311 = vpop.permute.xlu0 %1310
    %1312 = vrot.lane.b32.xlu0 %v1307, 64
    %v1313 = vpop.permute.xlu0 %1312
    %1314 = vrot.lane.b32.xlu0 %v1308, 64
    %v1315 = vpop.permute.xlu0 %1314
    %1316 = vrot.lane.b32.xlu0 %v1309, 64
    %v1317 = vpop.permute.xlu0 %1316
    %vm1318 = vcmask 523264
    %v1319 = vsel %vm1318, %v1311, %v1313
    %v1320 = vsel %vm1318, %v1315, %v1317
    %1323 = vrot.lane.b32.xlu0 %v1289, 32
    %v1324 = vpop.permute.xlu0 %1323
    %1325 = vrot.lane.b32.xlu0 %v1293, 32
    %v1326 = vpop.permute.xlu0 %1325
    %v1327 = vsel %vm44, %v1324, %v1326
    %v1330 = vsel %vm44, %v1283, 0
    %1332 = vmatprep.subr.bf16.mxu0 0
    %1333 = vmatpush1.bf16.msra.mxu0 0
    %1334 = vmatprep.subr.bf16.mxu0 0
    %1335 = vmatpush1.bf16.msra.mxu0 0
    %1336 = vmatprep.subr.bf16.mxu0 0
    %1337 = vmatpush1.bf16.msra.mxu0 0
    %1338 = vmatprep.subr.bf16.mxu0 0
    %1339 = vmatpush1.bf16.msra.mxu0 0
    %1340 = vmatprep.subr.bf16.mxu0 0
    %1341 = vmatpush1.bf16.msra.mxu0 0
    %1342 = vmatprep.subr.bf16.mxu0 0
    %1343 = vmatpush1.bf16.msra.mxu0 0
    %1344 = vmatprep.subr.bf16.mxu0 0
    %1345 = vmatpush1.bf16.msra.mxu0 %v1320
    %1346 = vmatprep.subr.bf16.mxu0 0
    %1347 = vmatpush1.bf16.msra.mxu0 %v1319
    %1348 = vmatprep.subr.bf16.mxu0 0
    %1349 = vmatpush2.bf16.msra.mxu0 0
    %1350 = vmatprep.subr.bf16.mxu0 0
    %1351 = vmatpush2.bf16.msra.mxu0 0
    %1352 = vmatprep.subr.bf16.mxu0 0
    %1353 = vmatpush2.bf16.msra.mxu0 0
    %1354 = vmatprep.subr.bf16.mxu0 0
    %1355 = vmatpush2.bf16.msra.mxu0 0
    %1356 = vmatprep.subr.bf16.mxu0 0
    %1357 = vmatpush2.bf16.msra.mxu0 0
    %1358 = vmatprep.subr.bf16.mxu0 0
    %1359 = vmatpush2.bf16.msra.mxu0 0
    %1360 = vmatprep.subr.bf16.mxu0 0
    %1361 = vmatpush2.bf16.msra.mxu0 0
    %1362 = vmatprep.subr.bf16.mxu0 0
    %1363 = vmatpush2.bf16.msra.mxu0 0
    %1364 = vmatprep.mubr.bf16.mxu0 0
    %1365 = vmatmul.mubr.bf16.gmra.mxu0 %v1330
    %v1366 = vpop.f32.mrf.mxu0
    %v1367 = vadd.f32 %v1327, %v1366
    %v1368 = vpop.f32.mrf.mxu0
    %v1369 = vpop.f32.mrf.mxu0
    %v1370 = vadd.f32 %v1327, %v1369
    %v1371 = vpop.f32.mrf.mxu0
    %1372 = vdwg.mxu0
    %v1373 = vmul.f32 %v1367, %v1367
    %v1374 = vmul.f32 %v1370, %v1370
    %v1375 = vmul.f32 %v1367, %v1373
    %v1376 = vmul.f32 %v1370, %v1374
    %v1377 = vmul.f32 %v1375, 0.044715
    %v1378 = vmul.f32 %v1376, 0.044715
    %v1379 = vadd.f32 %v1367, %v1377
    %v1380 = vadd.f32 %v1370, %v1378
    %v1381 = vmul.f32 %v1379, 0.7978846
    %v1382 = vmul.f32 %v1380, 0.7978846
    %v1383 = vtanh.pop %v1381
    %v1384 = vtanh.pop %v1382
    %v1385 = vadd.f32 %v1383, 1.0
    %v1386 = vadd.f32 %v1384, 1.0
    %v1387 = vmul.f32 %v1385, 0.5
    %v1388 = vmul.f32 %v1386, 0.5
    %v1389 = vmul.f32 %v1367, %v1387
    %v1390 = vmul.f32 %v1370, %v1388
    %v1391 = vld [vmem:[%s9 + $0x8] sm:$0x1]
    %v1392 = vsel %vm44, %v1389, 0.0
    %1393 = vadd.xlane.f32.xlu0 %v1392
    %v1394 = vpop.xlane.xlu0 %1393
    %v1395 = vsel %vm44, %v1390, 0.0
    %1396 = vadd.xlane.f32.xlu0 %v1395
    %v1397 = vpop.xlane.xlu0 %1396
    %v1398 = vmul.f32 %v1394, %v51
    %v1399 = vmul.f32 %v1397, %v51
    %v1400 = vsub.f32 %v1389, %v1398
    %v1401 = vsub.f32 %v1390, %v1399
    %v1402 = vmul.f32 %v1400, %v1400
    %v1403 = vmul.f32 %v1401, %v1401
    %v1404 = vsel %vm44, %v1402, 0.0
    %1405 = vadd.xlane.f32.xlu0 %v1404
    %v1406 = vpop.xlane.xlu0 %1405
    %v1407 = vsel %vm44, %v1403, 0.0
    %1408 = vadd.xlane.f32.xlu0 %v1407
    %v1409 = vpop.xlane.xlu0 %1408
    %v1410 = vmul.f32 %v1406, %v51
    %v1411 = vmul.f32 %v1409, %v51
    %v1412 = vadd.f32 %v1410, 1e-12
    %v1413 = vadd.f32 %v1411, 1e-12
    %v1414 = vrsqrt.pop %v1412
    %v1415 = vrsqrt.pop %v1413
    %v1416 = vmul.f32 %v1400, %v1414
    %v1417 = vmul.f32 %v1401, %v1415
    %v1419 = vlaneseq
    %v1420 = vshrl.u32 %v1419, 7
    %v1421 = vsub.s32 0, %v1420
    %v1422 = vrot.slane %v1391, %v1421
    %1423 = vrot.lane.b32.xlu0 %v1422, 112
    %v1424 = vpop.permute.xlu0 %1423
    %v1426 = vmul.f32 %v1416, %v1424
    %v1427 = vmul.f32 %v1417, %v1424
    %1428 = vrot.lane.b32.xlu0 %v1422, 80
    %v1429 = vpop.permute.xlu0 %1428
    %v1431 = vadd.f32 %v1426, %v1429
    %v1432 = vadd.f32 %v1427, %v1429
    %v1433 = vld [vmem:[%s7 + $0xc] sm:$0xf]
    %v1434 = vld [vmem:[%s7 + $0x24] sm:$0xf]
    %v1435 = vld [vmem:[%s7 + $0x3c] sm:$0xf]
    %v1436 = vld [vmem:[%s7 + $0x54] sm:$0xf]
    %v1437 = vpack.c.bf16 %v1432, %v1431
    %v1438 = vld [vmem:[%s9 + $0x3] sm:$0x3]
    %v1440 = vlaneseq
    %v1441 = vshrl.u32 %v1440, 7
    %v1442 = vsub.s32 0, %v1441
    %v1443 = vrot.slane %v1438, %v1442
    %v1444 = vlaneseq
    %v1445 = vshrl.u32 %v1444, 7
    %v1446 = vsub.s32 1, %v1445
    %v1447 = vrot.slane %v1438, %v1446
    %v1452 = vunpack.c.l.b16 %v1433
    %v1453 = vunpack.c.l.b16 %v1434
    %v1454 = vunpack.c.l.b16 %v1435
    %v1455 = vunpack.c.l.b16 %v1436
    %v1456 = vpack.c.b16 %v1453, %v1452
    %v1457 = vpack.c.b16 %v1455, %v1454
    %1458 = vrot.lane.b32.xlu0 %v1456, 80
    %v1459 = vpop.permute.xlu0 %1458
    %1460 = vrot.lane.b32.xlu0 %v1457, 80
    %v1461 = vpop.permute.xlu0 %1460
    %1464 = vrot.lane.b32.xlu0 %v1443, 48
    %v1465 = vpop.permute.xlu0 %1464
    %1466 = vrot.lane.b32.xlu0 %v1447, 48
    %v1467 = vpop.permute.xlu0 %1466
    %vm1468 = vcmask 392192
    %v1469 = vsel %vm1468, %v1465, %v1467
    %v1472 = vsel %vm44, %v1437, 0
    %1474 = vmatprep.subr.bf16.mxu0 0
    %1475 = vmatpush1.bf16.msra.mxu0 0
    %1476 = vmatprep.subr.bf16.mxu0 0
    %1477 = vmatpush1.bf16.msra.mxu0 0
    %1478 = vmatprep.subr.bf16.mxu0 0
    %1479 = vmatpush1.bf16.msra.mxu0 0
    %1480 = vmatprep.subr.bf16.mxu0 0
    %1481 = vmatpush1.bf16.msra.mxu0 0
    %1482 = vmatprep.subr.bf16.mxu0 0
    %1483 = vmatpush1.bf16.msra.mxu0 0
    %1484 = vmatprep.subr.bf16.mxu0 0
    %1485 = vmatpush1.bf16.msra.mxu0 0
    %1486 = vmatprep.subr.bf16.mxu0 0
    %1487 = vmatpush1.bf16.msra.mxu0 %v1461
    %1488 = vmatprep.subr.bf16.mxu0 0
    %1489 = vmatpush1.bf16.msra.mxu0 %v1459
    %1490 = vmatprep.subr.bf16.mxu0 0
    %1491 = vmatpush2.bf16.msra.mxu0 0
    %1492 = vmatprep.subr.bf16.mxu0 0
    %1493 = vmatpush2.bf16.msra.mxu0 0
    %1494 = vmatprep.subr.bf16.mxu0 0
    %1495 = vmatpush2.bf16.msra.mxu0 0
    %1496 = vmatprep.subr.bf16.mxu0 0
    %1497 = vmatpush2.bf16.msra.mxu0 0
    %1498 = vmatprep.subr.bf16.mxu0 0
    %1499 = vmatpush2.bf16.msra.mxu0 0
    %1500 = vmatprep.subr.bf16.mxu0 0
    %1501 = vmatpush2.bf16.msra.mxu0 0
    %1502 = vmatprep.subr.bf16.mxu0 0
    %1503 = vmatpush2.bf16.msra.mxu0 0
    %1504 = vmatprep.subr.bf16.mxu0 0
    %1505 = vmatpush2.bf16.msra.mxu0 0
    %1506 = vmatprep.mubr.bf16.mxu0 0
    %1507 = vmatmul.mubr.bf16.gmra.mxu0 %v1472
    %v1508 = vpop.f32.mrf.mxu0
    %v1509 = vadd.f32 %v1469, %v1508
    %v1510 = vpop.f32.mrf.mxu0
    %v1511 = vpop.f32.mrf.mxu0
    %v1512 = vadd.f32 %v1469, %v1511
    %v1513 = vpop.f32.mrf.mxu0
    %1514 = vdwg.mxu0
    %1515 = vst.msk [vmem:[#allocation3] sm:$0xff] %vm1170, %v1509
    %1516 = vst.msk [vmem:[#allocation3 + $0x8] sm:$0xff] %vm1170, %v1512
    %v1517 = vadd.s32 %v263, 8
    %v1518 = vadd.s32 %v263, 16
    %v1519 = vadd.s32 %v263, 24
    %vm1520 = vcmp.lt.s32.totalorder %v263, 16
    %vm1521 = vcmp.lt.s32.totalorder %v1517, 16
    %vm1522 = vcmp.lt.s32.totalorder %v1518, 16
    %vm1523 = vcmp.lt.s32.totalorder %v1519, 16
    %v1524 = vld [vmem:[%s7 + $0xc] sm:$0xff]
    %v1525 = vld [vmem:[%s7 + $0x24] sm:$0xff]
    %v1526 = vld [vmem:[%s7 + $0x3c] sm:$0xff]
    %v1527 = vld [vmem:[%s7 + $0x54] sm:$0xff]
    %v1528 = vld [vmem:[%s9 + $0x4] sm:$0x3]
    %v1530 = vlaneseq
    %v1531 = vshrl.u32 %v1530, 7
    %v1532 = vsub.s32 0, %v1531
    %v1533 = vrot.slane %v1528, %v1532
    %v1534 = vlaneseq
    %v1535 = vshrl.u32 %v1534, 7
    %v1536 = vsub.s32 1, %v1535
    %v1537 = vrot.slane %v1528, %v1536
    %v1542 = vunpack.c.l.b16 %v1524
    %v1543 = vunpack.c.h.b16 %v1524
    %v1544 = vunpack.c.l.b16 %v1525
    %v1545 = vunpack.c.h.b16 %v1525
    %v1546 = vunpack.c.l.b16 %v1526
    %v1547 = vunpack.c.h.b16 %v1526
    %v1548 = vunpack.c.l.b16 %v1527
    %v1549 = vunpack.c.h.b16 %v1527
    %v1550 = vpack.c.b16 %v1544, %v1542
    %v1551 = vpack.c.b16 %v1545, %v1543
    %v1552 = vpack.c.b16 %v1548, %v1546
    %v1553 = vpack.c.b16 %v1549, %v1547
    %1554 = vrot.lane.b32.xlu0 %v1550, 16
    %v1555 = vpop.permute.xlu0 %1554
    %1556 = vrot.lane.b32.xlu0 %v1551, 16
    %v1557 = vpop.permute.xlu0 %1556
    %1558 = vrot.lane.b32.xlu0 %v1552, 16
    %v1559 = vpop.permute.xlu0 %1558
    %1560 = vrot.lane.b32.xlu0 %v1553, 16
    %v1561 = vpop.permute.xlu0 %1560
    %vm1562 = vcmask 130048
    %v1563 = vsel %vm1562, %v1555, %v1557
    %v1564 = vsel %vm1562, %v1559, %v1561
    %1567 = vrot.lane.b32.xlu0 %v1533, 112
    %v1568 = vpop.permute.xlu0 %1567
    %1569 = vrot.lane.b32.xlu0 %v1537, 112
    %v1570 = vpop.permute.xlu0 %1569
    %vm1571 = vcmask 916480
    %v1572 = vsel %vm1571, %v1568, %v1570
    %1574 = vmatprep.subr.bf16.mxu0 0
    %1575 = vmatpush1.bf16.msra.mxu0 0
    %1576 = vmatprep.subr.bf16.mxu0 0
    %1577 = vmatpush1.bf16.msra.mxu0 0
    %1578 = vmatprep.subr.bf16.mxu0 0
    %1579 = vmatpush1.bf16.msra.mxu0 0
    %1580 = vmatprep.subr.bf16.mxu0 0
    %1581 = vmatpush1.bf16.msra.mxu0 0
    %1582 = vmatprep.subr.bf16.mxu0 0
    %1583 = vmatpush1.bf16.msra.mxu0 0
    %1584 = vmatprep.subr.bf16.mxu0 0
    %1585 = vmatpush1.bf16.msra.mxu0 0
    %1586 = vmatprep.subr.bf16.mxu0 0
    %1587 = vmatpush1.bf16.msra.mxu0 %v1564
    %1588 = vmatprep.subr.bf16.mxu0 0
    %1589 = vmatpush1.bf16.msra.mxu0 %v1563
    %1590 = vmatprep.subr.bf16.mxu0 0
    %1591 = vmatpush2.bf16.msra.mxu0 0
    %1592 = vmatprep.subr.bf16.mxu0 0
    %1593 = vmatpush2.bf16.msra.mxu0 0
    %1594 = vmatprep.subr.bf16.mxu0 0
    %1595 = vmatpush2.bf16.msra.mxu0 0
    %1596 = vmatprep.subr.bf16.mxu0 0
    %1597 = vmatpush2.bf16.msra.mxu0 0
    %1598 = vmatprep.subr.bf16.mxu0 0
    %1599 = vmatpush2.bf16.msra.mxu0 0
    %1600 = vmatprep.subr.bf16.mxu0 0
    %1601 = vmatpush2.bf16.msra.mxu0 0
    %1602 = vmatprep.subr.bf16.mxu0 0
    %1603 = vmatpush2.bf16.msra.mxu0 0
    %1604 = vmatprep.subr.bf16.mxu0 0
    %1605 = vmatpush2.bf16.msra.mxu0 0
    %1606 = vmatprep.mubr.bf16.mxu0 0
    %1607 = vmatmul.mubr.bf16.gmra.mxu0 %v1330
    %v1608 = vpop.f32.mrf.mxu0
    %v1609 = vadd.f32 %v1572, %v1608
    %v1610 = vpop.f32.mrf.mxu0
    %v1611 = vpop.f32.mrf.mxu0
    %v1612 = vadd.f32 %v1572, %v1611
    %v1613 = vpop.f32.mrf.mxu0
    %1614 = vmatprep.mubr.bf16.mxu0 0
    %1615 = vmatmul.mubr.bf16.gmra.mxu0 %v1330
    %v1616 = vpop.f32.mrf.mxu0
    %v1617 = vadd.f32 %v1572, %v1616
    %v1618 = vpop.f32.mrf.mxu0
    %v1619 = vpop.f32.mrf.mxu0
    %v1620 = vadd.f32 %v1572, %v1619
    %v1621 = vpop.f32.mrf.mxu0
    %1622 = vdwg.mxu0
    %v1623 = vsel %vm1520, 1, 0
    %v1624 = vsel %vm1521, 1, 0
    %v1625 = vsel %vm1522, 1, 0
    %v1626 = vsel %vm1523, 1, 0
    %vm1627 = vcmp.eq.s32.totalorder %v1623, 1
    %vm1628 = vcmp.eq.s32.totalorder %v1624, 1
    %vm1629 = vcmp.eq.s32.totalorder %v1625, 1
    %vm1630 = vcmp.eq.s32.totalorder %v1626, 1
    %1635 = vrot.lane.b32.xlu0 %v1609, 96
    %v1636 = vpop.permute.xlu0 %1635
    %1637 = vrot.lane.b32.xlu0 %v1612, 96
    %v1638 = vpop.permute.xlu0 %1637
    %1639 = vrot.lane.b32.xlu0 %v1617, 96
    %v1640 = vpop.permute.xlu0 %1639
    %1641 = vrot.lane.b32.xlu0 %v1620, 96
    %v1642 = vpop.permute.xlu0 %1641
    %v1647 = vsel %vm1627, %v1609, %v1636
    %v1648 = vsel %vm1628, %v1612, %v1638
    %v1649 = vsel %vm1629, %v1617, %v1640
    %v1650 = vsel %vm1630, %v1620, %v1642
    %v1651 = vxor.u32 %v1647, 2147483648
    %v1652 = vxor.u32 %v1648, 2147483648
    %v1653 = vxor.u32 %v1649, 2147483648
    %v1654 = vxor.u32 %v1650, 2147483648
    %v1655 = vmul.f32 %v1651, 1.442695
    %v1656 = vpow.pop %v1655
    %v1657 = vmul.f32 %v1652, 1.442695
    %v1658 = vpow.pop %v1657
    %v1659 = vmul.f32 %v1653, 1.442695
    %v1660 = vpow.pop %v1659
    %v1661 = vmul.f32 %v1654, 1.442695
    %v1662 = vpow.pop %v1661
    %v1663 = vadd.f32 %v1656, 1.0
    %v1664 = vadd.f32 %v1658, 1.0
    %v1665 = vadd.f32 %v1660, 1.0
    %v1666 = vadd.f32 %v1662, 1.0
    %v1667 = vrcp.pop %v1663
    %v1668 = vmul.f32 1.0, %v1667
    %v1669 = vrcp.pop %v1664
    %v1670 = vmul.f32 1.0, %v1669
    %v1671 = vrcp.pop %v1665
    %v1672 = vmul.f32 1.0, %v1671
    %v1673 = vrcp.pop %v1666
    %v1674 = vmul.f32 1.0, %v1673
    %v1675 = vtanh.pop %v1647
    %v1676 = vtanh.pop %v1648
    %v1677 = vtanh.pop %v1649
    %v1678 = vtanh.pop %v1650
    %1683 = vrot.lane.b32.xlu0 %v1675, 64
    %v1684 = vpop.permute.xlu0 %1683
    %1685 = vrot.lane.b32.xlu0 %v1676, 64
    %v1686 = vpop.permute.xlu0 %1685
    %1687 = vrot.lane.b32.xlu0 %v1677, 64
    %v1688 = vpop.permute.xlu0 %1687
    %1689 = vrot.lane.b32.xlu0 %v1678, 64
    %v1690 = vpop.permute.xlu0 %1689
    %v1695 = vmul.f32 %v1668, %v1684
    %v1696 = vmul.f32 %v1670, %v1686
    %v1697 = vmul.f32 %v1672, %v1688
    %v1698 = vmul.f32 %v1674, %v1690
    %v1699 = vsub.f32 1.0, %v1668
    %v1700 = vsub.f32 1.0, %v1670
    %v1701 = vsub.f32 1.0, %v1672
    %v1702 = vsub.f32 1.0, %v1674
    %v1703 = vmul.f32 %v1699, %v1277
    %v1704 = vmul.f32 %v1700, %v1278
    %v1705 = vmul.f32 %v1701, %v1277
    %v1706 = vmul.f32 %v1702, %v1278
    %v1707 = vadd.f32 %v1695, %v1703
    %v1708 = vadd.f32 %v1696, %v1704
    %v1709 = vadd.f32 %v1697, %v1705
    %v1710 = vadd.f32 %v1698, %v1706
    %v1711 = vld [vmem:[%s7 + $0x10] sm:$0xff]
    %v1712 = vld [vmem:[%s7 + $0x28] sm:$0xff]
    %v1713 = vld [vmem:[%s7 + $0x40] sm:$0xff]
    %v1714 = vld [vmem:[%s7 + $0x58] sm:$0xff]
    %v1715 = vld [vmem:[%s9 + $0x5] sm:$0x3]
    %v1716 = vpack.c.bf16 %v1708, %v1707
    %v1717 = vpack.c.bf16 %v1710, %v1709
    %v1719 = vlaneseq
    %v1720 = vshrl.u32 %v1719, 7
    %v1721 = vsub.s32 0, %v1720
    %v1722 = vrot.slane %v1715, %v1721
    %v1723 = vlaneseq
    %v1724 = vshrl.u32 %v1723, 7
    %v1725 = vsub.s32 1, %v1724
    %v1726 = vrot.slane %v1715, %v1725
    %v1731 = vunpack.c.l.b16 %v1711
    %v1732 = vunpack.c.h.b16 %v1711
    %v1733 = vunpack.c.l.b16 %v1712
    %v1734 = vunpack.c.h.b16 %v1712
    %v1735 = vunpack.c.l.b16 %v1713
    %v1736 = vunpack.c.h.b16 %v1713
    %v1737 = vunpack.c.l.b16 %v1714
    %v1738 = vunpack.c.h.b16 %v1714
    %v1739 = vpack.c.b16 %v1733, %v1731
    %v1740 = vpack.c.b16 %v1734, %v1732
    %v1741 = vpack.c.b16 %v1737, %v1735
    %v1742 = vpack.c.b16 %v1738, %v1736
    %1743 = vrot.lane.b32.xlu0 %v1739, 16
    %v1744 = vpop.permute.xlu0 %1743
    %1745 = vrot.lane.b32.xlu0 %v1740, 16
    %v1746 = vpop.permute.xlu0 %1745
    %1747 = vrot.lane.b32.xlu0 %v1741, 16
    %v1748 = vpop.permute.xlu0 %1747
    %1749 = vrot.lane.b32.xlu0 %v1742, 16
    %v1750 = vpop.permute.xlu0 %1749
    %v1751 = vsel %vm1562, %v1744, %v1746
    %v1752 = vsel %vm1562, %v1748, %v1750
    %1755 = vrot.lane.b32.xlu0 %v1722, 112
    %v1756 = vpop.permute.xlu0 %1755
    %1757 = vrot.lane.b32.xlu0 %v1726, 112
    %v1758 = vpop.permute.xlu0 %1757
    %v1759 = vsel %vm1571, %v1756, %v1758
    %v1762 = vsel %vm44, %v1716, 0
    %v1765 = vsel %vm44, %v1717, 0
    %1767 = vmatprep.subr.bf16.mxu0 0
    %1768 = vmatpush1.bf16.msra.mxu0 0
    %1769 = vmatprep.subr.bf16.mxu0 0
    %1770 = vmatpush1.bf16.msra.mxu0 0
    %1771 = vmatprep.subr.bf16.mxu0 0
    %1772 = vmatpush1.bf16.msra.mxu0 0
    %1773 = vmatprep.subr.bf16.mxu0 0
    %1774 = vmatpush1.bf16.msra.mxu0 0
    %1775 = vmatprep.subr.bf16.mxu0 0
    %1776 = vmatpush1.bf16.msra.mxu0 0
    %1777 = vmatprep.subr.bf16.mxu0 0
    %1778 = vmatpush1.bf16.msra.mxu0 0
    %1779 = vmatprep.subr.bf16.mxu0 0
    %1780 = vmatpush1.bf16.msra.mxu0 %v1752
    %1781 = vmatprep.subr.bf16.mxu0 0
    %1782 = vmatpush1.bf16.msra.mxu0 %v1751
    %1783 = vmatprep.subr.bf16.mxu0 0
    %1784 = vmatpush2.bf16.msra.mxu0 0
    %1785 = vmatprep.subr.bf16.mxu0 0
    %1786 = vmatpush2.bf16.msra.mxu0 0
    %1787 = vmatprep.subr.bf16.mxu0 0
    %1788 = vmatpush2.bf16.msra.mxu0 0
    %1789 = vmatprep.subr.bf16.mxu0 0
    %1790 = vmatpush2.bf16.msra.mxu0 0
    %1791 = vmatprep.subr.bf16.mxu0 0
    %1792 = vmatpush2.bf16.msra.mxu0 0
    %1793 = vmatprep.subr.bf16.mxu0 0
    %1794 = vmatpush2.bf16.msra.mxu0 0
    %1795 = vmatprep.subr.bf16.mxu0 0
    %1796 = vmatpush2.bf16.msra.mxu0 0
    %1797 = vmatprep.subr.bf16.mxu0 0
    %1798 = vmatpush2.bf16.msra.mxu0 0
    %1799 = vmatprep.mubr.bf16.mxu0 0
    %1800 = vmatmul.mubr.bf16.gmra.mxu0 %v1762
    %v1801 = vpop.f32.mrf.mxu0
    %v1802 = vadd.f32 %v1759, %v1801
    %v1803 = vpop.f32.mrf.mxu0
    %v1804 = vpop.f32.mrf.mxu0
    %v1805 = vadd.f32 %v1759, %v1804
    %v1806 = vpop.f32.mrf.mxu0
    %1807 = vmatprep.mubr.bf16.mxu0 0
    %1808 = vmatmul.mubr.bf16.gmra.mxu0 %v1765
    %v1809 = vpop.f32.mrf.mxu0
    %v1810 = vadd.f32 %v1759, %v1809
    %v1811 = vpop.f32.mrf.mxu0
    %v1812 = vpop.f32.mrf.mxu0
    %v1813 = vadd.f32 %v1759, %v1812
    %v1814 = vpop.f32.mrf.mxu0
    %1815 = vdwg.mxu0
    %1820 = vrot.lane.b32.xlu0 %v1802, 96
    %v1821 = vpop.permute.xlu0 %1820
    %1822 = vrot.lane.b32.xlu0 %v1805, 96
    %v1823 = vpop.permute.xlu0 %1822
    %1824 = vrot.lane.b32.xlu0 %v1810, 96
    %v1825 = vpop.permute.xlu0 %1824
    %1826 = vrot.lane.b32.xlu0 %v1813, 96
    %v1827 = vpop.permute.xlu0 %1826
    %v1832 = vsel %vm1627, %v1802, %v1821
    %v1833 = vsel %vm1628, %v1805, %v1823
    %v1834 = vsel %vm1629, %v1810, %v1825
    %v1835 = vsel %vm1630, %v1813, %v1827
    %v1836 = vxor.u32 %v1832, 2147483648
    %v1837 = vxor.u32 %v1833, 2147483648
    %v1838 = vxor.u32 %v1834, 2147483648
    %v1839 = vxor.u32 %v1835, 2147483648
    %v1840 = vmul.f32 %v1836, 1.442695
    %v1841 = vpow.pop %v1840
    %v1842 = vmul.f32 %v1837, 1.442695
    %v1843 = vpow.pop %v1842
    %v1844 = vmul.f32 %v1838, 1.442695
    %v1845 = vpow.pop %v1844
    %v1846 = vmul.f32 %v1839, 1.442695
    %v1847 = vpow.pop %v1846
    %v1848 = vadd.f32 %v1841, 1.0
    %v1849 = vadd.f32 %v1843, 1.0
    %v1850 = vadd.f32 %v1845, 1.0
    %v1851 = vadd.f32 %v1847, 1.0
    %v1852 = vrcp.pop %v1848
    %v1853 = vmul.f32 1.0, %v1852
    %v1854 = vrcp.pop %v1849
    %v1855 = vmul.f32 1.0, %v1854
    %v1856 = vrcp.pop %v1850
    %v1857 = vmul.f32 1.0, %v1856
    %v1858 = vrcp.pop %v1851
    %v1859 = vmul.f32 1.0, %v1858
    %v1860 = vtanh.pop %v1832
    %v1861 = vtanh.pop %v1833
    %v1862 = vtanh.pop %v1834
    %v1863 = vtanh.pop %v1835
    %1868 = vrot.lane.b32.xlu0 %v1860, 64
    %v1869 = vpop.permute.xlu0 %1868
    %1870 = vrot.lane.b32.xlu0 %v1861, 64
    %v1871 = vpop.permute.xlu0 %1870
    %1872 = vrot.lane.b32.xlu0 %v1862, 64
    %v1873 = vpop.permute.xlu0 %1872
    %1874 = vrot.lane.b32.xlu0 %v1863, 64
    %v1875 = vpop.permute.xlu0 %1874
    %v1880 = vmul.f32 %v1853, %v1869
    %v1881 = vmul.f32 %v1855, %v1871
    %v1882 = vmul.f32 %v1857, %v1873
    %v1883 = vmul.f32 %v1859, %v1875
    %v1884 = vsub.f32 1.0, %v1853
    %v1885 = vsub.f32 1.0, %v1855
    %v1886 = vsub.f32 1.0, %v1857
    %v1887 = vsub.f32 1.0, %v1859
    %v1888 = vmul.f32 %v1884, %v1707
    %v1889 = vmul.f32 %v1885, %v1708
    %v1890 = vmul.f32 %v1886, %v1709
    %v1891 = vmul.f32 %v1887, %v1710
    %v1892 = vadd.f32 %v1880, %v1888
    %v1893 = vadd.f32 %v1881, %v1889
    %v1894 = vadd.f32 %v1882, %v1890
    %v1895 = vadd.f32 %v1883, %v1891
    %1896 = vst.msk [vmem:[#allocation2] sm:$0xff] %vm44, %v1892
    %1897 = vst.msk [vmem:[#allocation2 + $0x20] sm:$0xff] %vm44, %v1893
    %1898 = vst.msk [vmem:[#allocation2 + $0x8] sm:$0xff] %vm44, %v1894
    %1899 = vst.msk [vmem:[#allocation2 + $0x28] sm:$0xff] %vm44, %v1895
    %1902 = vrot.lane.b32.xlu0 %v1367, 80
    %v1903 = vpop.permute.xlu0 %1902
    %1904 = vrot.lane.b32.xlu0 %v1370, 80
    %v1905 = vpop.permute.xlu0 %1904
    %1908 = vst.msk [vmem:[#allocation2 + $0x10] sm:$0xff] %vm44, %v1903
    %1909 = vst.msk [vmem:[#allocation2 + $0x30] sm:$0xff] %vm44, %v1905
    %1910 = vrot.lane.b32.xlu0 %v1367, 48
    %v1911 = vpop.permute.xlu0 %1910
    %1912 = vrot.lane.b32.xlu0 %v1370, 48
    %v1913 = vpop.permute.xlu0 %1912
    %1916 = vst.msk [vmem:[#allocation2 + $0x18] sm:$0xff] %vm44, %v1911
    %1917 = vst.msk [vmem:[#allocation2 + $0x38] sm:$0xff] %vm44, %v1913
    %v1918 = vld [vmem:[#allocation2] sm:$0xff]
    %v1919 = vld [vmem:[#allocation2 + $0x8] sm:$0xff]
    %v1920 = vld [vmem:[#allocation2 + $0x10] sm:$0xff]
    %v1921 = vld [vmem:[#allocation2 + $0x18] sm:$0xff]
    %v1922 = vld [vmem:[#allocation2 + $0x20] sm:$0xff]
    %v1923 = vld [vmem:[#allocation2 + $0x28] sm:$0xff]
    %v1924 = vld [vmem:[#allocation2 + $0x30] sm:$0xff]
    %v1925 = vld [vmem:[#allocation2 + $0x38] sm:$0xff]
    %v1926 = vpack.c.bf16 %v1919, %v1918
    %v1927 = vpack.c.bf16 %v1921, %v1920
    %v1928 = vpack.c.bf16 %v1923, %v1922
    %v1929 = vpack.c.bf16 %v1925, %v1924
    %v1931 = vsel %vm44, %v1926, 0
    %v1934 = vsel %vm44, %v1927, 0
    %1936 = vmatprep.subr.bf16.mxu0 0
    %1937 = vmatpush1.bf16.xpose.msra.mxu0 0
    %1938 = vmatprep.subr.bf16.mxu0 0
    %1939 = vmatpush1.bf16.xpose.msra.mxu0 0
    %1940 = vmatprep.subr.bf16.mxu0 0
    %1941 = vmatpush1.bf16.xpose.msra.mxu0 0
    %1942 = vmatprep.subr.bf16.mxu0 0
    %1943 = vmatpush1.bf16.xpose.msra.mxu0 0
    %1944 = vmatprep.subr.bf16.mxu0 0
    %1945 = vmatpush1.bf16.xpose.msra.mxu0 0
    %1946 = vmatprep.subr.bf16.mxu0 0
    %1947 = vmatpush1.bf16.xpose.msra.mxu0 0
    %1948 = vmatprep.subr.bf16.mxu0 0
    %1949 = vmatpush1.bf16.xpose.msra.mxu0 0
    %1950 = vmatprep.subr.bf16.mxu0 0
    %1951 = vmatpush1.bf16.xpose.msra.mxu0 %v631
    %1952 = vmatprep.subr.bf16.mxu0 0
    %1953 = vmatpush2.bf16.xpose.msra.mxu0 0
    %1954 = vmatprep.subr.bf16.mxu0 0
    %1955 = vmatpush2.bf16.xpose.msra.mxu0 0
    %1956 = vmatprep.subr.bf16.mxu0 0
    %1957 = vmatpush2.bf16.xpose.msra.mxu0 0
    %1958 = vmatprep.subr.bf16.mxu0 0
    %1959 = vmatpush2.bf16.xpose.msra.mxu0 0
    %1960 = vmatprep.subr.bf16.mxu0 0
    %1961 = vmatpush2.bf16.xpose.msra.mxu0 0
    %1962 = vmatprep.subr.bf16.mxu0 0
    %1963 = vmatpush2.bf16.xpose.msra.mxu0 0
    %1964 = vmatprep.subr.bf16.mxu0 0
    %1965 = vmatpush2.bf16.xpose.msra.mxu0 0
    %1966 = vmatprep.subr.bf16.mxu0 0
    %1967 = vmatpush2.bf16.xpose.msra.mxu0 0
    %1968 = vmatprep.mubr.bf16.mxu0 0
    %1969 = vmatmul.mubr.bf16.gmra.mxu0 %v1931
    %v1970 = vpop.f32.mrf.mxu0
    %v1971 = vadd.f32 0.0, %v1970
    %v1972 = vpop.f32.mrf.mxu0
    %v1973 = vpop.f32.mrf.mxu0
    %v1974 = vadd.f32 0.0, %v1973
    %v1975 = vpop.f32.mrf.mxu0
    %1976 = vmatprep.mubr.bf16.mxu0 0
    %1977 = vmatmul.mubr.bf16.gmra.mxu0 %v1934
    %v1978 = vpop.f32.mrf.mxu0
    %v1979 = vadd.f32 0.0, %v1978
    %v1980 = vpop.f32.mrf.mxu0
    %v1981 = vpop.f32.mrf.mxu0
    %v1982 = vadd.f32 0.0, %v1981
    %v1983 = vpop.f32.mrf.mxu0
    %1984 = vdwg.mxu0
    %v1986 = vsel %vm44, %v1928, 0
    %v1989 = vsel %vm44, %v1929, 0
    %1991 = vmatprep.subr.bf16.mxu0 0
    %1992 = vmatpush1.bf16.xpose.msra.mxu0 0
    %1993 = vmatprep.subr.bf16.mxu0 0
    %1994 = vmatpush1.bf16.xpose.msra.mxu0 0
    %1995 = vmatprep.subr.bf16.mxu0 0
    %1996 = vmatpush1.bf16.xpose.msra.mxu0 0
    %1997 = vmatprep.subr.bf16.mxu0 0
    %1998 = vmatpush1.bf16.xpose.msra.mxu0 0
    %1999 = vmatprep.subr.bf16.mxu0 0
    %2000 = vmatpush1.bf16.xpose.msra.mxu0 0
    %2001 = vmatprep.subr.bf16.mxu0 0
    %2002 = vmatpush1.bf16.xpose.msra.mxu0 0
    %2003 = vmatprep.subr.bf16.mxu0 0
    %2004 = vmatpush1.bf16.xpose.msra.mxu0 0
    %2005 = vmatprep.subr.bf16.mxu0 0
    %2006 = vmatpush1.bf16.xpose.msra.mxu0 %v634
    %2007 = vmatprep.subr.bf16.mxu0 0
    %2008 = vmatpush2.bf16.xpose.msra.mxu0 0
    %2009 = vmatprep.subr.bf16.mxu0 0
    %2010 = vmatpush2.bf16.xpose.msra.mxu0 0
    %2011 = vmatprep.subr.bf16.mxu0 0
    %2012 = vmatpush2.bf16.xpose.msra.mxu0 0
    %2013 = vmatprep.subr.bf16.mxu0 0
    %2014 = vmatpush2.bf16.xpose.msra.mxu0 0
    %2015 = vmatprep.subr.bf16.mxu0 0
    %2016 = vmatpush2.bf16.xpose.msra.mxu0 0
    %2017 = vmatprep.subr.bf16.mxu0 0
    %2018 = vmatpush2.bf16.xpose.msra.mxu0 0
    %2019 = vmatprep.subr.bf16.mxu0 0
    %2020 = vmatpush2.bf16.xpose.msra.mxu0 0
    %2021 = vmatprep.subr.bf16.mxu0 0
    %2022 = vmatpush2.bf16.xpose.msra.mxu0 0
    %2023 = vmatprep.mubr.bf16.mxu0 0
    %2024 = vmatmul.mubr.bf16.gmra.mxu0 %v1986
    %v2025 = vpop.f32.mrf.mxu0
    %v2026 = vadd.f32 0.0, %v2025
    %v2027 = vpop.f32.mrf.mxu0
    %v2028 = vpop.f32.mrf.mxu0
    %v2029 = vadd.f32 0.0, %v2028
    %v2030 = vpop.f32.mrf.mxu0
    %2031 = vmatprep.mubr.bf16.mxu0 0
    %2032 = vmatmul.mubr.bf16.gmra.mxu0 %v1989
    %v2033 = vpop.f32.mrf.mxu0
    %v2034 = vadd.f32 0.0, %v2033
    %v2035 = vpop.f32.mrf.mxu0
    %v2036 = vpop.f32.mrf.mxu0
    %v2037 = vadd.f32 0.0, %v2036
    %v2038 = vpop.f32.mrf.mxu0
    %2039 = vdwg.mxu0
    %v2040 = vld [vmem:[%s4] sm:$0xff]
    %v2041 = vld [vmem:[%s4 + $0x8] sm:$0xff]
    %v2042 = vsub.f32 1.0, %v2040
    %v2043 = vsub.f32 1.0, %v2041
    %v2044 = vmul.f32 %v2042, 1e+09
    %v2045 = vmul.f32 %v2043, 1e+09
    %2047 = vset.pattern.permute.xlu0 0
    %2048 = vperm.xlu0 %2047, %v2044
    %v2049 = vpop.permute.xlu0 %2048
    %2052 = vset.pattern.permute.xlu0 0
    %2053 = vperm.xlu0 %2052, %v2045
    %v2054 = vpop.permute.xlu0 %2053
    %v2056 = vadd.f32 %v1971, %v2049
    %v2057 = vadd.f32 %v2026, %v2054
    %v2058 = vadd.f32 %v1974, %v2049
    %v2059 = vadd.f32 %v2029, %v2054
    %2062 = vrot.lane.b32.xlu0 %v2058, 16
    %v2063 = vpop.permute.xlu0 %2062
    %2064 = vrot.lane.b32.xlu0 %v2059, 16
    %v2065 = vpop.permute.xlu0 %2064
    %2070 = vrot.lane.b32.xlu0 %v1979, 32
    %v2071 = vpop.permute.xlu0 %2070
    %2072 = vrot.lane.b32.xlu0 %v2034, 32
    %v2073 = vpop.permute.xlu0 %2072
    %2078 = vrot.lane.b32.xlu0 %v1982, 48
    %v2079 = vpop.permute.xlu0 %2078
    %2080 = vrot.lane.b32.xlu0 %v2037, 48
    %v2081 = vpop.permute.xlu0 %2080
    %v2084 = vsel %vm803, %v2056, %v2063
    %v2085 = vsel %vm803, %v2057, %v2065
    %v2086 = vsel %vm44, %v2084, %v2071
    %v2087 = vsel %vm44, %v2085, %v2073
    %v2088 = vsel %vm1468, %v2086, %v2079
    %v2089 = vsel %vm1468, %v2087, %v2081
    %2090 = vst.msk [vmem:[%s11] sm:$0xff] %vm1170, %v2088
    %2091 = vst.msk [vmem:[%s11 + $0x8] sm:$0xff] %vm1170, %v2089
    %v2092 = vld [vmem:[%s5] sm:$0xff]
    %v2093 = vld [vmem:[%s5 + $0x8] sm:$0xff]
    %2094 = vset.pattern.permute.xlu0 0
    %2095 = vperm.xlu0 %2094, %v2092
    %v2096 = vpop.permute.xlu0 %2095
    %2097 = vset.pattern.permute.xlu0 0
    %2098 = vperm.xlu0 %2097, %v2093
    %v2099 = vpop.permute.xlu0 %2098
    %vm2100 = vcmp.eq.s32.totalorder %v265, %v2096
    %vm2101 = vcmp.eq.s32.totalorder %v265, %v2099
    %v2102 = vsel %vm2100, %v1509, 0.0
    %v2103 = vsel %vm2101, %v1512, 0.0
    %v2104 = vsel %vm1170, %v2102, 0.0
    %2105 = vadd.xlane.f32.xlu0 %v2104
    %v2106 = vpop.xlane.xlu0 %2105
    %v2107 = vsel %vm1170, %v2103, 0.0
    %2108 = vadd.xlane.f32.xlu0 %v2107
    %v2109 = vpop.xlane.xlu0 %2108
    %vm2110 = vcmp.ne.s32.totalorder %v2092, 0
    %vm2111 = vcmp.ne.s32.totalorder %v2093, 0
    %v2112 = vsel %vm2110, 1, 0
    %v2113 = vsel %vm2111, 1, 0
    %v2114 = vcvt.s32.f32 %v2112
    %v2115 = vcvt.s32.f32 %v2113
    %v2116 = vsel %vm1170, %v1509, -inf
    %2117 = vmax.xlane.f32.xlu0 %v2116
    %v2118 = vpop.xlane.xlu0 %2117
    %v2119 = vsel %vm1170, %v1512, -inf
    %2120 = vmax.xlane.f32.xlu0 %v2119
    %v2121 = vpop.xlane.xlu0 %2120
    %v2122 = vsub.f32 %v1509, %v2118
    %v2123 = vsub.f32 %v1512, %v2121
    %v2124 = vmul.f32 %v2122, 1.442695
    %v2125 = vpow.pop %v2124
    %v2126 = vmul.f32 %v2123, 1.442695
    %v2127 = vpow.pop %v2126
    %v2128 = vsel %vm1170, %v2125, 0.0
    %2129 = vadd.xlane.f32.xlu0 %v2128
    %v2130 = vpop.xlane.xlu0 %2129
    %v2131 = vsel %vm1170, %v2127, 0.0
    %2132 = vadd.xlane.f32.xlu0 %v2131
    %v2133 = vpop.xlane.xlu0 %2132
    %v2134 = vlog2.pop %v2130
    %v2135 = vmul.f32 %v2134, 0.6931472
    %v2136 = vlog2.pop %v2133
    %v2137 = vmul.f32 %v2136, 0.6931472
    %v2138 = vadd.f32 %v2118, %v2135
    %v2139 = vadd.f32 %v2121, %v2137
    %v2140 = vsub.f32 %v2138, %v2106
    %v2141 = vsub.f32 %v2139, %v2109
    %v2142 = vmul.f32 %v2140, %v2114
    %v2143 = vmul.f32 %v2141, %v2115
    %vm2144 = vcmask 7168
    %v2145 = vsel %vm2144, %v2142, 0.0
    %v2146 = vsel %vm2144, %v2143, 0.0
    %v2147 = vadd.f32 %v2145, %v2146
    %2148 = vadd.xlane.f32.xlu0 %v2147
    %v2149 = vpop.xlane.xlu0 %2148
    %v2150 = vrot.slane %v2149, 4
    %v2151 = vadd.f32 %v2149, %v2150
    %v2152 = vrot.slane %v2151, 2
    %v2153 = vadd.f32 %v2151, %v2152
    %v2154 = vrot.slane %v2153, 1
    %v2155 = vadd.f32 %v2153, %v2154
    %s2156 = vtos %v2155
    %2157 = vset.pattern.permute.xlu0 1
    %2158 = vperm.xlu0 %2157, %v2092
    %v2159 = vpop.permute.xlu0 %2158
    %2160 = vset.pattern.permute.xlu0 1
    %2161 = vperm.xlu0 %2160, %v2093
    %v2162 = vpop.permute.xlu0 %2161
    %vm2163 = vcmp.eq.s32.totalorder %v265, %v2159
    %vm2164 = vcmp.eq.s32.totalorder %v265, %v2162
    %2165 = vrot.lane.b32.xlu0 %v1367, 96
    %v2166 = vpop.permute.xlu0 %2165
    %2167 = vrot.lane.b32.xlu0 %v1370, 96
    %v2168 = vpop.permute.xlu0 %2167
    %v2171 = vsel %vm2163, %v2166, 0.0
    %v2172 = vsel %vm2164, %v2168, 0.0
    %v2173 = vsel %vm803, %v2171, 0.0
    %2174 = vadd.xlane.f32.xlu0 %v2173
    %v2175 = vpop.xlane.xlu0 %2174
    %v2176 = vsel %vm803, %v2172, 0.0
    %2177 = vadd.xlane.f32.xlu0 %v2176
    %v2178 = vpop.xlane.xlu0 %2177
    %vm2179 = vcmp.ne.s32.totalorder %v2092, 4294967295
    %vm2180 = vcmp.ne.s32.totalorder %v2093, 4294967295
    %v2181 = vsel %vm2179, 1, 0
    %v2182 = vsel %vm2180, 1, 0
    %v2183 = vcvt.s32.f32 %v2181
    %v2184 = vcvt.s32.f32 %v2182
    %vm2185 = vcmask 392448
    %v2186 = vsel %vm2185, %v1367, -inf
    %2187 = vmax.xlane.f32.xlu0 %v2186
    %v2188 = vpop.xlane.xlu0 %2187
    %v2189 = vsel %vm2185, %v1370, -inf
    %2190 = vmax.xlane.f32.xlu0 %v2189
    %v2191 = vpop.xlane.xlu0 %2190
    %v2192 = vsub.f32 %v1367, %v2188
    %v2193 = vsub.f32 %v1370, %v2191
    %v2194 = vmul.f32 %v2192, 1.442695
    %v2195 = vpow.pop %v2194
    %v2196 = vmul.f32 %v2193, 1.442695
    %v2197 = vpow.pop %v2196
    %2200 = vrot.lane.b32.xlu0 %v2195, 96
    %v2201 = vpop.permute.xlu0 %2200
    %2202 = vrot.lane.b32.xlu0 %v2197, 96
    %v2203 = vpop.permute.xlu0 %2202
    %v2206 = vsel %vm803, %v2201, 0.0
    %2207 = vadd.xlane.f32.xlu0 %v2206
    %v2208 = vpop.xlane.xlu0 %2207
    %v2209 = vsel %vm803, %v2203, 0.0
    %2210 = vadd.xlane.f32.xlu0 %v2209
    %v2211 = vpop.xlane.xlu0 %2210
    %v2212 = vlog2.pop %v2208
    %v2213 = vmul.f32 %v2212, 0.6931472
    %v2214 = vlog2.pop %v2211
    %v2215 = vmul.f32 %v2214, 0.6931472
    %v2216 = vadd.f32 %v2188, %v2213
    %v2217 = vadd.f32 %v2191, %v2215
    %v2218 = vsub.f32 %v2216, %v2175
    %v2219 = vsub.f32 %v2217, %v2178
    %v2220 = vmul.f32 %v2218, %v2183
    %v2221 = vmul.f32 %v2219, %v2184
    %2224 = vrot.lane.b32.xlu0 %v2220, 127
    %v2225 = vpop.permute.xlu0 %2224
    %2226 = vrot.lane.b32.xlu0 %v2221, 127
    %v2227 = vpop.permute.xlu0 %2226
    %v2230 = vsel %vm2144, %v2225, 0.0
    %v2231 = vsel %vm2144, %v2227, 0.0
    %v2232 = vadd.f32 %v2230, %v2231
    %2233 = vadd.xlane.f32.xlu0 %v2232
    %v2234 = vpop.xlane.xlu0 %2233
    %v2235 = vrot.slane %v2234, 4
    %v2236 = vadd.f32 %v2234, %v2235
    %v2237 = vrot.slane %v2236, 2
    %v2238 = vadd.f32 %v2236, %v2237
    %v2239 = vrot.slane %v2238, 1
    %v2240 = vadd.f32 %v2238, %v2239
    %s2241 = vtos %v2240
    %v2242 = vld [vmem:[%s6] sm:$0xff]
    %v2243 = vld [vmem:[%s6 + $0x8] sm:$0xff]
    %v2244 = vld [vmem:[%s6 + $0x10] sm:$0xff]
    %v2245 = vld [vmem:[%s6 + $0x18] sm:$0xff]
    %v2246 = vld [vmem:[%s6 + $0x20] sm:$0xff]
    %v2247 = vld [vmem:[%s6 + $0x28] sm:$0xff]
    %v2248 = vld [vmem:[%s6 + $0x30] sm:$0xff]
    %v2249 = vld [vmem:[%s6 + $0x38] sm:$0xff]
    %2250 = vset.pattern.permute.xlu0 0
    %2251 = vperm.xlu0 %2250, %v2242
    %v2252 = vpop.permute.xlu0 %2251
    %2253 = vset.pattern.permute.xlu0 0
    %2254 = vperm.xlu0 %2253, %v2243
    %v2255 = vpop.permute.xlu0 %2254
    %2256 = vset.pattern.permute.xlu0 0
    %2257 = vperm.xlu0 %2256, %v2244
    %v2258 = vpop.permute.xlu0 %2257
    %2259 = vset.pattern.permute.xlu0 0
    %2260 = vperm.xlu0 %2259, %v2245
    %v2261 = vpop.permute.xlu0 %2260
    %2262 = vset.pattern.permute.xlu0 0
    %2263 = vperm.xlu0 %2262, %v2246
    %v2264 = vpop.permute.xlu0 %2263
    %2265 = vset.pattern.permute.xlu0 0
    %2266 = vperm.xlu0 %2265, %v2247
    %v2267 = vpop.permute.xlu0 %2266
    %2268 = vset.pattern.permute.xlu0 0
    %2269 = vperm.xlu0 %2268, %v2248
    %v2270 = vpop.permute.xlu0 %2269
    %2271 = vset.pattern.permute.xlu0 0
    %2272 = vperm.xlu0 %2271, %v2249
    %v2273 = vpop.permute.xlu0 %2272
    %vm2274 = vcmp.eq.s32.totalorder %v265, %v2252
    %vm2275 = vcmp.eq.s32.totalorder %v265, %v2255
    %vm2276 = vcmp.eq.s32.totalorder %v265, %v2258
    %vm2277 = vcmp.eq.s32.totalorder %v265, %v2261
    %vm2278 = vcmp.eq.s32.totalorder %v265, %v2264
    %vm2279 = vcmp.eq.s32.totalorder %v265, %v2267
    %vm2280 = vcmp.eq.s32.totalorder %v265, %v2270
    %vm2281 = vcmp.eq.s32.totalorder %v265, %v2273
    %v2282 = vsel %vm2274, %v1971, 0.0
    %v2283 = vsel %vm2275, %v1974, 0.0
    %v2284 = vsel %vm2276, %v1979, 0.0
    %v2285 = vsel %vm2277, %v1982, 0.0
    %v2286 = vsel %vm2278, %v2026, 0.0
    %v2287 = vsel %vm2279, %v2029, 0.0
    %v2288 = vsel %vm2280, %v2034, 0.0
    %v2289 = vsel %vm2281, %v2037, 0.0
    %v2290 = vsel %vm803, %v2282, 0.0
    %2291 = vadd.xlane.f32.xlu0 %v2290
    %v2292 = vpop.xlane.xlu0 %2291
    %v2293 = vsel %vm803, %v2283, 0.0
    %2294 = vadd.xlane.f32.xlu0 %v2293
    %v2295 = vpop.xlane.xlu0 %2294
    %v2296 = vsel %vm803, %v2284, 0.0
    %2297 = vadd.xlane.f32.xlu0 %v2296
    %v2298 = vpop.xlane.xlu0 %2297
    %v2299 = vsel %vm803, %v2285, 0.0
    %2300 = vadd.xlane.f32.xlu0 %v2299
    %v2301 = vpop.xlane.xlu0 %2300
    %v2302 = vsel %vm803, %v2286, 0.0
    %2303 = vadd.xlane.f32.xlu0 %v2302
    %v2304 = vpop.xlane.xlu0 %2303
    %v2305 = vsel %vm803, %v2287, 0.0
    %2306 = vadd.xlane.f32.xlu0 %v2305
    %v2307 = vpop.xlane.xlu0 %2306
    %v2308 = vsel %vm803, %v2288, 0.0
    %2309 = vadd.xlane.f32.xlu0 %v2308
    %v2310 = vpop.xlane.xlu0 %2309
    %v2311 = vsel %vm803, %v2289, 0.0
    %2312 = vadd.xlane.f32.xlu0 %v2311
    %v2313 = vpop.xlane.xlu0 %2312
    %vm2314 = vcmp.ne.s32.totalorder %v2242, 4294967295
    %vm2315 = vcmp.ne.s32.totalorder %v2243, 4294967295
    %vm2316 = vcmp.ne.s32.totalorder %v2244, 4294967295
    %vm2317 = vcmp.ne.s32.totalorder %v2245, 4294967295
    %vm2318 = vcmp.ne.s32.totalorder %v2246, 4294967295
    %vm2319 = vcmp.ne.s32.totalorder %v2247, 4294967295
    %vm2320 = vcmp.ne.s32.totalorder %v2248, 4294967295
    %vm2321 = vcmp.ne.s32.totalorder %v2249, 4294967295
    %v2322 = vsel %vm2314, 1, 0
    %v2323 = vsel %vm2315, 1, 0
    %v2324 = vsel %vm2316, 1, 0
    %v2325 = vsel %vm2317, 1, 0
    %v2326 = vsel %vm2318, 1, 0
    %v2327 = vsel %vm2319, 1, 0
    %v2328 = vsel %vm2320, 1, 0
    %v2329 = vsel %vm2321, 1, 0
    %v2330 = vcvt.s32.f32 %v2322
    %v2331 = vcvt.s32.f32 %v2323
    %v2332 = vcvt.s32.f32 %v2324
    %v2333 = vcvt.s32.f32 %v2325
    %v2334 = vcvt.s32.f32 %v2326
    %v2335 = vcvt.s32.f32 %v2327
    %v2336 = vcvt.s32.f32 %v2328
    %v2337 = vcvt.s32.f32 %v2329
    %v2338 = vsel %vm803, %v1971, -inf
    %2339 = vmax.xlane.f32.xlu0 %v2338
    %v2340 = vpop.xlane.xlu0 %2339
    %v2341 = vsel %vm803, %v1974, -inf
    %2342 = vmax.xlane.f32.xlu0 %v2341
    %v2343 = vpop.xlane.xlu0 %2342
    %v2344 = vsel %vm803, %v1979, -inf
    %2345 = vmax.xlane.f32.xlu0 %v2344
    %v2346 = vpop.xlane.xlu0 %2345
    %v2347 = vsel %vm803, %v1982, -inf
    %2348 = vmax.xlane.f32.xlu0 %v2347
    %v2349 = vpop.xlane.xlu0 %2348
    %v2350 = vsel %vm803, %v2026, -inf
    %2351 = vmax.xlane.f32.xlu0 %v2350
    %v2352 = vpop.xlane.xlu0 %2351
    %v2353 = vsel %vm803, %v2029, -inf
    %2354 = vmax.xlane.f32.xlu0 %v2353
    %v2355 = vpop.xlane.xlu0 %2354
    %v2356 = vsel %vm803, %v2034, -inf
    %2357 = vmax.xlane.f32.xlu0 %v2356
    %v2358 = vpop.xlane.xlu0 %2357
    %v2359 = vsel %vm803, %v2037, -inf
    %2360 = vmax.xlane.f32.xlu0 %v2359
    %v2361 = vpop.xlane.xlu0 %2360
    %v2362 = vsub.f32 %v1971, %v2340
    %v2363 = vsub.f32 %v1974, %v2343
    %v2364 = vsub.f32 %v1979, %v2346
    %v2365 = vsub.f32 %v1982, %v2349
    %v2366 = vsub.f32 %v2026, %v2352
    %v2367 = vsub.f32 %v2029, %v2355
    %v2368 = vsub.f32 %v2034, %v2358
    %v2369 = vsub.f32 %v2037, %v2361
    %v2370 = vmul.f32 %v2362, 1.442695
    %v2371 = vpow.pop %v2370
    %v2372 = vmul.f32 %v2363, 1.442695
    %v2373 = vpow.pop %v2372
    %v2374 = vmul.f32 %v2364, 1.442695
    %v2375 = vpow.pop %v2374
    %v2376 = vmul.f32 %v2365, 1.442695
    %v2377 = vpow.pop %v2376
    %v2378 = vmul.f32 %v2366, 1.442695
    %v2379 = vpow.pop %v2378
    %v2380 = vmul.f32 %v2367, 1.442695
    %v2381 = vpow.pop %v2380
    %v2382 = vmul.f32 %v2368, 1.442695
    %v2383 = vpow.pop %v2382
    %v2384 = vmul.f32 %v2369, 1.442695
    %v2385 = vpow.pop %v2384
    %v2386 = vsel %vm803, %v2371, 0.0
    %2387 = vadd.xlane.f32.xlu0 %v2386
    %v2388 = vpop.xlane.xlu0 %2387
    %v2389 = vsel %vm803, %v2373, 0.0
    %2390 = vadd.xlane.f32.xlu0 %v2389
    %v2391 = vpop.xlane.xlu0 %2390
    %v2392 = vsel %vm803, %v2375, 0.0
    %2393 = vadd.xlane.f32.xlu0 %v2392
    %v2394 = vpop.xlane.xlu0 %2393
    %v2395 = vsel %vm803, %v2377, 0.0
    %2396 = vadd.xlane.f32.xlu0 %v2395
    %v2397 = vpop.xlane.xlu0 %2396
    %v2398 = vsel %vm803, %v2379, 0.0
    %2399 = vadd.xlane.f32.xlu0 %v2398
    %v2400 = vpop.xlane.xlu0 %2399
    %v2401 = vsel %vm803, %v2381, 0.0
    %2402 = vadd.xlane.f32.xlu0 %v2401
    %v2403 = vpop.xlane.xlu0 %2402
    %v2404 = vsel %vm803, %v2383, 0.0
    %2405 = vadd.xlane.f32.xlu0 %v2404
    %v2406 = vpop.xlane.xlu0 %2405
    %v2407 = vsel %vm803, %v2385, 0.0
    %2408 = vadd.xlane.f32.xlu0 %v2407
    %v2409 = vpop.xlane.xlu0 %2408
    %v2410 = vlog2.pop %v2388
    %v2411 = vmul.f32 %v2410, 0.6931472
    %v2412 = vlog2.pop %v2391
    %v2413 = vmul.f32 %v2412, 0.6931472
    %v2414 = vlog2.pop %v2394
    %v2415 = vmul.f32 %v2414, 0.6931472
    %v2416 = vlog2.pop %v2397
    %v2417 = vmul.f32 %v2416, 0.6931472
    %v2418 = vlog2.pop %v2400
    %v2419 = vmul.f32 %v2418, 0.6931472
    %v2420 = vlog2.pop %v2403
    %v2421 = vmul.f32 %v2420, 0.6931472
    %v2422 = vlog2.pop %v2406
    %v2423 = vmul.f32 %v2422, 0.6931472
    %v2424 = vlog2.pop %v2409
    %v2425 = vmul.f32 %v2424, 0.6931472
    %v2426 = vadd.f32 %v2340, %v2411
    %v2427 = vadd.f32 %v2343, %v2413
    %v2428 = vadd.f32 %v2346, %v2415
    %v2429 = vadd.f32 %v2349, %v2417
    %v2430 = vadd.f32 %v2352, %v2419
    %v2431 = vadd.f32 %v2355, %v2421
    %v2432 = vadd.f32 %v2358, %v2423
    %v2433 = vadd.f32 %v2361, %v2425
    %v2434 = vsub.f32 %v2426, %v2292
    %v2435 = vsub.f32 %v2427, %v2295
    %v2436 = vsub.f32 %v2428, %v2298
    %v2437 = vsub.f32 %v2429, %v2301
    %v2438 = vsub.f32 %v2430, %v2304
    %v2439 = vsub.f32 %v2431, %v2307
    %v2440 = vsub.f32 %v2432, %v2310
    %v2441 = vsub.f32 %v2433, %v2313
    %v2442 = vmul.f32 %v2434, %v2330
    %v2443 = vmul.f32 %v2435, %v2331
    %v2444 = vmul.f32 %v2436, %v2332
    %v2445 = vmul.f32 %v2437, %v2333
    %v2446 = vmul.f32 %v2438, %v2334
    %v2447 = vmul.f32 %v2439, %v2335
    %v2448 = vmul.f32 %v2440, %v2336
    %v2449 = vmul.f32 %v2441, %v2337
    %v2450 = vsel %vm2144, %v2442, 0.0
    %v2451 = vsel %vm2144, %v2446, 0.0
    %v2452 = vadd.f32 %v2450, %v2451
    %2453 = vadd.xlane.f32.xlu0 %v2452
    %v2454 = vpop.xlane.xlu0 %2453
    %v2455 = vrot.slane %v2454, 4
    %v2456 = vadd.f32 %v2454, %v2455
    %v2457 = vrot.slane %v2456, 2
    %v2458 = vadd.f32 %v2456, %v2457
    %v2459 = vrot.slane %v2458, 1
    %v2460 = vadd.f32 %v2458, %v2459
    %s2461 = vtos %v2460
    %v2462 = vsel %vm2144, %v2443, 0.0
    %v2463 = vsel %vm2144, %v2447, 0.0
    %v2464 = vadd.f32 %v2462, %v2463
    %2465 = vadd.xlane.f32.xlu0 %v2464
    %v2466 = vpop.xlane.xlu0 %2465
    %v2467 = vrot.slane %v2466, 4
    %v2468 = vadd.f32 %v2466, %v2467
    %v2469 = vrot.slane %v2468, 2
    %v2470 = vadd.f32 %v2468, %v2469
    %v2471 = vrot.slane %v2470, 1
    %v2472 = vadd.f32 %v2470, %v2471
    %s2473 = vtos %v2472
    %v2474 = vsel %vm2144, %v2444, 0.0
    %v2475 = vsel %vm2144, %v2448, 0.0
    %v2476 = vadd.f32 %v2474, %v2475
    %2477 = vadd.xlane.f32.xlu0 %v2476
    %v2478 = vpop.xlane.xlu0 %2477
    %v2479 = vrot.slane %v2478, 4
    %v2480 = vadd.f32 %v2478, %v2479
    %v2481 = vrot.slane %v2480, 2
    %v2482 = vadd.f32 %v2480, %v2481
    %v2483 = vrot.slane %v2482, 1
    %v2484 = vadd.f32 %v2482, %v2483
    %s2485 = vtos %v2484
    %v2486 = vsel %vm2144, %v2445, 0.0
    %v2487 = vsel %vm2144, %v2449, 0.0
    %v2488 = vadd.f32 %v2486, %v2487
    %2489 = vadd.xlane.f32.xlu0 %v2488
    %v2490 = vpop.xlane.xlu0 %2489
    %v2491 = vrot.slane %v2490, 4
    %v2492 = vadd.f32 %v2490, %v2491
    %v2493 = vrot.slane %v2492, 2
    %v2494 = vadd.f32 %v2492, %v2493
    %v2495 = vrot.slane %v2494, 1
    %v2496 = vadd.f32 %v2494, %v2495
    %s2497 = vtos %v2496
    %v2498 = vstv %s2156
    %v2499 = vstv %s2461
    %v2500 = vstv %s2473
    %v2501 = vstv %s2485
    %v2502 = vstv %s2497
    %v2503 = vstv %s2241
    %v2504 = vsel %vm2144, %v2498, %v2499
    %vm2505 = vcmask 15360
    %v2506 = vsel %vm2505, %v2504, %v2500
    %vm2507 = vcmask 23552
    %v2508 = vsel %vm2507, %v2506, %v2501
    %vm2509 = vcmask 31744
    %v2510 = vsel %vm2509, %v2508, %v2502
    %vm2511 = vcmask 39936
    %v2512 = vsel %vm2511, %v2510, %v2503
    %vm2513 = vcmask 48128
    %v2514 = vsel %vm2513, %v2512, 0.0
    %vm2515 = vcmask 57344
    %2516 = vst.msk [vmem:[%s12] sm:$0x1] %vm2515, %v2514
    // Predicated region
    $region42: #{decoder_with_loss_forward.1} parent=1 // pred_check
      _
    $region43: #{decoder_with_loss_forward.1} parent=1 // pred_check_branch
      %2518 = sbr.rel (0) target = $region45
    $region44: #{decoder_with_loss_forward.1} parent=1 // pred_region
      %s2520 = ssub.s32 256, 256
      %2521 = vsyncadd [#allocation4], %s2520
      %s2522 = sshll.u32 [#allocation3], 4
      %s2523 = int_to_ptr.vmem [resolvable:$true] %s2522
      %2528 = dma.vmem_to_hbm [thread:$0]  %s2523, 256, %s10, [#allocation4], 128, 128, 8
    $region45: #{decoder_with_loss_forward.1} parent=1 // pred_fallthru
      _
    // Predicated region
    $region46: #{decoder_with_loss_forward.1} parent=1 // pred_check
      _
    $region47: #{decoder_with_loss_forward.1} parent=1 // pred_check_branch
      %2530 = sbr.rel (0) target = $region49
    $region48: #{decoder_with_loss_forward.1} parent=1 // pred_region
      _
    $region49: #{decoder_with_loss_forward.1} parent=1 // pred_fallthru
      _
    // Predicated region
    $region50: #{decoder_with_loss_forward.1} parent=1 // pred_check
      _
    $region51: #{decoder_with_loss_forward.1} parent=1 // pred_check_branch
      %2532 = sbr.rel (0) target = $region53
    $region52: #{decoder_with_loss_forward.1} parent=1 // pred_region
      _
    $region53: #{decoder_with_loss_forward.1} parent=1 // pred_fallthru
      _
    // Predicated region
    $region54: #{decoder_with_loss_forward.1} parent=1 // pred_check
      _
    $region55: #{decoder_with_loss_forward.1} parent=1 // pred_check_branch
      %2534 = sbr.rel (0) target = $region57
    $region56: #{decoder_with_loss_forward.1} parent=1 // pred_region
      %2535 = dma.done [#allocation4], 256
    $region57: #{decoder_with_loss_forward.1} parent=1 // pred_fallthru
      _
    // Predicated region
    $region58: #{decoder_with_loss_forward.1} parent=1 // pred_check
      _
    $region59: #{decoder_with_loss_forward.1} parent=1 // pred_check_branch
      %2537 = sbr.rel (0) target = $region61
    $region60: #{decoder_with_loss_forward.1} parent=1 // pred_region
      _
    $region61: #{decoder_with_loss_forward.1} parent=1 // pred_fallthru
      _
    // Predicated region
    $region62: #{decoder_with_loss_forward.1} parent=1 // pred_check
      _
    $region63: #{decoder_with_loss_forward.1} parent=1 // pred_check_branch
      %2539 = sbr.rel (0) target = $region65
    $region64: #{decoder_with_loss_forward.1} parent=1 // pred_region
      _
    $region65: #{decoder_with_loss_forward.1} parent=1 // pred_fallthru
      _
    %2540 = vsyncpa [#allocation4], 1

</llo_original>
